<compile_context>
chip_gen: v6e
topology: v6e:2x2x1
jax: 0.10.0
libtpu: 0.0.40
codegen_flags: <defaults>
</compile_context>

<pallas_src>
import functools
import math

import jax
import jax.numpy as jnp
from jax.experimental import pallas as pl
from jax.experimental.pallas import tpu as pltpu

EPS = 1e-5

# Synthetic small config (real AVES/HuBERT-base: 7 convs, 512 ch, 12 layers, 768 hidden)
CONV_CFG = [(32, 10, 5), (32, 3, 2), (32, 3, 2)]  # (out_ch, kernel, stride), bias=False
HIDDEN = 32
HEADS = 4
HEAD_DIM = HIDDEN // HEADS
FFN = 64
NUM_LAYERS = 2
BATCH = 2
SAMPLES = 340  # -> T=67 -> 33 -> 16 after the conv stack

PARALLEL_1D = pltpu.CompilerParams(dimension_semantics=("parallel",))


def _rep_spec(shape):
    """Full-array block that is identical for every grid step (weights/biases)."""
    nd = len(shape)
    return pl.BlockSpec(shape, lambda b: (0,) * nd)


def _mxu(a, b):
    """bf16 MXU matmul with f32 accumulation."""
    return jnp.dot(a.astype(jnp.bfloat16), b.astype(jnp.bfloat16),
                   preferred_element_type=jnp.float32)


def _layernorm(x, gamma, beta, eps):
    mean = jnp.mean(x, axis=-1, keepdims=True)
    cen = x - mean
    var = jnp.mean(cen * cen, axis=-1, keepdims=True)
    return cen * jax.lax.rsqrt(var + eps) * gamma + beta


# --------------------------------------------------------------------------
# Feature-extractor conv layers (fused conv [+ GroupNorm] + GELU).
#
# Phase packing: x (B, T, Cin) -> xr (B, rows, stride*Cin) with
#   rows = Tout + (K-1)//stride, so tap k of output frame t lives at
#   xr[t + k//stride, (k % stride)*Cin : ...].
# Grouping taps by k//stride turns the conv into ceil(K/stride) contiguous,
# lane-dense matmuls inside the kernel -- no im2col expansion in HBM.
# --------------------------------------------------------------------------
def _phase_pack_input(x, kern, stride):
    bsz, t, cin = x.shape
    tout = (t - kern) // stride + 1
    rows = tout + (kern - 1) // stride
    tpad = rows * stride
    if tpad > t:
        x = jnp.pad(x, ((0, 0), (0, tpad - t), (0, 0)))
    elif tpad < t:
        x = x[:, :tpad]
    return x.reshape(bsz, rows, stride * cin), tout


def _phase_pack_weight(w, stride):
    # w: PyTorch layout (Cout, Cin, K) -> (ngroups, stride*Cin, Cout); extra taps zero.
    cout, cin, kern = w.shape
    ngroups = -(-kern // stride)
    wk = jnp.transpose(w, (2, 1, 0)).astype(jnp.float32)          # (K, Cin, Cout)
    pad = ngroups * stride - kern
    if pad:
        wk = jnp.concatenate([wk, jnp.zeros((pad, cin, cout), jnp.float32)], axis=0)
    return wk.reshape(ngroups, stride * cin, cout)


def _conv_accumulate(x_ref, w_ref, *, tout):
    ngroups, _, cout = w_ref.shape
    acc = jnp.zeros((tout, cout), jnp.float32)
    for r in range(ngroups):                                       # static unroll
        tap = x_ref[0, pl.ds(r, tout), :].astype(jnp.float32)      # (tout, stride*cin)
        acc = acc + jnp.dot(tap, w_ref[r].astype(jnp.float32),
                            preferred_element_type=jnp.float32)
    return acc


def _conv_gelu_kernel(x_ref, w_ref, o_ref, *, tout):
    acc = _conv_accumulate(x_ref, w_ref, tout=tout)
    o_ref[0] = jax.nn.gelu(acc, approximate=True).astype(o_ref.dtype)


def _conv_gn_gelu_kernel(x_ref, w_ref, g_ref, b_ref, o_ref, *, tout, eps):
    acc = _conv_accumulate(x_ref, w_ref, tout=tout)
    # GroupNorm with num_groups == num_channels: per-channel, per-sample stats over time.
    mean = jnp.mean(acc, axis=0, keepdims=True)
    cen = acc - mean
    var = jnp.mean(cen * cen, axis=0, keepdims=True)
    y = cen * jax.lax.rsqrt(var + eps) * g_ref[...] + b_ref[...]
    o_ref[0] = jax.nn.gelu(y, approximate=True).astype(o_ref.dtype)


def conv_layer(x, w, stride, group_norm=None):
    bsz, _, cin = x.shape
    cout, _, kern = w.shape
    xr, tout = _phase_pack_input(x, kern, stride)
    wk = _phase_pack_weight(w, stride)
    ngroups, width, _ = wk.shape

    in_specs = [pl.BlockSpec((1, xr.shape[1], width), lambda b: (b, 0, 0)),
                _rep_spec((ngroups, width, cout))]
    args = [xr, wk]
    if group_norm is None:
        kernel = functools.partial(_conv_gelu_kernel, tout=tout)
    else:
        gamma, beta = group_norm
        kernel = functools.partial(_conv_gn_gelu_kernel, tout=tout, eps=EPS)
        in_specs += [_rep_spec((1, cout)), _rep_spec((1, cout))]
        args += [gamma.reshape(1, cout), beta.reshape(1, cout)]

    return pl.pallas_call(
        kernel,
        grid=(bsz,),
        in_specs=in_specs,
        out_specs=pl.BlockSpec((1, tout, cout), lambda b: (b, 0, 0)),
        out_shape=jax.ShapeDtypeStruct((bsz, tout, cout), jnp.float32),
        compiler_params=PARALLEL_1D,
    )(*args)


# --------------------------------------------------------------------------
# Feature projection: fused LayerNorm + Linear (dropout omitted).
# --------------------------------------------------------------------------
def _featproj_kernel(x_ref, g_ref, b_ref, w_ref, bias_ref, o_ref, *, eps):
    x = x_ref[0].astype(jnp.float32)                               # (T, C)
    y = _layernorm(x, g_ref[...], b_ref[...], eps)
    o_ref[0] = (_mxu(y, w_ref[...]) + bias_ref[...]).astype(o_ref.dtype)


def feature_projection(x, ln_g, ln_b, w, b):
    bsz, t, c = x.shape
    hidden = w.shape[1]
    return pl.pallas_call(
        functools.partial(_featproj_kernel, eps=EPS),
        grid=(bsz,),
        in_specs=[pl.BlockSpec((1, t, c), lambda i: (i, 0, 0)),
                  _rep_spec((1, c)), _rep_spec((1, c)),
                  _rep_spec((c, hidden)), _rep_spec((1, hidden))],
        out_specs=pl.BlockSpec((1, t, hidden), lambda i: (i, 0, 0)),
        out_shape=jax.ShapeDtypeStruct((bsz, t, hidden), jnp.float32),
        compiler_params=PARALLEL_1D,
    )(x, ln_g.reshape(1, c), ln_b.reshape(1, c),
      w.astype(jnp.bfloat16), b.reshape(1, hidden))


# --------------------------------------------------------------------------
# One fused transformer encoder layer (post-norm, layer_norm_first=False):
#   QKV proj (concat) -> per-head attention -> out proj -> +res -> LN
#   -> FFN w1+GELU+w2 -> +res -> LN, all in a single kernel.
# --------------------------------------------------------------------------
def _encoder_layer_kernel(x_ref, wqkv_ref, bqkv_ref, wo_ref, bo_ref,
                          ln1g_ref, ln1b_ref, w1_ref, b1_ref, w2_ref, b2_ref,
                          ln2g_ref, ln2b_ref, o_ref, *, heads, head_dim, eps):
    x = x_ref[0].astype(jnp.float32)                               # (T, H)
    hid = heads * head_dim

    # Fused QKV: one MXU pass with N = 3*H instead of three N = H passes.
    qkv = _mxu(x, wqkv_ref[...]) + bqkv_ref[...]                   # (T, 3H)
    q = qkv[:, :hid]
    k = qkv[:, hid:2 * hid]
    v = qkv[:, 2 * hid:]

    # Per-head softmax attention; scale folded into q, EUP approx reciprocal.
    scale = 1.0 / math.sqrt(head_dim)
    ctx = []
    for h in range(heads):                                          # static unroll
        sl = slice(h * head_dim, (h + 1) * head_dim)
        qh = q[:, sl] * scale
        s = jax.lax.dot_general(qh, k[:, sl], (((1,), (1,)), ((), ())),
                                preferred_element_type=jnp.float32)  # (T, T)
        s = s - jnp.max(s, axis=-1, keepdims=True)
        p = jnp.exp(s)
        inv = pl.reciprocal(jnp.sum(p, axis=-1, keepdims=True), approx=True)
        ctx.append(jnp.dot(p, v[:, sl], preferred_element_type=jnp.float32) * inv)
    ctx = jnp.concatenate(ctx, axis=-1)                             # (T, H)

    attn = _mxu(ctx, wo_ref[...]) + bo_ref[...]
    h1 = _layernorm(x + attn, ln1g_ref[...], ln1b_ref[...], eps)    # residual + LN fused

    ff = jax.nn.gelu(_mxu(h1, w1_ref[...]) + b1_ref[...], approximate=True)
    ff = _mxu(ff, w2_ref[...]) + b2_ref[...]
    out = _layernorm(h1 + ff, ln2g_ref[...], ln2b_ref[...], eps)
    o_ref[0] = out.astype(o_ref.dtype)


def encoder_layer(x, lp):
    bsz, t, hid = x.shape
    ffn = lp["w1"].shape[1]
    return pl.pallas_call(
        functools.partial(_encoder_layer_kernel,
                          heads=HEADS, head_dim=HEAD_DIM, eps=EPS),
        grid=(bsz,),
        in_specs=[pl.BlockSpec((1, t, hid), lambda b: (b, 0, 0)),
                  _rep_spec((hid, 3 * hid)), _rep_spec((1, 3 * hid)),
                  _rep_spec((hid, hid)), _rep_spec((1, hid)),
                  _rep_spec((1, hid)), _rep_spec((1, hid)),
                  _rep_spec((hid, ffn)), _rep_spec((1, ffn)),
                  _rep_spec((ffn, hid)), _rep_spec((1, hid)),
                  _rep_spec((1, hid)), _rep_spec((1, hid))],
        out_specs=pl.BlockSpec((1, t, hid), lambda b: (b, 0, 0)),
        out_shape=jax.ShapeDtypeStruct((bsz, t, hid), jnp.float32),
        compiler_params=PARALLEL_1D,
    )(x,
      lp["wqkv"].astype(jnp.bfloat16), lp["bqkv"].reshape(1, -1),
      lp["wo"].astype(jnp.bfloat16), lp["bo"].reshape(1, -1),
      lp["ln1_g"].reshape(1, -1), lp["ln1_b"].reshape(1, -1),
      lp["w1"].astype(jnp.bfloat16), lp["b1"].reshape(1, -1),
      lp["w2"].astype(jnp.bfloat16), lp["b2"].reshape(1, -1),
      lp["ln2_g"].reshape(1, -1), lp["ln2_b"].reshape(1, -1))


# --------------------------------------------------------------------------
# out.mean(dim=1): a small reduction kernel (replaces the kron pooling matmul).
# --------------------------------------------------------------------------
def _mean_pool_kernel(x_ref, o_ref):
    bsz = x_ref.shape[0]
    rows = []
    for b in range(bsz):                                            # static unroll
        rows.append(jnp.mean(x_ref[b].astype(jnp.float32), axis=0, keepdims=True))
    o_ref[...] = jnp.concatenate(rows, axis=0).astype(o_ref.dtype)


def mean_pool(x):
    bsz, t, hid = x.shape
    return pl.pallas_call(
        _mean_pool_kernel,
        grid=(1,),
        in_specs=[pl.BlockSpec((bsz, t, hid), lambda i: (0, 0, 0))],
        out_specs=pl.BlockSpec((bsz, hid), lambda i: (0, 0)),
        out_shape=jax.ShapeDtypeStruct((bsz, hid), jnp.float32),
    )(x)


# --------------------------------------------------------------------------
# Deterministic synthetic parameters (module shapes implied by wav2vec2 config).
# --------------------------------------------------------------------------
def init_params(key):
    keys = iter(jax.random.split(key, 64))

    def w(shape, scale=0.02):
        return (scale * jax.random.normal(next(keys), shape)).astype(jnp.float32)

    p = {"conv": []}
    cin = 1
    for cout, kern, _ in CONV_CFG:
        p["conv"].append(w((cout, cin, kern)))
        cin = cout
    p["gn_g"] = jnp.ones((CONV_CFG[0][0],), jnp.float32)
    p["gn_b"] = jnp.zeros((CONV_CFG[0][0],), jnp.float32)
    p["fp_ln_g"] = jnp.ones((cin,), jnp.float32)
    p["fp_ln_b"] = jnp.zeros((cin,), jnp.float32)
    p["fp_w"] = w((cin, HIDDEN))
    p["fp_b"] = jnp.zeros((HIDDEN,), jnp.float32)
    p["layers"] = []
    for _ in range(NUM_LAYERS):
        p["layers"].append({
            # Wq/Wk/Wv fused into a single (H, 3H) weight (review: QKV concat).
            "wqkv": w((HIDDEN, 3 * HIDDEN)),
            "bqkv": jnp.zeros((3 * HIDDEN,), jnp.float32),
            "wo": w((HIDDEN, HIDDEN)), "bo": jnp.zeros((HIDDEN,), jnp.float32),
            "ln1_g": jnp.ones((HIDDEN,), jnp.float32),
            "ln1_b": jnp.zeros((HIDDEN,), jnp.float32),
            "w1": w((HIDDEN, FFN)), "b1": jnp.zeros((FFN,), jnp.float32),
            "w2": w((FFN, HIDDEN)), "b2": jnp.zeros((HIDDEN,), jnp.float32),
            "ln2_g": jnp.ones((HIDDEN,), jnp.float32),
            "ln2_b": jnp.zeros((HIDDEN,), jnp.float32),
        })
    return p


# --------------------------------------------------------------------------
# Full forward: extract_features(sig)[0][-1].mean(dim=1)
# --------------------------------------------------------------------------
def aves_forward(params, sig):
    bsz, samples = sig.shape
    x = sig.reshape(bsz, samples, 1).astype(jnp.float32)            # (B, T, Cin=1)

    # ---- feature extractor (frozen in torch; forward identical) ----
    x = conv_layer(x, params["conv"][0], CONV_CFG[0][2],
                   group_norm=(params["gn_g"], params["gn_b"]))     # conv + GN + GELU fused
    for (_, _, stride), wconv in zip(CONV_CFG[1:], params["conv"][1:]):
        x = conv_layer(x, wconv, stride)                            # conv + GELU fused

    # ---- feature projection: LayerNorm -> Linear (dropout omitted) ----
    x = feature_projection(x, params["fp_ln_g"], params["fp_ln_b"],
                           params["fp_w"], params["fp_b"])

    # TODO(synk): convolutional positional embedding (grouped conv, kernel 128) omitted.

    # ---- transformer encoder, post-norm (layer_norm_first=False) ----
    for lp in params["layers"]:
        x = encoder_layer(x, lp)

    # ---- out.mean(dim=1) ----
    return mean_pool(x)


if __name__ == "__main__":
    sig = jax.random.normal(jax.random.PRNGKey(0), (BATCH, SAMPLES), jnp.float32)
    params = init_params(jax.random.PRNGKey(1))

    fwd = jax.jit(aves_forward)
    out = fwd(params, sig)
    jax.block_until_ready(out)

    assert out.shape == (BATCH, HIDDEN), out.shape
    assert out.dtype == jnp.float32
    assert bool(jnp.all(jnp.isfinite(out)))
    print("KERNEL_OK")
</pallas_src>

<mosaic_0001>
module attributes {stable_mosaic.version = 11 : i64} {
  func.func @_conv_gn_gelu_kernel(%arg0: i32, %arg1: memref<1x68x5xf32, #tpu.memory_space<vmem>>, %arg2: memref<2x5x32xf32, #tpu.memory_space<vmem>>, %arg3: memref<1x32xf32, #tpu.memory_space<vmem>>, %arg4: memref<1x32xf32, #tpu.memory_space<vmem>>, %arg5: memref<1x67x32xf32, #tpu.memory_space<vmem>>) attributes {dimension_semantics = [#tpu.dimension_semantics<parallel>], iteration_bounds = array<i64: 2>, scalar_prefetch = 0 : i64, scratch_operands = 0 : i64, tpu.core_type = #tpu.core_type<tc>, window_params = [{transform_indices = @transform_0, window_bounds = array<i64: 1, 68, 5>}, {pipeline_mode = #tpu.pipeline_mode<synchronous>, transform_indices = @transform_1, window_bounds = array<i64: 2, 5, 32>}, {pipeline_mode = #tpu.pipeline_mode<synchronous>, transform_indices = @transform_2, window_bounds = array<i64: 1, 32>}, {pipeline_mode = #tpu.pipeline_mode<synchronous>, transform_indices = @transform_3, window_bounds = array<i64: 1, 32>}, {transform_indices = @transform_4, window_bounds = array<i64: 1, 67, 32>}]} {
    %cst = arith.constant 0.000000e+00 : f32
    %0 = vector.broadcast %cst : f32 to vector<67x32xf32>
    %c0 = arith.constant 0 : index
    %c0_0 = arith.constant 0 : index
    %c0_1 = arith.constant 0 : index
    %1 = vector.load %arg1[%c0, %c0_0, %c0_1] : memref<1x68x5xf32, #tpu.memory_space<vmem>>, vector<1x67x5xf32>
    %2 = vector.shape_cast %1 : vector<1x67x5xf32> to vector<67x5xf32>
    %c0_2 = arith.constant 0 : index
    %c0_3 = arith.constant 0 : index
    %c0_4 = arith.constant 0 : index
    %3 = vector.load %arg2[%c0_2, %c0_3, %c0_4] : memref<2x5x32xf32, #tpu.memory_space<vmem>>, vector<1x5x32xf32>
    %4 = vector.shape_cast %3 : vector<1x5x32xf32> to vector<5x32xf32>
    %cst_5 = arith.constant dense<0.000000e+00> : vector<67x32xf32>
    %5 = tpu.matmul %2, %4, %cst_5 {dimension_numbers = #tpu.dot_dimension_numbers<[1], [0], [0], [1], [0, 0, 1, 1], [], []>} : vector<67x5xf32>, vector<5x32xf32>, vector<67x32xf32> -> vector<67x32xf32>
    %6 = arith.addf %0, %5 : vector<67x32xf32>
    %c0_6 = arith.constant 0 : index
    %c1 = arith.constant 1 : index
    %c0_7 = arith.constant 0 : index
    %7 = vector.load %arg1[%c0_6, %c1, %c0_7] : memref<1x68x5xf32, #tpu.memory_space<vmem>>, vector<1x67x5xf32>
    %8 = vector.shape_cast %7 : vector<1x67x5xf32> to vector<67x5xf32>
    %c1_8 = arith.constant 1 : index
    %c0_9 = arith.constant 0 : index
    %c0_10 = arith.constant 0 : index
    %9 = vector.load %arg2[%c1_8, %c0_9, %c0_10] : memref<2x5x32xf32, #tpu.memory_space<vmem>>, vector<1x5x32xf32>
    %10 = vector.shape_cast %9 : vector<1x5x32xf32> to vector<5x32xf32>
    %cst_11 = arith.constant dense<0.000000e+00> : vector<67x32xf32>
    %11 = tpu.matmul %8, %10, %cst_11 {dimension_numbers = #tpu.dot_dimension_numbers<[1], [0], [0], [1], [0, 0, 1, 1], [], []>} : vector<67x5xf32>, vector<5x32xf32>, vector<67x32xf32> -> vector<67x32xf32>
    %12 = arith.addf %6, %11 : vector<67x32xf32>
    %cst_12 = arith.constant dense<0.000000e+00> : vector<32xf32>
    %13 = vector.multi_reduction <add>, %12, %cst_12 [0] : vector<67x32xf32> to vector<32xf32>
    %14 = vector.shape_cast %13 : vector<32xf32> to vector<1x32xf32>
    %cst_13 = arith.constant 6.700000e+01 : f32
    %15 = vector.broadcast %cst_13 : f32 to vector<1x32xf32>
    %16 = arith.divf %14, %15 : vector<1x32xf32>
    %17 = vector.broadcast %16 : vector<1x32xf32> to vector<67x32xf32>
    %18 = arith.subf %12, %17 : vector<67x32xf32>
    %19 = arith.mulf %18, %18 : vector<67x32xf32>
    %cst_14 = arith.constant dense<0.000000e+00> : vector<32xf32>
    %20 = vector.multi_reduction <add>, %19, %cst_14 [0] : vector<67x32xf32> to vector<32xf32>
    %21 = vector.shape_cast %20 : vector<32xf32> to vector<1x32xf32>
    %cst_15 = arith.constant 6.700000e+01 : f32
    %22 = vector.broadcast %cst_15 : f32 to vector<1x32xf32>
    %23 = arith.divf %21, %22 : vector<1x32xf32>
    %cst_16 = arith.constant 9.99999974E-6 : f32
    %24 = vector.broadcast %cst_16 : f32 to vector<1x32xf32>
    %25 = arith.addf %23, %24 : vector<1x32xf32>
    %26 = math.rsqrt %25 : vector<1x32xf32>
    %27 = vector.broadcast %26 : vector<1x32xf32> to vector<67x32xf32>
    %28 = arith.mulf %18, %27 : vector<67x32xf32>
    %c0_17 = arith.constant 0 : index
    %c0_18 = arith.constant 0 : index
    %29 = vector.load %arg3[%c0_17, %c0_18] : memref<1x32xf32, #tpu.memory_space<vmem>>, vector<1x32xf32>
    %30 = vector.broadcast %29 : vector<1x32xf32> to vector<67x32xf32>
    %31 = arith.mulf %28, %30 : vector<67x32xf32>
    %c0_19 = arith.constant 0 : index
    %c0_20 = arith.constant 0 : index
    %32 = vector.load %arg4[%c0_19, %c0_20] : memref<1x32xf32, #tpu.memory_space<vmem>>, vector<1x32xf32>
    %33 = vector.broadcast %32 : vector<1x32xf32> to vector<67x32xf32>
    %34 = arith.addf %31, %33 : vector<67x32xf32>
    %35 = arith.mulf %34, %34 : vector<67x32xf32>
    %36 = arith.mulf %34, %35 : vector<67x32xf32>
    %cst_21 = arith.constant 4.471500e-02 : f32
    %37 = vector.broadcast %cst_21 : f32 to vector<67x32xf32>
    %38 = arith.mulf %37, %36 : vector<67x32xf32>
    %39 = arith.addf %34, %38 : vector<67x32xf32>
    %cst_22 = arith.constant 0.797884583 : f32
    %40 = vector.broadcast %cst_22 : f32 to vector<67x32xf32>
    %41 = arith.mulf %40, %39 : vector<67x32xf32>
    %42 = math.tanh %41 : vector<67x32xf32>
    %cst_23 = arith.constant 1.000000e+00 : f32
    %43 = vector.broadcast %cst_23 : f32 to vector<67x32xf32>
    %44 = arith.addf %43, %42 : vector<67x32xf32>
    %cst_24 = arith.constant 5.000000e-01 : f32
    %45 = vector.broadcast %cst_24 : f32 to vector<67x32xf32>
    %46 = arith.mulf %45, %44 : vector<67x32xf32>
    %47 = arith.mulf %34, %46 : vector<67x32xf32>
    %c0_25 = arith.constant 0 : index
    %c0_26 = arith.constant 0 : index
    %c0_27 = arith.constant 0 : index
    %48 = vector.load %arg5[%c0_25, %c0_26, %c0_27] : memref<1x67x32xf32, #tpu.memory_space<vmem>>, vector<1x67x32xf32>
    %49 = vector.shape_cast %48 : vector<1x67x32xf32> to vector<67x32xf32>
    %50 = vector.shape_cast %47 : vector<67x32xf32> to vector<1x67x32xf32>
    tpu.vector_store %arg5[%c0_25, %c0_26, %c0_27], %50 {strides = array<i32>} : memref<1x67x32xf32, #tpu.memory_space<vmem>>, vector<1x67x32xf32>,
    return
  }
  func.func @transform_0(%arg0: i32) -> (i32, i32, i32) {
    %c0_i32 = arith.constant 0 : i32
    %c0_i32_0 = arith.constant 0 : i32
    %c0_i32_1 = arith.constant 0 : i32
    return %arg0, %c0_i32, %c0_i32_0 : i32, i32, i32
  }
  func.func @transform_1(%arg0: i32) -> (i32, i32, i32) {
    %c0_i32 = arith.constant 0 : i32
    %c0_i32_0 = arith.constant 0 : i32
    %c0_i32_1 = arith.constant 0 : i32
    %c0_i32_2 = arith.constant 0 : i32
    return %c0_i32, %c0_i32_0, %c0_i32_1 : i32, i32, i32
  }
  func.func @transform_2(%arg0: i32) -> (i32, i32) {
    %c0_i32 = arith.constant 0 : i32
    %c0_i32_0 = arith.constant 0 : i32
    %c0_i32_1 = arith.constant 0 : i32
    return %c0_i32, %c0_i32_0 : i32, i32
  }
  func.func @transform_3(%arg0: i32) -> (i32, i32) {
    %c0_i32 = arith.constant 0 : i32
    %c0_i32_0 = arith.constant 0 : i32
    %c0_i32_1 = arith.constant 0 : i32
    return %c0_i32, %c0_i32_0 : i32, i32
  }
  func.func @transform_4(%arg0: i32) -> (i32, i32, i32) {
    %c0_i32 = arith.constant 0 : i32
    %c0_i32_0 = arith.constant 0 : i32
    %c0_i32_1 = arith.constant 0 : i32
    return %arg0, %c0_i32, %c0_i32_0 : i32, i32, i32
  }
}

module attributes {stable_mosaic.version = 11 : i64} {
  func.func @_conv_gelu_kernel(%arg0: i32, %arg1: memref<1x34x64xf32, #tpu.memory_space<vmem>>, %arg2: memref<2x64x32xf32, #tpu.memory_space<vmem>>, %arg3: memref<1x33x32xf32, #tpu.memory_space<vmem>>) attributes {dimension_semantics = [#tpu.dimension_semantics<parallel>], iteration_bounds = array<i64: 2>, scalar_prefetch = 0 : i64, scratch_operands = 0 : i64, tpu.core_type = #tpu.core_type<tc>, window_params = [{transform_indices = @transform_0, window_bounds = array<i64: 1, 34, 64>}, {pipeline_mode = #tpu.pipeline_mode<synchronous>, transform_indices = @transform_1, window_bounds = array<i64: 2, 64, 32>}, {transform_indices = @transform_2, window_bounds = array<i64: 1, 33, 32>}]} {
    %cst = arith.constant 0.000000e+00 : f32
    %0 = vector.broadcast %cst : f32 to vector<33x32xf32>
    %c0 = arith.constant 0 : index
    %c0_0 = arith.constant 0 : index
    %c0_1 = arith.constant 0 : index
    %1 = vector.load %arg1[%c0, %c0_0, %c0_1] : memref<1x34x64xf32, #tpu.memory_space<vmem>>, vector<1x33x64xf32>
    %2 = vector.shape_cast %1 : vector<1x33x64xf32> to vector<33x64xf32>
    %c0_2 = arith.constant 0 : index
    %c0_3 = arith.constant 0 : index
    %c0_4 = arith.constant 0 : index
    %3 = vector.load %arg2[%c0_2, %c0_3, %c0_4] : memref<2x64x32xf32, #tpu.memory_space<vmem>>, vector<1x64x32xf32>
    %4 = vector.shape_cast %3 : vector<1x64x32xf32> to vector<64x32xf32>
    %cst_5 = arith.constant dense<0.000000e+00> : vector<33x32xf32>
    %5 = tpu.matmul %2, %4, %cst_5 {dimension_numbers = #tpu.dot_dimension_numbers<[1], [0], [0], [1], [0, 0, 1, 1], [], []>} : vector<33x64xf32>, vector<64x32xf32>, vector<33x32xf32> -> vector<33x32xf32>
    %6 = arith.addf %0, %5 : vector<33x32xf32>
    %c0_6 = arith.constant 0 : index
    %c1 = arith.constant 1 : index
    %c0_7 = arith.constant 0 : index
    %7 = vector.load %arg1[%c0_6, %c1, %c0_7] : memref<1x34x64xf32, #tpu.memory_space<vmem>>, vector<1x33x64xf32>
    %8 = vector.shape_cast %7 : vector<1x33x64xf32> to vector<33x64xf32>
    %c1_8 = arith.constant 1 : index
    %c0_9 = arith.constant 0 : index
    %c0_10 = arith.constant 0 : index
    %9 = vector.load %arg2[%c1_8, %c0_9, %c0_10] : memref<2x64x32xf32, #tpu.memory_space<vmem>>, vector<1x64x32xf32>
    %10 = vector.shape_cast %9 : vector<1x64x32xf32> to vector<64x32xf32>
    %cst_11 = arith.constant dense<0.000000e+00> : vector<33x32xf32>
    %11 = tpu.matmul %8, %10, %cst_11 {dimension_numbers = #tpu.dot_dimension_numbers<[1], [0], [0], [1], [0, 0, 1, 1], [], []>} : vector<33x64xf32>, vector<64x32xf32>, vector<33x32xf32> -> vector<33x32xf32>
    %12 = arith.addf %6, %11 : vector<33x32xf32>
    %13 = arith.mulf %12, %12 : vector<33x32xf32>
    %14 = arith.mulf %12, %13 : vector<33x32xf32>
    %cst_12 = arith.constant 4.471500e-02 : f32
    %15 = vector.broadcast %cst_12 : f32 to vector<33x32xf32>
    %16 = arith.mulf %15, %14 : vector<33x32xf32>
    %17 = arith.addf %12, %16 : vector<33x32xf32>
    %cst_13 = arith.constant 0.797884583 : f32
    %18 = vector.broadcast %cst_13 : f32 to vector<33x32xf32>
    %19 = arith.mulf %18, %17 : vector<33x32xf32>
    %20 = math.tanh %19 : vector<33x32xf32>
    %cst_14 = arith.constant 1.000000e+00 : f32
    %21 = vector.broadcast %cst_14 : f32 to vector<33x32xf32>
    %22 = arith.addf %21, %20 : vector<33x32xf32>
    %cst_15 = arith.constant 5.000000e-01 : f32
    %23 = vector.broadcast %cst_15 : f32 to vector<33x32xf32>
    %24 = arith.mulf %23, %22 : vector<33x32xf32>
    %25 = arith.mulf %12, %24 : vector<33x32xf32>
    %c0_16 = arith.constant 0 : index
    %c0_17 = arith.constant 0 : index
    %c0_18 = arith.constant 0 : index
    %26 = vector.load %arg3[%c0_16, %c0_17, %c0_18] : memref<1x33x32xf32, #tpu.memory_space<vmem>>, vector<1x33x32xf32>
    %27 = vector.shape_cast %26 : vector<1x33x32xf32> to vector<33x32xf32>
    %28 = vector.shape_cast %25 : vector<33x32xf32> to vector<1x33x32xf32>
    tpu.vector_store %arg3[%c0_16, %c0_17, %c0_18], %28 {strides = array<i32>} : memref<1x33x32xf32, #tpu.memory_space<vmem>>, vector<1x33x32xf32>,
    return
  }
  func.func @transform_0(%arg0: i32) -> (i32, i32, i32) {
    %c0_i32 = arith.constant 0 : i32
    %c0_i32_0 = arith.constant 0 : i32
    %c0_i32_1 = arith.constant 0 : i32
    return %arg0, %c0_i32, %c0_i32_0 : i32, i32, i32
  }
  func.func @transform_1(%arg0: i32) -> (i32, i32, i32) {
    %c0_i32 = arith.constant 0 : i32
    %c0_i32_0 = arith.constant 0 : i32
    %c0_i32_1 = arith.constant 0 : i32
    %c0_i32_2 = arith.constant 0 : i32
    return %c0_i32, %c0_i32_0, %c0_i32_1 : i32, i32, i32
  }
  func.func @transform_2(%arg0: i32) -> (i32, i32, i32) {
    %c0_i32 = arith.constant 0 : i32
    %c0_i32_0 = arith.constant 0 : i32
    %c0_i32_1 = arith.constant 0 : i32
    return %arg0, %c0_i32, %c0_i32_0 : i32, i32, i32
  }
}

module attributes {stable_mosaic.version = 11 : i64} {
  func.func @_conv_gelu_kernel(%arg0: i32, %arg1: memref<1x17x64xf32, #tpu.memory_space<vmem>>, %arg2: memref<2x64x32xf32, #tpu.memory_space<vmem>>, %arg3: memref<1x16x32xf32, #tpu.memory_space<vmem>>) attributes {dimension_semantics = [#tpu.dimension_semantics<parallel>], iteration_bounds = array<i64: 2>, scalar_prefetch = 0 : i64, scratch_operands = 0 : i64, tpu.core_type = #tpu.core_type<tc>, window_params = [{transform_indices = @transform_0, window_bounds = array<i64: 1, 17, 64>}, {pipeline_mode = #tpu.pipeline_mode<synchronous>, transform_indices = @transform_1, window_bounds = array<i64: 2, 64, 32>}, {transform_indices = @transform_2, window_bounds = array<i64: 1, 16, 32>}]} {
    %cst = arith.constant 0.000000e+00 : f32
    %0 = vector.broadcast %cst : f32 to vector<16x32xf32>
    %c0 = arith.constant 0 : index
    %c0_0 = arith.constant 0 : index
    %c0_1 = arith.constant 0 : index
    %1 = vector.load %arg1[%c0, %c0_0, %c0_1] : memref<1x17x64xf32, #tpu.memory_space<vmem>>, vector<1x16x64xf32>
    %2 = vector.shape_cast %1 : vector<1x16x64xf32> to vector<16x64xf32>
    %c0_2 = arith.constant 0 : index
    %c0_3 = arith.constant 0 : index
    %c0_4 = arith.constant 0 : index
    %3 = vector.load %arg2[%c0_2, %c0_3, %c0_4] : memref<2x64x32xf32, #tpu.memory_space<vmem>>, vector<1x64x32xf32>
    %4 = vector.shape_cast %3 : vector<1x64x32xf32> to vector<64x32xf32>
    %cst_5 = arith.constant dense<0.000000e+00> : vector<16x32xf32>
    %5 = tpu.matmul %2, %4, %cst_5 {dimension_numbers = #tpu.dot_dimension_numbers<[1], [0], [0], [1], [0, 0, 1, 1], [], []>} : vector<16x64xf32>, vector<64x32xf32>, vector<16x32xf32> -> vector<16x32xf32>
    %6 = arith.addf %0, %5 : vector<16x32xf32>
    %c0_6 = arith.constant 0 : index
    %c1 = arith.constant 1 : index
    %c0_7 = arith.constant 0 : index
    %7 = vector.load %arg1[%c0_6, %c1, %c0_7] : memref<1x17x64xf32, #tpu.memory_space<vmem>>, vector<1x16x64xf32>
    %8 = vector.shape_cast %7 : vector<1x16x64xf32> to vector<16x64xf32>
    %c1_8 = arith.constant 1 : index
    %c0_9 = arith.constant 0 : index
    %c0_10 = arith.constant 0 : index
    %9 = vector.load %arg2[%c1_8, %c0_9, %c0_10] : memref<2x64x32xf32, #tpu.memory_space<vmem>>, vector<1x64x32xf32>
    %10 = vector.shape_cast %9 : vector<1x64x32xf32> to vector<64x32xf32>
    %cst_11 = arith.constant dense<0.000000e+00> : vector<16x32xf32>
    %11 = tpu.matmul %8, %10, %cst_11 {dimension_numbers = #tpu.dot_dimension_numbers<[1], [0], [0], [1], [0, 0, 1, 1], [], []>} : vector<16x64xf32>, vector<64x32xf32>, vector<16x32xf32> -> vector<16x32xf32>
    %12 = arith.addf %6, %11 : vector<16x32xf32>
    %13 = arith.mulf %12, %12 : vector<16x32xf32>
    %14 = arith.mulf %12, %13 : vector<16x32xf32>
    %cst_12 = arith.constant 4.471500e-02 : f32
    %15 = vector.broadcast %cst_12 : f32 to vector<16x32xf32>
    %16 = arith.mulf %15, %14 : vector<16x32xf32>
    %17 = arith.addf %12, %16 : vector<16x32xf32>
    %cst_13 = arith.constant 0.797884583 : f32
    %18 = vector.broadcast %cst_13 : f32 to vector<16x32xf32>
    %19 = arith.mulf %18, %17 : vector<16x32xf32>
    %20 = math.tanh %19 : vector<16x32xf32>
    %cst_14 = arith.constant 1.000000e+00 : f32
    %21 = vector.broadcast %cst_14 : f32 to vector<16x32xf32>
    %22 = arith.addf %21, %20 : vector<16x32xf32>
    %cst_15 = arith.constant 5.000000e-01 : f32
    %23 = vector.broadcast %cst_15 : f32 to vector<16x32xf32>
    %24 = arith.mulf %23, %22 : vector<16x32xf32>
    %25 = arith.mulf %12, %24 : vector<16x32xf32>
    %c0_16 = arith.constant 0 : index
    %c0_17 = arith.constant 0 : index
    %c0_18 = arith.constant 0 : index
    %26 = vector.load %arg3[%c0_16, %c0_17, %c0_18] : memref<1x16x32xf32, #tpu.memory_space<vmem>>, vector<1x16x32xf32>
    %27 = vector.shape_cast %26 : vector<1x16x32xf32> to vector<16x32xf32>
    %28 = vector.shape_cast %25 : vector<16x32xf32> to vector<1x16x32xf32>
    tpu.vector_store %arg3[%c0_16, %c0_17, %c0_18], %28 {strides = array<i32>} : memref<1x16x32xf32, #tpu.memory_space<vmem>>, vector<1x16x32xf32>,
    return
  }
  func.func @transform_0(%arg0: i32) -> (i32, i32, i32) {
    %c0_i32 = arith.constant 0 : i32
    %c0_i32_0 = arith.constant 0 : i32
    %c0_i32_1 = arith.constant 0 : i32
    return %arg0, %c0_i32, %c0_i32_0 : i32, i32, i32
  }
  func.func @transform_1(%arg0: i32) -> (i32, i32, i32) {
    %c0_i32 = arith.constant 0 : i32
    %c0_i32_0 = arith.constant 0 : i32
    %c0_i32_1 = arith.constant 0 : i32
    %c0_i32_2 = arith.constant 0 : i32
    return %c0_i32, %c0_i32_0, %c0_i32_1 : i32, i32, i32
  }
  func.func @transform_2(%arg0: i32) -> (i32, i32, i32) {
    %c0_i32 = arith.constant 0 : i32
    %c0_i32_0 = arith.constant 0 : i32
    %c0_i32_1 = arith.constant 0 : i32
    return %arg0, %c0_i32, %c0_i32_0 : i32, i32, i32
  }
}

module attributes {stable_mosaic.version = 11 : i64} {
  func.func @_featproj_kernel(%arg0: i32, %arg1: memref<1x16x32xf32, #tpu.memory_space<vmem>>, %arg2: memref<1x32xf32, #tpu.memory_space<vmem>>, %arg3: memref<1x32xf32, #tpu.memory_space<vmem>>, %arg4: memref<32x32xbf16, #tpu.memory_space<vmem>>, %arg5: memref<1x32xf32, #tpu.memory_space<vmem>>, %arg6: memref<1x16x32xf32, #tpu.memory_space<vmem>>) attributes {dimension_semantics = [#tpu.dimension_semantics<parallel>], iteration_bounds = array<i64: 2>, scalar_prefetch = 0 : i64, scratch_operands = 0 : i64, tpu.core_type = #tpu.core_type<tc>, window_params = [{transform_indices = @transform_0, window_bounds = array<i64: 1, 16, 32>}, {pipeline_mode = #tpu.pipeline_mode<synchronous>, transform_indices = @transform_1, window_bounds = array<i64: 1, 32>}, {pipeline_mode = #tpu.pipeline_mode<synchronous>, transform_indices = @transform_2, window_bounds = array<i64: 1, 32>}, {pipeline_mode = #tpu.pipeline_mode<synchronous>, transform_indices = @transform_3, window_bounds = array<i64: 32, 32>}, {pipeline_mode = #tpu.pipeline_mode<synchronous>, transform_indices = @transform_4, window_bounds = array<i64: 1, 32>}, {transform_indices = @transform_5, window_bounds = array<i64: 1, 16, 32>}]} {
    %c0 = arith.constant 0 : index
    %c0_0 = arith.constant 0 : index
    %c0_1 = arith.constant 0 : index
    %0 = vector.load %arg1[%c0, %c0_0, %c0_1] : memref<1x16x32xf32, #tpu.memory_space<vmem>>, vector<1x16x32xf32>
    %1 = vector.shape_cast %0 : vector<1x16x32xf32> to vector<16x32xf32>
    %c0_2 = arith.constant 0 : index
    %c0_3 = arith.constant 0 : index
    %2 = vector.load %arg2[%c0_2, %c0_3] : memref<1x32xf32, #tpu.memory_space<vmem>>, vector<1x32xf32>
    %c0_4 = arith.constant 0 : index
    %c0_5 = arith.constant 0 : index
    %3 = vector.load %arg3[%c0_4, %c0_5] : memref<1x32xf32, #tpu.memory_space<vmem>>, vector<1x32xf32>
    %cst = arith.constant dense<0.000000e+00> : vector<16xf32>
    %4 = vector.multi_reduction <add>, %1, %cst [1] : vector<16x32xf32> to vector<16xf32>
    %5 = vector.shape_cast %4 : vector<16xf32> to vector<16x1xf32>
    %cst_6 = arith.constant 3.200000e+01 : f32
    %6 = vector.broadcast %cst_6 : f32 to vector<16x1xf32>
    %7 = arith.divf %5, %6 : vector<16x1xf32>
    %8 = vector.broadcast %7 : vector<16x1xf32> to vector<16x32xf32>
    %9 = arith.subf %1, %8 : vector<16x32xf32>
    %10 = arith.mulf %9, %9 : vector<16x32xf32>
    %cst_7 = arith.constant dense<0.000000e+00> : vector<16xf32>
    %11 = vector.multi_reduction <add>, %10, %cst_7 [1] : vector<16x32xf32> to vector<16xf32>
    %12 = vector.shape_cast %11 : vector<16xf32> to vector<16x1xf32>
    %cst_8 = arith.constant 3.200000e+01 : f32
    %13 = vector.broadcast %cst_8 : f32 to vector<16x1xf32>
    %14 = arith.divf %12, %13 : vector<16x1xf32>
    %cst_9 = arith.constant 9.99999974E-6 : f32
    %15 = vector.broadcast %cst_9 : f32 to vector<16x1xf32>
    %16 = arith.addf %14, %15 : vector<16x1xf32>
    %17 = math.rsqrt %16 : vector<16x1xf32>
    %18 = vector.broadcast %17 : vector<16x1xf32> to vector<16x32xf32>
    %19 = arith.mulf %9, %18 : vector<16x32xf32>
    %20 = vector.broadcast %2 : vector<1x32xf32> to vector<16x32xf32>
    %21 = arith.mulf %19, %20 : vector<16x32xf32>
    %22 = vector.broadcast %3 : vector<1x32xf32> to vector<16x32xf32>
    %23 = arith.addf %21, %22 : vector<16x32xf32>
    %c0_10 = arith.constant 0 : index
    %c0_11 = arith.constant 0 : index
    %24 = vector.load %arg4[%c0_10, %c0_11] : memref<32x32xbf16, #tpu.memory_space<vmem>>, vector<32x32xbf16>
    %25 = arith.truncf %23 : vector<16x32xf32> to vector<16x32xbf16>
    %cst_12 = arith.constant dense<0.000000e+00> : vector<16x32xf32>
    %26 = tpu.matmul %25, %24, %cst_12 {dimension_numbers = #tpu.dot_dimension_numbers<[1], [0], [0], [1], [0, 0, 1, 1], [], []>} : vector<16x32xbf16>, vector<32x32xbf16>, vector<16x32xf32> -> vector<16x32xf32>
    %c0_13 = arith.constant 0 : index
    %c0_14 = arith.constant 0 : index
    %27 = vector.load %arg5[%c0_13, %c0_14] : memref<1x32xf32, #tpu.memory_space<vmem>>, vector<1x32xf32>
    %28 = vector.broadcast %27 : vector<1x32xf32> to vector<16x32xf32>
    %29 = arith.addf %26, %28 : vector<16x32xf32>
    %c0_15 = arith.constant 0 : index
    %c0_16 = arith.constant 0 : index
    %c0_17 = arith.constant 0 : index
    %30 = vector.load %arg6[%c0_15, %c0_16, %c0_17] : memref<1x16x32xf32, #tpu.memory_space<vmem>>, vector<1x16x32xf32>
    %31 = vector.shape_cast %30 : vector<1x16x32xf32> to vector<16x32xf32>
    %32 = vector.shape_cast %29 : vector<16x32xf32> to vector<1x16x32xf32>
    tpu.vector_store %arg6[%c0_15, %c0_16, %c0_17], %32 {strides = array<i32>} : memref<1x16x32xf32, #tpu.memory_space<vmem>>, vector<1x16x32xf32>,
    return
  }
  func.func @transform_0(%arg0: i32) -> (i32, i32, i32) {
    %c0_i32 = arith.constant 0 : i32
    %c0_i32_0 = arith.constant 0 : i32
    %c0_i32_1 = arith.constant 0 : i32
    return %arg0, %c0_i32, %c0_i32_0 : i32, i32, i32
  }
  func.func @transform_1(%arg0: i32) -> (i32, i32) {
    %c0_i32 = arith.constant 0 : i32
    %c0_i32_0 = arith.constant 0 : i32
    %c0_i32_1 = arith.constant 0 : i32
    return %c0_i32, %c0_i32_0 : i32, i32
  }
  func.func @transform_2(%arg0: i32) -> (i32, i32) {
    %c0_i32 = arith.constant 0 : i32
    %c0_i32_0 = arith.constant 0 : i32
    %c0_i32_1 = arith.constant 0 : i32
    return %c0_i32, %c0_i32_0 : i32, i32
  }
  func.func @transform_3(%arg0: i32) -> (i32, i32) {
    %c0_i32 = arith.constant 0 : i32
    %c0_i32_0 = arith.constant 0 : i32
    %c0_i32_1 = arith.constant 0 : i32
    return %c0_i32, %c0_i32_0 : i32, i32
  }
  func.func @transform_4(%arg0: i32) -> (i32, i32) {
    %c0_i32 = arith.constant 0 : i32
    %c0_i32_0 = arith.constant 0 : i32
    %c0_i32_1 = arith.constant 0 : i32
    return %c0_i32, %c0_i32_0 : i32, i32
  }
  func.func @transform_5(%arg0: i32) -> (i32, i32, i32) {
    %c0_i32 = arith.constant 0 : i32
    %c0_i32_0 = arith.constant 0 : i32
    %c0_i32_1 = arith.constant 0 : i32
    return %arg0, %c0_i32, %c0_i32_0 : i32, i32, i32
  }
}

module attributes {stable_mosaic.version = 11 : i64} {
  func.func @_mean_pool_kernel(%arg0: i32, %arg1: memref<2x16x32xf32, #tpu.memory_space<vmem>>, %arg2: memref<2x32xf32, #tpu.memory_space<vmem>>) attributes {dimension_semantics = [#tpu.dimension_semantics<arbitrary>], iteration_bounds = array<i64: 1>, scalar_prefetch = 0 : i64, scratch_operands = 0 : i64, tpu.core_type = #tpu.core_type<tc>, window_params = [{pipeline_mode = #tpu.pipeline_mode<synchronous>, transform_indices = @transform_0, window_bounds = array<i64: 2, 16, 32>}, {pipeline_mode = #tpu.pipeline_mode<synchronous>, transform_indices = @transform_1, window_bounds = array<i64: 2, 32>}]} {
    %c0 = arith.constant 0 : index
    %c0_0 = arith.constant 0 : index
    %c0_1 = arith.constant 0 : index
    %0 = vector.load %arg1[%c0, %c0_0, %c0_1] : memref<2x16x32xf32, #tpu.memory_space<vmem>>, vector<1x16x32xf32>
    %1 = vector.shape_cast %0 : vector<1x16x32xf32> to vector<16x32xf32>
    %cst = arith.constant dense<0.000000e+00> : vector<32xf32>
    %2 = vector.multi_reduction <add>, %1, %cst [0] : vector<16x32xf32> to vector<32xf32>
    %3 = vector.shape_cast %2 : vector<32xf32> to vector<1x32xf32>
    %cst_2 = arith.constant 1.600000e+01 : f32
    %4 = vector.broadcast %cst_2 : f32 to vector<1x32xf32>
    %5 = arith.divf %3, %4 : vector<1x32xf32>
    %c1 = arith.constant 1 : index
    %c0_3 = arith.constant 0 : index
    %c0_4 = arith.constant 0 : index
    %6 = vector.load %arg1[%c1, %c0_3, %c0_4] : memref<2x16x32xf32, #tpu.memory_space<vmem>>, vector<1x16x32xf32>
    %7 = vector.shape_cast %6 : vector<1x16x32xf32> to vector<16x32xf32>
    %cst_5 = arith.constant dense<0.000000e+00> : vector<32xf32>
    %8 = vector.multi_reduction <add>, %7, %cst_5 [0] : vector<16x32xf32> to vector<32xf32>
    %9 = vector.shape_cast %8 : vector<32xf32> to vector<1x32xf32>
    %cst_6 = arith.constant 1.600000e+01 : f32
    %10 = vector.broadcast %cst_6 : f32 to vector<1x32xf32>
    %11 = arith.divf %9, %10 : vector<1x32xf32>
    %12 = tpu.concatenate %5, %11 in 0 : vector<1x32xf32>, vector<1x32xf32> -> vector<2x32xf32>
    %c0_7 = arith.constant 0 : index
    %c0_8 = arith.constant 0 : index
    %13 = vector.load %arg2[%c0_7, %c0_8] : memref<2x32xf32, #tpu.memory_space<vmem>>, vector<2x32xf32>
    tpu.vector_store %arg2[%c0_7, %c0_8], %12 {strides = array<i32>} : memref<2x32xf32, #tpu.memory_space<vmem>>, vector<2x32xf32>,
    return
  }
  func.func @transform_0(%arg0: i32) -> (i32, i32, i32) {
    %c0_i32 = arith.constant 0 : i32
    %c0_i32_0 = arith.constant 0 : i32
    %c0_i32_1 = arith.constant 0 : i32
    %c0_i32_2 = arith.constant 0 : i32
    return %c0_i32, %c0_i32_0, %c0_i32_1 : i32, i32, i32
  }
  func.func @transform_1(%arg0: i32) -> (i32, i32) {
    %c0_i32 = arith.constant 0 : i32
    %c0_i32_0 = arith.constant 0 : i32
    %c0_i32_1 = arith.constant 0 : i32
    return %c0_i32, %c0_i32_0 : i32, i32
  }
}

module attributes {stable_mosaic.version = 11 : i64} {
  func.func @_encoder_layer_kernel(%arg0: i32, %arg1: memref<1x16x32xf32, #tpu.memory_space<vmem>>, %arg2: memref<32x96xbf16, #tpu.memory_space<vmem>>, %arg3: memref<1x96xf32, #tpu.memory_space<vmem>>, %arg4: memref<32x32xbf16, #tpu.memory_space<vmem>>, %arg5: memref<1x32xf32, #tpu.memory_space<vmem>>, %arg6: memref<1x32xf32, #tpu.memory_space<vmem>>, %arg7: memref<1x32xf32, #tpu.memory_space<vmem>>, %arg8: memref<32x64xbf16, #tpu.memory_space<vmem>>, %arg9: memref<1x64xf32, #tpu.memory_space<vmem>>, %arg10: memref<64x32xbf16, #tpu.memory_space<vmem>>, %arg11: memref<1x32xf32, #tpu.memory_space<vmem>>, %arg12: memref<1x32xf32, #tpu.memory_space<vmem>>, %arg13: memref<1x32xf32, #tpu.memory_space<vmem>>, %arg14: memref<1x16x32xf32, #tpu.memory_space<vmem>>) attributes {dimension_semantics = [#tpu.dimension_semantics<parallel>], iteration_bounds = array<i64: 2>, scalar_prefetch = 0 : i64, scratch_operands = 0 : i64, tpu.core_type = #tpu.core_type<tc>, window_params = [{transform_indices = @transform_0, window_bounds = array<i64: 1, 16, 32>}, {pipeline_mode = #tpu.pipeline_mode<synchronous>, transform_indices = @transform_1, window_bounds = array<i64: 32, 96>}, {pipeline_mode = #tpu.pipeline_mode<synchronous>, transform_indices = @transform_2, window_bounds = array<i64: 1, 96>}, {pipeline_mode = #tpu.pipeline_mode<synchronous>, transform_indices = @transform_3, window_bounds = array<i64: 32, 32>}, {pipeline_mode = #tpu.pipeline_mode<synchronous>, transform_indices = @transform_4, window_bounds = array<i64: 1, 32>}, {pipeline_mode = #tpu.pipeline_mode<synchronous>, transform_indices = @transform_5, window_bounds = array<i64: 1, 32>}, {pipeline_mode = #tpu.pipeline_mode<synchronous>, transform_indices = @transform_6, window_bounds = array<i64: 1, 32>}, {pipeline_mode = #tpu.pipeline_mode<synchronous>, transform_indices = @transform_7, window_bounds = array<i64: 32, 64>}, {pipeline_mode = #tpu.pipeline_mode<synchronous>, transform_indices = @transform_8, window_bounds = array<i64: 1, 64>}, {pipeline_mode = #tpu.pipeline_mode<synchronous>, transform_indices = @transform_9, window_bounds = array<i64: 64, 32>}, {pipeline_mode = #tpu.pipeline_mode<synchronous>, transform_indices = @transform_10, window_bounds = array<i64: 1, 32>}, {pipeline_mode = #tpu.pipeline_mode<synchronous>, transform_indices = @transform_11, window_bounds = array<i64: 1, 32>}, {pipeline_mode = #tpu.pipeline_mode<synchronous>, transform_indices = @transform_12, window_bounds = array<i64: 1, 32>}, {transform_indices = @transform_13, window_bounds = array<i64: 1, 16, 32>}]} {
    %c0 = arith.constant 0 : index
    %c0_0 = arith.constant 0 : index
    %c0_1 = arith.constant 0 : index
    %0 = vector.load %arg1[%c0, %c0_0, %c0_1] : memref<1x16x32xf32, #tpu.memory_space<vmem>>, vector<1x16x32xf32>
    %1 = vector.shape_cast %0 : vector<1x16x32xf32> to vector<16x32xf32>
    %c0_2 = arith.constant 0 : index
    %c0_3 = arith.constant 0 : index
    %2 = vector.load %arg2[%c0_2, %c0_3] : memref<32x96xbf16, #tpu.memory_space<vmem>>, vector<32x96xbf16>
    %3 = arith.truncf %1 : vector<16x32xf32> to vector<16x32xbf16>
    %cst = arith.constant dense<0.000000e+00> : vector<16x96xf32>
    %4 = tpu.matmul %3, %2, %cst {dimension_numbers = #tpu.dot_dimension_numbers<[1], [0], [0], [1], [0, 0, 1, 1], [], []>} : vector<16x32xbf16>, vector<32x96xbf16>, vector<16x96xf32> -> vector<16x96xf32>
    %c0_4 = arith.constant 0 : index
    %c0_5 = arith.constant 0 : index
    %5 = vector.load %arg3[%c0_4, %c0_5] : memref<1x96xf32, #tpu.memory_space<vmem>>, vector<1x96xf32>
    %6 = vector.broadcast %5 : vector<1x96xf32> to vector<16x96xf32>
    %7 = arith.addf %4, %6 : vector<16x96xf32>
    %8 = vector.extract_strided_slice %7 {offsets = [0, 0], sizes = [16, 32], strides = [1, 1]} : vector<16x96xf32> to vector<16x32xf32>
    %9 = vector.extract_strided_slice %7 {offsets = [0, 32], sizes = [16, 32], strides = [1, 1]} : vector<16x96xf32> to vector<16x32xf32>
    %10 = vector.extract_strided_slice %7 {offsets = [0, 64], sizes = [16, 32], strides = [1, 1]} : vector<16x96xf32> to vector<16x32xf32>
    %11 = vector.extract_strided_slice %8 {offsets = [0, 0], sizes = [16, 8], strides = [1, 1]} : vector<16x32xf32> to vector<16x8xf32>
    %cst_6 = arith.constant 0.353553385 : f32
    %12 = vector.broadcast %cst_6 : f32 to vector<16x8xf32>
    %13 = arith.mulf %11, %12 : vector<16x8xf32>
    %14 = vector.extract_strided_slice %9 {offsets = [0, 0], sizes = [16, 8], strides = [1, 1]} : vector<16x32xf32> to vector<16x8xf32>
    %cst_7 = arith.constant dense<0.000000e+00> : vector<16x16xf32>
    %15 = tpu.matmul %13, %14, %cst_7 {dimension_numbers = #tpu.dot_dimension_numbers<[1], [1], [0], [0], [0, 0, 1, 0], [], []>} : vector<16x8xf32>, vector<16x8xf32>, vector<16x16xf32> -> vector<16x16xf32>
    %cst_8 = arith.constant dense<0xFF800000> : vector<16xf32>
    %16 = vector.multi_reduction <maximumf>, %15, %cst_8 [1] : vector<16x16xf32> to vector<16xf32>
    %17 = vector.shape_cast %16 : vector<16xf32> to vector<16x1xf32>
    %18 = vector.broadcast %17 : vector<16x1xf32> to vector<16x16xf32>
    %19 = arith.subf %15, %18 : vector<16x16xf32>
    %20 = math.exp %19 : vector<16x16xf32>
    %cst_9 = arith.constant dense<0.000000e+00> : vector<16xf32>
    %21 = vector.multi_reduction <add>, %20, %cst_9 [1] : vector<16x16xf32> to vector<16xf32>
    %22 = vector.shape_cast %21 : vector<16xf32> to vector<16x1xf32>
    %23 = tpu.reciprocal %22 {approx = true} : vector<16x1xf32> -> vector<16x1xf32>
    %24 = vector.extract_strided_slice %10 {offsets = [0, 0], sizes = [16, 8], strides = [1, 1]} : vector<16x32xf32> to vector<16x8xf32>
    %cst_10 = arith.constant dense<0.000000e+00> : vector<16x8xf32>
    %25 = tpu.matmul %20, %24, %cst_10 {dimension_numbers = #tpu.dot_dimension_numbers<[1], [0], [0], [1], [0, 0, 1, 1], [], []>} : vector<16x16xf32>, vector<16x8xf32>, vector<16x8xf32> -> vector<16x8xf32>
    %26 = vector.broadcast %23 : vector<16x1xf32> to vector<16x8xf32>
    %27 = arith.mulf %25, %26 : vector<16x8xf32>
    %28 = vector.extract_strided_slice %8 {offsets = [0, 8], sizes = [16, 8], strides = [1, 1]} : vector<16x32xf32> to vector<16x8xf32>
    %cst_11 = arith.constant 0.353553385 : f32
    %29 = vector.broadcast %cst_11 : f32 to vector<16x8xf32>
    %30 = arith.mulf %28, %29 : vector<16x8xf32>
    %31 = vector.extract_strided_slice %9 {offsets = [0, 8], sizes = [16, 8], strides = [1, 1]} : vector<16x32xf32> to vector<16x8xf32>
    %cst_12 = arith.constant dense<0.000000e+00> : vector<16x16xf32>
    %32 = tpu.matmul %30, %31, %cst_12 {dimension_numbers = #tpu.dot_dimension_numbers<[1], [1], [0], [0], [0, 0, 1, 0], [], []>} : vector<16x8xf32>, vector<16x8xf32>, vector<16x16xf32> -> vector<16x16xf32>
    %cst_13 = arith.constant dense<0xFF800000> : vector<16xf32>
    %33 = vector.multi_reduction <maximumf>, %32, %cst_13 [1] : vector<16x16xf32> to vector<16xf32>
    %34 = vector.shape_cast %33 : vector<16xf32> to vector<16x1xf32>
    %35 = vector.broadcast %34 : vector<16x1xf32> to vector<16x16xf32>
    %36 = arith.subf %32, %35 : vector<16x16xf32>
    %37 = math.exp %36 : vector<16x16xf32>
    %cst_14 = arith.constant dense<0.000000e+00> : vector<16xf32>
    %38 = vector.multi_reduction <add>, %37, %cst_14 [1] : vector<16x16xf32> to vector<16xf32>
    %39 = vector.shape_cast %38 : vector<16xf32> to vector<16x1xf32>
    %40 = tpu.reciprocal %39 {approx = true} : vector<16x1xf32> -> vector<16x1xf32>
    %41 = vector.extract_strided_slice %10 {offsets = [0, 8], sizes = [16, 8], strides = [1, 1]} : vector<16x32xf32> to vector<16x8xf32>
    %cst_15 = arith.constant dense<0.000000e+00> : vector<16x8xf32>
    %42 = tpu.matmul %37, %41, %cst_15 {dimension_numbers = #tpu.dot_dimension_numbers<[1], [0], [0], [1], [0, 0, 1, 1], [], []>} : vector<16x16xf32>, vector<16x8xf32>, vector<16x8xf32> -> vector<16x8xf32>
    %43 = vector.broadcast %40 : vector<16x1xf32> to vector<16x8xf32>
    %44 = arith.mulf %42, %43 : vector<16x8xf32>
    %45 = vector.extract_strided_slice %8 {offsets = [0, 16], sizes = [16, 8], strides = [1, 1]} : vector<16x32xf32> to vector<16x8xf32>
    %cst_16 = arith.constant 0.353553385 : f32
    %46 = vector.broadcast %cst_16 : f32 to vector<16x8xf32>
    %47 = arith.mulf %45, %46 : vector<16x8xf32>
    %48 = vector.extract_strided_slice %9 {offsets = [0, 16], sizes = [16, 8], strides = [1, 1]} : vector<16x32xf32> to vector<16x8xf32>
    %cst_17 = arith.constant dense<0.000000e+00> : vector<16x16xf32>
    %49 = tpu.matmul %47, %48, %cst_17 {dimension_numbers = #tpu.dot_dimension_numbers<[1], [1], [0], [0], [0, 0, 1, 0], [], []>} : vector<16x8xf32>, vector<16x8xf32>, vector<16x16xf32> -> vector<16x16xf32>
    %cst_18 = arith.constant dense<0xFF800000> : vector<16xf32>
    %50 = vector.multi_reduction <maximumf>, %49, %cst_18 [1] : vector<16x16xf32> to vector<16xf32>
    %51 = vector.shape_cast %50 : vector<16xf32> to vector<16x1xf32>
    %52 = vector.broadcast %51 : vector<16x1xf32> to vector<16x16xf32>
    %53 = arith.subf %49, %52 : vector<16x16xf32>
    %54 = math.exp %53 : vector<16x16xf32>
    %cst_19 = arith.constant dense<0.000000e+00> : vector<16xf32>
    %55 = vector.multi_reduction <add>, %54, %cst_19 [1] : vector<16x16xf32> to vector<16xf32>
    %56 = vector.shape_cast %55 : vector<16xf32> to vector<16x1xf32>
    %57 = tpu.reciprocal %56 {approx = true} : vector<16x1xf32> -> vector<16x1xf32>
    %58 = vector.extract_strided_slice %10 {offsets = [0, 16], sizes = [16, 8], strides = [1, 1]} : vector<16x32xf32> to vector<16x8xf32>
    %cst_20 = arith.constant dense<0.000000e+00> : vector<16x8xf32>
    %59 = tpu.matmul %54, %58, %cst_20 {dimension_numbers = #tpu.dot_dimension_numbers<[1], [0], [0], [1], [0, 0, 1, 1], [], []>} : vector<16x16xf32>, vector<16x8xf32>, vector<16x8xf32> -> vector<16x8xf32>
    %60 = vector.broadcast %57 : vector<16x1xf32> to vector<16x8xf32>
    %61 = arith.mulf %59, %60 : vector<16x8xf32>
    %62 = vector.extract_strided_slice %8 {offsets = [0, 24], sizes = [16, 8], strides = [1, 1]} : vector<16x32xf32> to vector<16x8xf32>
    %cst_21 = arith.constant 0.353553385 : f32
    %63 = vector.broadcast %cst_21 : f32 to vector<16x8xf32>
    %64 = arith.mulf %62, %63 : vector<16x8xf32>
    %65 = vector.extract_strided_slice %9 {offsets = [0, 24], sizes = [16, 8], strides = [1, 1]} : vector<16x32xf32> to vector<16x8xf32>
    %cst_22 = arith.constant dense<0.000000e+00> : vector<16x16xf32>
    %66 = tpu.matmul %64, %65, %cst_22 {dimension_numbers = #tpu.dot_dimension_numbers<[1], [1], [0], [0], [0, 0, 1, 0], [], []>} : vector<16x8xf32>, vector<16x8xf32>, vector<16x16xf32> -> vector<16x16xf32>
    %cst_23 = arith.constant dense<0xFF800000> : vector<16xf32>
    %67 = vector.multi_reduction <maximumf>, %66, %cst_23 [1] : vector<16x16xf32> to vector<16xf32>
    %68 = vector.shape_cast %67 : vector<16xf32> to vector<16x1xf32>
    %69 = vector.broadcast %68 : vector<16x1xf32> to vector<16x16xf32>
    %70 = arith.subf %66, %69 : vector<16x16xf32>
    %71 = math.exp %70 : vector<16x16xf32>
    %cst_24 = arith.constant dense<0.000000e+00> : vector<16xf32>
    %72 = vector.multi_reduction <add>, %71, %cst_24 [1] : vector<16x16xf32> to vector<16xf32>
    %73 = vector.shape_cast %72 : vector<16xf32> to vector<16x1xf32>
    %74 = tpu.reciprocal %73 {approx = true} : vector<16x1xf32> -> vector<16x1xf32>
    %75 = vector.extract_strided_slice %10 {offsets = [0, 24], sizes = [16, 8], strides = [1, 1]} : vector<16x32xf32> to vector<16x8xf32>
    %cst_25 = arith.constant dense<0.000000e+00> : vector<16x8xf32>
    %76 = tpu.matmul %71, %75, %cst_25 {dimension_numbers = #tpu.dot_dimension_numbers<[1], [0], [0], [1], [0, 0, 1, 1], [], []>} : vector<16x16xf32>, vector<16x8xf32>, vector<16x8xf32> -> vector<16x8xf32>
    %77 = vector.broadcast %74 : vector<16x1xf32> to vector<16x8xf32>
    %78 = arith.mulf %76, %77 : vector<16x8xf32>
    %79 = tpu.concatenate %27, %44, %61, %78 in 1 : vector<16x8xf32>, vector<16x8xf32>, vector<16x8xf32>, vector<16x8xf32> -> vector<16x32xf32>
    %c0_26 = arith.constant 0 : index
    %c0_27 = arith.constant 0 : index
    %80 = vector.load %arg4[%c0_26, %c0_27] : memref<32x32xbf16, #tpu.memory_space<vmem>>, vector<32x32xbf16>
    %81 = arith.truncf %79 : vector<16x32xf32> to vector<16x32xbf16>
    %cst_28 = arith.constant dense<0.000000e+00> : vector<16x32xf32>
    %82 = tpu.matmul %81, %80, %cst_28 {dimension_numbers = #tpu.dot_dimension_numbers<[1], [0], [0], [1], [0, 0, 1, 1], [], []>} : vector<16x32xbf16>, vector<32x32xbf16>, vector<16x32xf32> -> vector<16x32xf32>
    %c0_29 = arith.constant 0 : index
    %c0_30 = arith.constant 0 : index
    %83 = vector.load %arg5[%c0_29, %c0_30] : memref<1x32xf32, #tpu.memory_space<vmem>>, vector<1x32xf32>
    %84 = vector.broadcast %83 : vector<1x32xf32> to vector<16x32xf32>
    %85 = arith.addf %82, %84 : vector<16x32xf32>
    %86 = arith.addf %1, %85 : vector<16x32xf32>
    %c0_31 = arith.constant 0 : index
    %c0_32 = arith.constant 0 : index
    %87 = vector.load %arg6[%c0_31, %c0_32] : memref<1x32xf32, #tpu.memory_space<vmem>>, vector<1x32xf32>
    %c0_33 = arith.constant 0 : index
    %c0_34 = arith.constant 0 : index
    %88 = vector.load %arg7[%c0_33, %c0_34] : memref<1x32xf32, #tpu.memory_space<vmem>>, vector<1x32xf32>
    %cst_35 = arith.constant dense<0.000000e+00> : vector<16xf32>
    %89 = vector.multi_reduction <add>, %86, %cst_35 [1] : vector<16x32xf32> to vector<16xf32>
    %90 = vector.shape_cast %89 : vector<16xf32> to vector<16x1xf32>
    %cst_36 = arith.constant 3.200000e+01 : f32
    %91 = vector.broadcast %cst_36 : f32 to vector<16x1xf32>
    %92 = arith.divf %90, %91 : vector<16x1xf32>
    %93 = vector.broadcast %92 : vector<16x1xf32> to vector<16x32xf32>
    %94 = arith.subf %86, %93 : vector<16x32xf32>
    %95 = arith.mulf %94, %94 : vector<16x32xf32>
    %cst_37 = arith.constant dense<0.000000e+00> : vector<16xf32>
    %96 = vector.multi_reduction <add>, %95, %cst_37 [1] : vector<16x32xf32> to vector<16xf32>
    %97 = vector.shape_cast %96 : vector<16xf32> to vector<16x1xf32>
    %cst_38 = arith.constant 3.200000e+01 : f32
    %98 = vector.broadcast %cst_38 : f32 to vector<16x1xf32>
    %99 = arith.divf %97, %98 : vector<16x1xf32>
    %cst_39 = arith.constant 9.99999974E-6 : f32
    %100 = vector.broadcast %cst_39 : f32 to vector<16x1xf32>
    %101 = arith.addf %99, %100 : vector<16x1xf32>
    %102 = math.rsqrt %101 : vector<16x1xf32>
    %103 = vector.broadcast %102 : vector<16x1xf32> to vector<16x32xf32>
    %104 = arith.mulf %94, %103 : vector<16x32xf32>
    %105 = vector.broadcast %87 : vector<1x32xf32> to vector<16x32xf32>
    %106 = arith.mulf %104, %105 : vector<16x32xf32>
    %107 = vector.broadcast %88 : vector<1x32xf32> to vector<16x32xf32>
    %108 = arith.addf %106, %107 : vector<16x32xf32>
    %c0_40 = arith.constant 0 : index
    %c0_41 = arith.constant 0 : index
    %109 = vector.load %arg8[%c0_40, %c0_41] : memref<32x64xbf16, #tpu.memory_space<vmem>>, vector<32x64xbf16>
    %110 = arith.truncf %108 : vector<16x32xf32> to vector<16x32xbf16>
    %cst_42 = arith.constant dense<0.000000e+00> : vector<16x64xf32>
    %111 = tpu.matmul %110, %109, %cst_42 {dimension_numbers = #tpu.dot_dimension_numbers<[1], [0], [0], [1], [0, 0, 1, 1], [], []>} : vector<16x32xbf16>, vector<32x64xbf16>, vector<16x64xf32> -> vector<16x64xf32>
    %c0_43 = arith.constant 0 : index
    %c0_44 = arith.constant 0 : index
    %112 = vector.load %arg9[%c0_43, %c0_44] : memref<1x64xf32, #tpu.memory_space<vmem>>, vector<1x64xf32>
    %113 = vector.broadcast %112 : vector<1x64xf32> to vector<16x64xf32>
    %114 = arith.addf %111, %113 : vector<16x64xf32>
    %115 = arith.mulf %114, %114 : vector<16x64xf32>
    %116 = arith.mulf %114, %115 : vector<16x64xf32>
    %cst_45 = arith.constant 4.471500e-02 : f32
    %117 = vector.broadcast %cst_45 : f32 to vector<16x64xf32>
    %118 = arith.mulf %117, %116 : vector<16x64xf32>
    %119 = arith.addf %114, %118 : vector<16x64xf32>
    %cst_46 = arith.constant 0.797884583 : f32
    %120 = vector.broadcast %cst_46 : f32 to vector<16x64xf32>
    %121 = arith.mulf %120, %119 : vector<16x64xf32>
    %122 = math.tanh %121 : vector<16x64xf32>
    %cst_47 = arith.constant 1.000000e+00 : f32
    %123 = vector.broadcast %cst_47 : f32 to vector<16x64xf32>
    %124 = arith.addf %123, %122 : vector<16x64xf32>
    %cst_48 = arith.constant 5.000000e-01 : f32
    %125 = vector.broadcast %cst_48 : f32 to vector<16x64xf32>
    %126 = arith.mulf %125, %124 : vector<16x64xf32>
    %127 = arith.mulf %114, %126 : vector<16x64xf32>
    %c0_49 = arith.constant 0 : index
    %c0_50 = arith.constant 0 : index
    %128 = vector.load %arg10[%c0_49, %c0_50] : memref<64x32xbf16, #tpu.memory_space<vmem>>, vector<64x32xbf16>
    %129 = arith.truncf %127 : vector<16x64xf32> to vector<16x64xbf16>
    %cst_51 = arith.constant dense<0.000000e+00> : vector<16x32xf32>
    %130 = tpu.matmul %129, %128, %cst_51 {dimension_numbers = #tpu.dot_dimension_numbers<[1], [0], [0], [1], [0, 0, 1, 1], [], []>} : vector<16x64xbf16>, vector<64x32xbf16>, vector<16x32xf32> -> vector<16x32xf32>
    %c0_52 = arith.constant 0 : index
    %c0_53 = arith.constant 0 : index
    %131 = vector.load %arg11[%c0_52, %c0_53] : memref<1x32xf32, #tpu.memory_space<vmem>>, vector<1x32xf32>
    %132 = vector.broadcast %131 : vector<1x32xf32> to vector<16x32xf32>
    %133 = arith.addf %130, %132 : vector<16x32xf32>
    %134 = arith.addf %108, %133 : vector<16x32xf32>
    %c0_54 = arith.constant 0 : index
    %c0_55 = arith.constant 0 : index
    %135 = vector.load %arg12[%c0_54, %c0_55] : memref<1x32xf32, #tpu.memory_space<vmem>>, vector<1x32xf32>
    %c0_56 = arith.constant 0 : index
    %c0_57 = arith.constant 0 : index
    %136 = vector.load %arg13[%c0_56, %c0_57] : memref<1x32xf32, #tpu.memory_space<vmem>>, vector<1x32xf32>
    %cst_58 = arith.constant dense<0.000000e+00> : vector<16xf32>
    %137 = vector.multi_reduction <add>, %134, %cst_58 [1] : vector<16x32xf32> to vector<16xf32>
    %138 = vector.shape_cast %137 : vector<16xf32> to vector<16x1xf32>
    %cst_59 = arith.constant 3.200000e+01 : f32
    %139 = vector.broadcast %cst_59 : f32 to vector<16x1xf32>
    %140 = arith.divf %138, %139 : vector<16x1xf32>
    %141 = vector.broadcast %140 : vector<16x1xf32> to vector<16x32xf32>
    %142 = arith.subf %134, %141 : vector<16x32xf32>
    %143 = arith.mulf %142, %142 : vector<16x32xf32>
    %cst_60 = arith.constant dense<0.000000e+00> : vector<16xf32>
    %144 = vector.multi_reduction <add>, %143, %cst_60 [1] : vector<16x32xf32> to vector<16xf32>
    %145 = vector.shape_cast %144 : vector<16xf32> to vector<16x1xf32>
    %cst_61 = arith.constant 3.200000e+01 : f32
    %146 = vector.broadcast %cst_61 : f32 to vector<16x1xf32>
    %147 = arith.divf %145, %146 : vector<16x1xf32>
    %cst_62 = arith.constant 9.99999974E-6 : f32
    %148 = vector.broadcast %cst_62 : f32 to vector<16x1xf32>
    %149 = arith.addf %147, %148 : vector<16x1xf32>
    %150 = math.rsqrt %149 : vector<16x1xf32>
    %151 = vector.broadcast %150 : vector<16x1xf32> to vector<16x32xf32>
    %152 = arith.mulf %142, %151 : vector<16x32xf32>
    %153 = vector.broadcast %135 : vector<1x32xf32> to vector<16x32xf32>
    %154 = arith.mulf %152, %153 : vector<16x32xf32>
    %155 = vector.broadcast %136 : vector<1x32xf32> to vector<16x32xf32>
    %156 = arith.addf %154, %155 : vector<16x32xf32>
    %c0_63 = arith.constant 0 : index
    %c0_64 = arith.constant 0 : index
    %c0_65 = arith.constant 0 : index
    %157 = vector.load %arg14[%c0_63, %c0_64, %c0_65] : memref<1x16x32xf32, #tpu.memory_space<vmem>>, vector<1x16x32xf32>
    %158 = vector.shape_cast %157 : vector<1x16x32xf32> to vector<16x32xf32>
    %159 = vector.shape_cast %156 : vector<16x32xf32> to vector<1x16x32xf32>
    tpu.vector_store %arg14[%c0_63, %c0_64, %c0_65], %159 {strides = array<i32>} : memref<1x16x32xf32, #tpu.memory_space<vmem>>, vector<1x16x32xf32>,
    return
  }
  func.func @transform_0(%arg0: i32) -> (i32, i32, i32) {
    %c0_i32 = arith.constant 0 : i32
    %c0_i32_0 = arith.constant 0 : i32
    %c0_i32_1 = arith.constant 0 : i32
    return %arg0, %c0_i32, %c0_i32_0 : i32, i32, i32
  }
  func.func @transform_1(%arg0: i32) -> (i32, i32) {
    %c0_i32 = arith.constant 0 : i32
    %c0_i32_0 = arith.constant 0 : i32
    %c0_i32_1 = arith.constant 0 : i32
    return %c0_i32, %c0_i32_0 : i32, i32
  }
  func.func @transform_2(%arg0: i32) -> (i32, i32) {
    %c0_i32 = arith.constant 0 : i32
    %c0_i32_0 = arith.constant 0 : i32
    %c0_i32_1 = arith.constant 0 : i32
    return %c0_i32, %c0_i32_0 : i32, i32
  }
  func.func @transform_3(%arg0: i32) -> (i32, i32) {
    %c0_i32 = arith.constant 0 : i32
    %c0_i32_0 = arith.constant 0 : i32
    %c0_i32_1 = arith.constant 0 : i32
    return %c0_i32, %c0_i32_0 : i32, i32
  }
  func.func @transform_4(%arg0: i32) -> (i32, i32) {
    %c0_i32 = arith.constant 0 : i32
    %c0_i32_0 = arith.constant 0 : i32
    %c0_i32_1 = arith.constant 0 : i32
    return %c0_i32, %c0_i32_0 : i32, i32
  }
  func.func @transform_5(%arg0: i32) -> (i32, i32) {
    %c0_i32 = arith.constant 0 : i32
    %c0_i32_0 = arith.constant 0 : i32
    %c0_i32_1 = arith.constant 0 : i32
    return %c0_i32, %c0_i32_0 : i32, i32
  }
  func.func @transform_6(%arg0: i32) -> (i32, i32) {
    %c0_i32 = arith.constant 0 : i32
    %c0_i32_0 = arith.constant 0 : i32
    %c0_i32_1 = arith.constant 0 : i32
    return %c0_i32, %c0_i32_0 : i32, i32
  }
  func.func @transform_7(%arg0: i32) -> (i32, i32) {
    %c0_i32 = arith.constant 0 : i32
    %c0_i32_0 = arith.constant 0 : i32
    %c0_i32_1 = arith.constant 0 : i32
    return %c0_i32, %c0_i32_0 : i32, i32
  }
  func.func @transform_8(%arg0: i32) -> (i32, i32) {
    %c0_i32 = arith.constant 0 : i32
    %c0_i32_0 = arith.constant 0 : i32
    %c0_i32_1 = arith.constant 0 : i32
    return %c0_i32, %c0_i32_0 : i32, i32
  }
  func.func @transform_9(%arg0: i32) -> (i32, i32) {
    %c0_i32 = arith.constant 0 : i32
    %c0_i32_0 = arith.constant 0 : i32
    %c0_i32_1 = arith.constant 0 : i32
    return %c0_i32, %c0_i32_0 : i32, i32
  }
  func.func @transform_10(%arg0: i32) -> (i32, i32) {
    %c0_i32 = arith.constant 0 : i32
    %c0_i32_0 = arith.constant 0 : i32
    %c0_i32_1 = arith.constant 0 : i32
    return %c0_i32, %c0_i32_0 : i32, i32
  }
  func.func @transform_11(%arg0: i32) -> (i32, i32) {
    %c0_i32 = arith.constant 0 : i32
    %c0_i32_0 = arith.constant 0 : i32
    %c0_i32_1 = arith.constant 0 : i32
    return %c0_i32, %c0_i32_0 : i32, i32
  }
  func.func @transform_12(%arg0: i32) -> (i32, i32) {
    %c0_i32 = arith.constant 0 : i32
    %c0_i32_0 = arith.constant 0 : i32
    %c0_i32_1 = arith.constant 0 : i32
    return %c0_i32, %c0_i32_0 : i32, i32
  }
  func.func @transform_13(%arg0: i32) -> (i32, i32, i32) {
    %c0_i32 = arith.constant 0 : i32
    %c0_i32_0 = arith.constant 0 : i32
    %c0_i32_1 = arith.constant 0 : i32
    return %arg0, %c0_i32, %c0_i32_0 : i32, i32, i32
  }
}

</mosaic_0001>

<llo_original>
// kernel: aves_forward.8
$region0: #{aves_forward.8}
  #allocation0 [shape = 'u32[]', space=smem, size = 0x4, offset = 0x4, fixed_abs, tag = 'smem constant byte address 0x4 - core index']
  #allocation1 [shape = 'u32[144,128]{1,0:T(1,128)}', space=vmem, size = 0x12000, scoped, tag = 'internal scratch']
  %s0 = inlined_call_operand.vmem [shape: f32[2,34,64], index: 0, kind: input, shape index: {}]
  %s1 = inlined_call_operand.vmem [shape: f32[2,64,32], index: 1, kind: input, shape index: {}]
  %s2 = inlined_call_operand.vmem [shape: f32[2,33,32], index: 2, kind: output, shape index: {}]
  %s3 = sld [smem:[#allocation0]]
  $region41: #{aves_forward.8} parent=0
    _
  %s5 = ssub.s32 1, %s3
  %s6 = scalar_select 0, %s5, %s3
  loop: start=0, step=1, limit=4
  $region2: #{aves_forward.8} parent=0 // loop_pre_header
    _
  $region3: #{aves_forward.8} parent=0 // loop_header
    %s8 = sphi 0, %s12
    %p9 = scmp.ge.s32.totalorder %s8, 4
    %s18 = sphi 0, %s20
    %s21 = sphi 0, %s18
    %s22 = sphi 0, %s21
    %s38 = sphi 0, %s22
    %s42 = sphi 0, %s42
    %s44 = sphi 0, %s42
    %s45 = sphi 0, %s44
    %s59 = sphi 0, %s45
    %s65 = sphi 0, %s67
    %s68 = sphi 0, %s65
    %s69 = sphi 0, %s68
    %s85 = sphi 0, %s69
  $region4: #{aves_forward.8} parent=0 // loop_header_branch
    %11 = sbr.rel (%p9) target = $region8
  $region5: #{aves_forward.8} parent=0 // loop_body
    %s13 = ssub.s32 %s8, 1
    %s14 = ssub.s32 %s8, 2
    %s15 = sadd.s32 %s8, 1
    %s16 = ssub.s32 %s8, %s15
    %p17 = scmp.eq.s32.totalorder %s16, 0
    %s19 = sadd.s32 %s18, 1
    %s20 = scalar_select %p17, %s18, %s19
    %p23 = pneg %p17
    %p24 = scmp.eq.s32.totalorder %s8, 1
    %p25 = por %p23, %p24
    %p26 = scmp.ne.s32.totalorder %s18, %s21
    %p27 = scmp.eq.s32.totalorder %s8, 0
    %p28 = por %p26, %p27
    %p29 = scmp.ne.s32.totalorder %s18, %s21
    %p30 = scmp.eq.s32.totalorder %s13, 1
    %p31 = por %p29, %p30
    %p32 = scmp.ne.s32.totalorder %s21, %s22
    %p33 = scmp.eq.s32.totalorder %s13, 0
    %p34 = por %p32, %p33
    %p35 = scmp.ne.s32.totalorder %s21, %s22
    %p36 = scmp.eq.s32.totalorder %s14, 1
    %p37 = por %p35, %p36
    %p39 = scmp.ne.s32.totalorder %s22, %s38
    %p40 = scmp.eq.s32.totalorder %s14, 0
    %p41 = por %p39, %p40
    %s43 = sadd.s32 %s42, 1
    %p46 = scmp.eq.s32.totalorder %s8, 1
    %p47 = scmp.ne.s32.totalorder %s42, %s44
    %p48 = scmp.eq.s32.totalorder %s8, 0
    %p49 = por %p47, %p48
    %p50 = scmp.ne.s32.totalorder %s42, %s44
    %p51 = scmp.eq.s32.totalorder %s13, 1
    %p52 = por %p50, %p51
    %p53 = scmp.ne.s32.totalorder %s44, %s45
    %p54 = scmp.eq.s32.totalorder %s13, 0
    %p55 = por %p53, %p54
    %p56 = scmp.ne.s32.totalorder %s44, %s45
    %p57 = scmp.eq.s32.totalorder %s14, 1
    %p58 = por %p56, %p57
    %p60 = scmp.ne.s32.totalorder %s45, %s59
    %p61 = scmp.eq.s32.totalorder %s14, 0
    %p62 = por %p60, %p61
    %s63 = ssub.s32 %s8, %s15
    %p64 = scmp.eq.s32.totalorder %s63, 0
    %s66 = sadd.s32 %s65, 1
    %s67 = scalar_select %p64, %s65, %s66
    %p70 = pneg %p64
    %p71 = scmp.eq.s32.totalorder %s8, 1
    %p72 = por %p70, %p71
    %p73 = scmp.ne.s32.totalorder %s65, %s68
    %p74 = scmp.eq.s32.totalorder %s8, 0
    %p75 = por %p73, %p74
    %p76 = scmp.ne.s32.totalorder %s65, %s68
    %p77 = scmp.eq.s32.totalorder %s13, 1
    %p78 = por %p76, %p77
    %p79 = scmp.ne.s32.totalorder %s68, %s69
    %p80 = scmp.eq.s32.totalorder %s13, 0
    %p81 = por %p79, %p80
    %p82 = scmp.ne.s32.totalorder %s68, %s69
    %p83 = scmp.eq.s32.totalorder %s14, 1
    %p84 = por %p82, %p83
    %p86 = scmp.ne.s32.totalorder %s69, %s85
    %p87 = scmp.eq.s32.totalorder %s14, 0
    %p88 = por %p86, %p87
    %p89 = scmp.le.s32.totalorder 1, %s8
    %p90 = scmp.lt.s32.totalorder %s8, 3
    %p91 = pnand %p89, %p90
    %p92 = pneg %p91
    // Predicated region
    $region9: #{aves_forward.8} parent=5 // pred_check
      _
    $region10: #{aves_forward.8} parent=5 // pred_check_branch
      %94 = sbr.rel (%p91) target = $region12
    $region11: #{aves_forward.8} parent=5 // pred_region
      %s95 = ssub.s32 %s8, 1
      // Predicated region
      $region13: #{aves_forward.8} parent=11 // pred_check
        %p96 = pneg %p55
      $region14: #{aves_forward.8} parent=11 // pred_check_branch
        %98 = sbr.rel (%p96) target = $region16
      $region15: #{aves_forward.8} parent=11 // pred_region
        _
      $region16: #{aves_forward.8} parent=11 // pred_fallthru
        _
    $region12: #{aves_forward.8} parent=5 // pred_fallthru
      _
    %p99 = scmp.lt.s32.totalorder %s8, 2
    // Predicated region
    $region17: #{aves_forward.8} parent=5 // pred_check
      %p100 = pneg %p99
    $region18: #{aves_forward.8} parent=5 // pred_check_branch
      %102 = sbr.rel (%p100) target = $region20
    $region19: #{aves_forward.8} parent=5 // pred_region
      // Predicated region
      $region21: #{aves_forward.8} parent=19 // pred_check
        %p103 = pneg %p28
      $region22: #{aves_forward.8} parent=19 // pred_check_branch
        %105 = sbr.rel (%p103) target = $region24
      $region23: #{aves_forward.8} parent=19 // pred_region
        %p106 = scmp.lt.s32.totalorder %s8, 1
        %s107 = scalar_select %p106, %s8, 1
        %s108 = smul.addr %s107, 5
        %s109 = smul.addr %s108, 8
        %s110 = scalar_lea.vmem %s0, %s109
      $region24: #{aves_forward.8} parent=19 // pred_fallthru
        _
    $region20: #{aves_forward.8} parent=5 // pred_fallthru
      _
    %p111 = scmp.le.s32.totalorder 1, %s8
    %p112 = scmp.lt.s32.totalorder %s8, 3
    %p113 = pnand %p111, %p112
    %p114 = pneg %p113
    // Predicated region
    $region25: #{aves_forward.8} parent=5 // pred_check
      _
    $region26: #{aves_forward.8} parent=5 // pred_check_branch
      %116 = sbr.rel (%p113) target = $region28
    $region27: #{aves_forward.8} parent=5 // pred_region
      %s117 = ssub.s32 %s8, 1
      %p118 = scmp.lt.s32.totalorder %s13, 1
      %s119 = scalar_select %p118, %s13, 1
      %s120 = smul.addr %s119, 5
      %s121 = smul.addr %s120, 8
      %s122 = scalar_lea.vmem %s0, %s121
      %p123 = pneg %p34
      %p124 = pneg %p31
      %p125 = pneg %p55
      %p126 = pneg %p52
      %p127 = pneg %p81
      %p128 = pneg %p78
      %p129 = scmp.lt.s32.totalorder %s13, 1
      %s130 = scalar_select %p129, %s13, 1
      %s131 = smul.addr %s130, 5
      %s132 = smul.addr %s131, 8
      %s133 = scalar_lea.vmem %s2, %s132
      %p134 = scmp.lt.s32.totalorder %s13, 1
      %s135 = scalar_select %p134, %s13, 1
      %s136 = smul.addr %s135, 5
      %s137 = smul.addr %s136, 8
      %s138 = scalar_lea.vmem %s0, %s137
      %p139 = scmp.lt.s32.totalorder %s13, 1
      %s140 = scalar_select %p139, %s13, 1
      %s141 = smul.addr %s140, 5
      %s142 = smul.addr %s141, 8
      %s143 = scalar_lea.vmem %s2, %s142
      %v144 = vld [vmem:[%s138] sm:$0xff]
      %v145 = vld [vmem:[%s138 + $0x8] sm:$0xff]
      %v146 = vld [vmem:[%s138 + $0x10] sm:$0xff]
      %v147 = vld [vmem:[%s138 + $0x18] sm:$0xff]
      %v148 = vld [vmem:[%s138 + $0x20] sm:$0x1]
      %v149 = vld [vmem:[%s1] sm:$0xff]
      %v150 = vld [vmem:[%s1 + $0x8] sm:$0xff]
      %v151 = vld [vmem:[%s1 + $0x10] sm:$0xff]
      %v152 = vld [vmem:[%s1 + $0x18] sm:$0xff]
      %v153 = vld [vmem:[%s1 + $0x20] sm:$0xff]
      %v154 = vld [vmem:[%s1 + $0x28] sm:$0xff]
      %v155 = vld [vmem:[%s1 + $0x30] sm:$0xff]
      %v156 = vld [vmem:[%s1 + $0x38] sm:$0xff]
      %v157 = vld [vmem:[%s138 + $0x1] sm:$0xff]
      %v158 = vld [vmem:[%s138 + $0x9] sm:$0xff]
      %v159 = vld [vmem:[%s138 + $0x11] sm:$0xff]
      %v160 = vld [vmem:[%s138 + $0x19] sm:$0xff]
      %v161 = vld [vmem:[%s138 + $0x21] sm:$0x1]
      %s162 = scalar_lea.vmem %s1, 64
      %v163 = vld [vmem:[%s162] sm:$0xff]
      %v164 = vld [vmem:[%s162 + $0x8] sm:$0xff]
      %v165 = vld [vmem:[%s162 + $0x10] sm:$0xff]
      %v166 = vld [vmem:[%s162 + $0x18] sm:$0xff]
      %v167 = vld [vmem:[%s162 + $0x20] sm:$0xff]
      %v168 = vld [vmem:[%s162 + $0x28] sm:$0xff]
      %v169 = vld [vmem:[%s162 + $0x30] sm:$0xff]
      %v170 = vld [vmem:[%s162 + $0x38] sm:$0xff]
      %vm171 = vcmask 523264
      %v173 = vsel %vm171, %v157, 0
      %v176 = vsel %vm171, %v158, 0
      %v179 = vsel %vm171, %v159, 0
      %v182 = vsel %vm171, %v160, 0
      %v185 = vsel %vm171, %v161, 0
      %187 = vmatprep.subr.mxu0 0.0
      %188 = vmatpush1.msra.mxu0 0.0
      %189 = vmatprep.subr.mxu0 0.0
      %190 = vmatpush1.msra.mxu0 0.0
      %191 = vmatprep.subr.mxu0 0.0
      %192 = vmatpush1.msra.mxu0 0.0
      %193 = vmatprep.subr.mxu0 0.0
      %194 = vmatpush1.msra.mxu0 0.0
      %195 = vmatprep.subr.mxu0 0.0
      %196 = vmatpush1.msra.mxu0 0.0
      %197 = vmatprep.subr.mxu0 0.0
      %198 = vmatpush1.msra.mxu0 0.0
      %199 = vmatprep.subr.mxu0 0.0
      %200 = vmatpush1.msra.mxu0 0.0
      %201 = vmatprep.subr.mxu0 0.0
      %202 = vmatpush1.msra.mxu0 0.0
      %203 = vmatprep.subr.mxu0 0.0
      %204 = vmatpush1.msra.mxu0 %v170
      %205 = vmatprep.subr.mxu0 0.0
      %206 = vmatpush1.msra.mxu0 %v169
      %207 = vmatprep.subr.mxu0 0.0
      %208 = vmatpush1.msra.mxu0 %v168
      %209 = vmatprep.subr.mxu0 0.0
      %210 = vmatpush1.msra.mxu0 %v167
      %211 = vmatprep.subr.mxu0 0.0
      %212 = vmatpush1.msra.mxu0 %v166
      %213 = vmatprep.subr.mxu0 0.0
      %214 = vmatpush1.msra.mxu0 %v165
      %215 = vmatprep.subr.mxu0 0.0
      %216 = vmatpush1.msra.mxu0 %v164
      %217 = vmatprep.subr.mxu0 0.0
      %218 = vmatpush1.msra.mxu0 %v163
      %219 = vmatprep.subr.mxu0 0.0
      %220 = vmatpush2.msra.mxu0 0.0
      %221 = vmatprep.subr.mxu0 0.0
      %222 = vmatpush2.msra.mxu0 0.0
      %223 = vmatprep.subr.mxu0 0.0
      %224 = vmatpush2.msra.mxu0 0.0
      %225 = vmatprep.subr.mxu0 0.0
      %226 = vmatpush2.msra.mxu0 0.0
      %227 = vmatprep.subr.mxu0 0.0
      %228 = vmatpush2.msra.mxu0 0.0
      %229 = vmatprep.subr.mxu0 0.0
      %230 = vmatpush2.msra.mxu0 0.0
      %231 = vmatprep.subr.mxu0 0.0
      %232 = vmatpush2.msra.mxu0 0.0
      %233 = vmatprep.subr.mxu0 0.0
      %234 = vmatpush2.msra.mxu0 0.0
      %235 = vmatprep.subr.mxu0 0.0
      %236 = vmatpush2.msra.mxu0 0.0
      %237 = vmatprep.subr.mxu0 0.0
      %238 = vmatpush2.msra.mxu0 0.0
      %239 = vmatprep.subr.mxu0 0.0
      %240 = vmatpush2.msra.mxu0 0.0
      %241 = vmatprep.subr.mxu0 0.0
      %242 = vmatpush2.msra.mxu0 0.0
      %243 = vmatprep.subr.mxu0 0.0
      %244 = vmatpush2.msra.mxu0 0.0
      %245 = vmatprep.subr.mxu0 0.0
      %246 = vmatpush2.msra.mxu0 0.0
      %247 = vmatprep.subr.mxu0 0.0
      %248 = vmatpush2.msra.mxu0 0.0
      %249 = vmatprep.subr.mxu0 0.0
      %250 = vmatpush2.msra.mxu0 0.0
      %251 = vmatprep.mubr.f32.mxu0 0.0
      %252 = vmatmul.mubr.f32.gmra.mxu0 %v173
      %v253 = vpop.f32.mrf.mxu0
      %v254 = vadd.f32 0.0, %v253
      %v255 = vpop.f32.mrf.mxu0
      %256 = vmatprep.mubr.f32.mxu0 0.0
      %257 = vmatmul.mubr.f32.gmra.mxu0 %v176
      %v258 = vpop.f32.mrf.mxu0
      %v259 = vadd.f32 0.0, %v258
      %v260 = vpop.f32.mrf.mxu0
      %261 = vmatprep.mubr.f32.mxu0 0.0
      %262 = vmatmul.mubr.f32.gmra.mxu0 %v179
      %v263 = vpop.f32.mrf.mxu0
      %v264 = vadd.f32 0.0, %v263
      %v265 = vpop.f32.mrf.mxu0
      %266 = vmatprep.mubr.f32.mxu0 0.0
      %267 = vmatmul.mubr.f32.gmra.mxu0 %v182
      %v268 = vpop.f32.mrf.mxu0
      %v269 = vadd.f32 0.0, %v268
      %v270 = vpop.f32.mrf.mxu0
      %271 = vmatprep.mubr.f32.mxu0 0.0
      %272 = vmatmul.mubr.f32.gmra.mxu0 %v185
      %v273 = vpop.f32.mrf.mxu0
      %v274 = vadd.f32 0.0, %v273
      %v275 = vpop.f32.mrf.mxu0
      %276 = vdwg.mxu0
      %v278 = vsel %vm171, %v144, 0
      %v281 = vsel %vm171, %v145, 0
      %v284 = vsel %vm171, %v146, 0
      %v287 = vsel %vm171, %v147, 0
      %v290 = vsel %vm171, %v148, 0
      %292 = vmatprep.subr.mxu0 0.0
      %293 = vmatpush1.msra.mxu0 0.0
      %294 = vmatprep.subr.mxu0 0.0
      %295 = vmatpush1.msra.mxu0 0.0
      %296 = vmatprep.subr.mxu0 0.0
      %297 = vmatpush1.msra.mxu0 0.0
      %298 = vmatprep.subr.mxu0 0.0
      %299 = vmatpush1.msra.mxu0 0.0
      %300 = vmatprep.subr.mxu0 0.0
      %301 = vmatpush1.msra.mxu0 0.0
      %302 = vmatprep.subr.mxu0 0.0
      %303 = vmatpush1.msra.mxu0 0.0
      %304 = vmatprep.subr.mxu0 0.0
      %305 = vmatpush1.msra.mxu0 0.0
      %306 = vmatprep.subr.mxu0 0.0
      %307 = vmatpush1.msra.mxu0 0.0
      %308 = vmatprep.subr.mxu0 0.0
      %309 = vmatpush1.msra.mxu0 %v156
      %310 = vmatprep.subr.mxu0 0.0
      %311 = vmatpush1.msra.mxu0 %v155
      %312 = vmatprep.subr.mxu0 0.0
      %313 = vmatpush1.msra.mxu0 %v154
      %314 = vmatprep.subr.mxu0 0.0
      %315 = vmatpush1.msra.mxu0 %v153
      %316 = vmatprep.subr.mxu0 0.0
      %317 = vmatpush1.msra.mxu0 %v152
      %318 = vmatprep.subr.mxu0 0.0
      %319 = vmatpush1.msra.mxu0 %v151
      %320 = vmatprep.subr.mxu0 0.0
      %321 = vmatpush1.msra.mxu0 %v150
      %322 = vmatprep.subr.mxu0 0.0
      %323 = vmatpush1.msra.mxu0 %v149
      %324 = vmatprep.subr.mxu0 0.0
      %325 = vmatpush2.msra.mxu0 0.0
      %326 = vmatprep.subr.mxu0 0.0
      %327 = vmatpush2.msra.mxu0 0.0
      %328 = vmatprep.subr.mxu0 0.0
      %329 = vmatpush2.msra.mxu0 0.0
      %330 = vmatprep.subr.mxu0 0.0
      %331 = vmatpush2.msra.mxu0 0.0
      %332 = vmatprep.subr.mxu0 0.0
      %333 = vmatpush2.msra.mxu0 0.0
      %334 = vmatprep.subr.mxu0 0.0
      %335 = vmatpush2.msra.mxu0 0.0
      %336 = vmatprep.subr.mxu0 0.0
      %337 = vmatpush2.msra.mxu0 0.0
      %338 = vmatprep.subr.mxu0 0.0
      %339 = vmatpush2.msra.mxu0 0.0
      %340 = vmatprep.subr.mxu0 0.0
      %341 = vmatpush2.msra.mxu0 0.0
      %342 = vmatprep.subr.mxu0 0.0
      %343 = vmatpush2.msra.mxu0 0.0
      %344 = vmatprep.subr.mxu0 0.0
      %345 = vmatpush2.msra.mxu0 0.0
      %346 = vmatprep.subr.mxu0 0.0
      %347 = vmatpush2.msra.mxu0 0.0
      %348 = vmatprep.subr.mxu0 0.0
      %349 = vmatpush2.msra.mxu0 0.0
      %350 = vmatprep.subr.mxu0 0.0
      %351 = vmatpush2.msra.mxu0 0.0
      %352 = vmatprep.subr.mxu0 0.0
      %353 = vmatpush2.msra.mxu0 0.0
      %354 = vmatprep.subr.mxu0 0.0
      %355 = vmatpush2.msra.mxu0 0.0
      %356 = vmatprep.mubr.f32.mxu0 0.0
      %357 = vmatmul.mubr.f32.gmra.mxu0 %v278
      %v358 = vpop.f32.mrf.mxu0
      %v359 = vadd.f32 %v254, %v358
      %v360 = vpop.f32.mrf.mxu0
      %361 = vmatprep.mubr.f32.mxu0 0.0
      %362 = vmatmul.mubr.f32.gmra.mxu0 %v281
      %v363 = vpop.f32.mrf.mxu0
      %v364 = vadd.f32 %v259, %v363
      %v365 = vpop.f32.mrf.mxu0
      %366 = vmatprep.mubr.f32.mxu0 0.0
      %367 = vmatmul.mubr.f32.gmra.mxu0 %v284
      %v368 = vpop.f32.mrf.mxu0
      %v369 = vadd.f32 %v264, %v368
      %v370 = vpop.f32.mrf.mxu0
      %371 = vmatprep.mubr.f32.mxu0 0.0
      %372 = vmatmul.mubr.f32.gmra.mxu0 %v287
      %v373 = vpop.f32.mrf.mxu0
      %v374 = vadd.f32 %v269, %v373
      %v375 = vpop.f32.mrf.mxu0
      %376 = vmatprep.mubr.f32.mxu0 0.0
      %377 = vmatmul.mubr.f32.gmra.mxu0 %v290
      %v378 = vpop.f32.mrf.mxu0
      %v379 = vadd.f32 %v274, %v378
      %v380 = vpop.f32.mrf.mxu0
      %381 = vdwg.mxu0
      %v382 = vmul.f32 %v359, %v359
      %v383 = vmul.f32 %v364, %v364
      %v384 = vmul.f32 %v369, %v369
      %v385 = vmul.f32 %v374, %v374
      %v386 = vmul.f32 %v379, %v379
      %v387 = vmul.f32 %v359, %v382
      %v388 = vmul.f32 %v364, %v383
      %v389 = vmul.f32 %v369, %v384
      %v390 = vmul.f32 %v374, %v385
      %v391 = vmul.f32 %v379, %v386
      %v392 = vmul.f32 %v387, 0.044715
      %v393 = vmul.f32 %v388, 0.044715
      %v394 = vmul.f32 %v389, 0.044715
      %v395 = vmul.f32 %v390, 0.044715
      %v396 = vmul.f32 %v391, 0.044715
      %v397 = vadd.f32 %v359, %v392
      %v398 = vadd.f32 %v364, %v393
      %v399 = vadd.f32 %v369, %v394
      %v400 = vadd.f32 %v374, %v395
      %v401 = vadd.f32 %v379, %v396
      %v402 = vmul.f32 %v397, 0.7978846
      %v403 = vmul.f32 %v398, 0.7978846
      %v404 = vmul.f32 %v399, 0.7978846
      %v405 = vmul.f32 %v400, 0.7978846
      %v406 = vmul.f32 %v401, 0.7978846
      %v407 = vtanh.pop %v402
      %v408 = vtanh.pop %v403
      %v409 = vtanh.pop %v404
      %v410 = vtanh.pop %v405
      %v411 = vtanh.pop %v406
      %v412 = vadd.f32 %v407, 1.0
      %v413 = vadd.f32 %v408, 1.0
      %v414 = vadd.f32 %v409, 1.0
      %v415 = vadd.f32 %v410, 1.0
      %v416 = vadd.f32 %v411, 1.0
      %v417 = vmul.f32 %v412, 0.5
      %v418 = vmul.f32 %v413, 0.5
      %v419 = vmul.f32 %v414, 0.5
      %v420 = vmul.f32 %v415, 0.5
      %v421 = vmul.f32 %v416, 0.5
      %v422 = vmul.f32 %v359, %v417
      %v423 = vmul.f32 %v364, %v418
      %v424 = vmul.f32 %v369, %v419
      %v425 = vmul.f32 %v374, %v420
      %v426 = vmul.f32 %v379, %v421
      %vm427 = vcmask 261120
      %428 = vst.msk [vmem:[%s143] sm:$0xff] %vm427, %v422
      %429 = vst.msk [vmem:[%s143 + $0x8] sm:$0xff] %vm427, %v423
      %430 = vst.msk [vmem:[%s143 + $0x10] sm:$0xff] %vm427, %v424
      %431 = vst.msk [vmem:[%s143 + $0x18] sm:$0xff] %vm427, %v425
      %vm432 = vcmask 253952
      %433 = vst.msk [vmem:[%s143 + $0x20] sm:$0x1] %vm432, %v426
      %p434 = scmp.lt.s32.totalorder %s13, 1
      %s435 = scalar_select %p434, %s13, 1
      %s436 = smul.addr %s435, 5
      %s437 = smul.addr %s436, 8
      %s438 = scalar_lea.vmem %s2, %s437
      // Predicated region
      $region29: #{aves_forward.8} parent=27 // pred_check
        %p439 = pneg %p78
      $region30: #{aves_forward.8} parent=27 // pred_check_branch
        %441 = sbr.rel (%p439) target = $region32
      $region31: #{aves_forward.8} parent=27 // pred_region
        _
      $region32: #{aves_forward.8} parent=27 // pred_fallthru
        _
    $region28: #{aves_forward.8} parent=5 // pred_fallthru
      _
    %p442 = scmp.le.s32.totalorder 2, %s8
    // Predicated region
    $region33: #{aves_forward.8} parent=5 // pred_check
      %p443 = pneg %p442
    $region34: #{aves_forward.8} parent=5 // pred_check_branch
      %445 = sbr.rel (%p443) target = $region36
    $region35: #{aves_forward.8} parent=5 // pred_region
      %s446 = ssub.s32 %s8, 2
      // Predicated region
      $region37: #{aves_forward.8} parent=35 // pred_check
        %p447 = pneg %p84
      $region38: #{aves_forward.8} parent=35 // pred_check_branch
        %449 = sbr.rel (%p447) target = $region40
      $region39: #{aves_forward.8} parent=35 // pred_region
        %p450 = scmp.lt.s32.totalorder %s14, 1
        %s451 = scalar_select %p450, %s14, 1
        %s452 = smul.addr %s451, 5
        %s453 = smul.addr %s452, 8
        %s454 = scalar_lea.vmem %s2, %s453
      $region40: #{aves_forward.8} parent=35 // pred_fallthru
        _
    $region36: #{aves_forward.8} parent=5 // pred_fallthru
      _
  $region6: #{aves_forward.8} parent=0 // loop_footer
    %s12 = sadd.s32 1, %s8
  $region7: #{aves_forward.8} parent=0 // loop_footer_branch
    %7 = sbr.rel target = $region3
  $region8: #{aves_forward.8} parent=0 // loop_exit
    _

// kernel: aves_forward.7
$region0: #{aves_forward.7}
  #allocation0 [shape = 'u32[]', space=smem, size = 0x4, offset = 0x4, fixed_abs, tag = 'smem constant byte address 0x4 - core index']
  #allocation1 [shape = 'u32[144,128]{1,0:T(1,128)}', space=vmem, size = 0x12000, scoped, tag = 'internal scratch']
  %s0 = inlined_call_operand.vmem [shape: f32[2,68,5], index: 0, kind: input, shape index: {}]
  %s1 = inlined_call_operand.vmem [shape: f32[2,5,32], index: 1, kind: input, shape index: {}]
  %s2 = inlined_call_operand.vmem [shape: f32[1,32], index: 2, kind: input, shape index: {}]
  %s3 = inlined_call_operand.vmem [shape: f32[1,32], index: 3, kind: input, shape index: {}]
  %s4 = inlined_call_operand.vmem [shape: f32[2,67,32], index: 4, kind: output, shape index: {}]
  %s5 = sld [smem:[#allocation0]]
  $region49: #{aves_forward.7} parent=0
    _
  %s7 = ssub.s32 1, %s5
  %s8 = scalar_select 0, %s7, %s5
  loop: start=0, step=1, limit=4
  $region2: #{aves_forward.7} parent=0 // loop_pre_header
    _
  $region3: #{aves_forward.7} parent=0 // loop_header
    %s10 = sphi 0, %s14
    %p11 = scmp.ge.s32.totalorder %s10, 4
    %s20 = sphi 0, %s22
    %s23 = sphi 0, %s20
    %s24 = sphi 0, %s23
    %s40 = sphi 0, %s24
    %s44 = sphi 0, %s44
    %s46 = sphi 0, %s44
    %s47 = sphi 0, %s46
    %s61 = sphi 0, %s47
    %s65 = sphi 0, %s65
    %s67 = sphi 0, %s65
    %s68 = sphi 0, %s67
    %s82 = sphi 0, %s68
    %s86 = sphi 0, %s86
    %s88 = sphi 0, %s86
    %s89 = sphi 0, %s88
    %s103 = sphi 0, %s89
    %s109 = sphi 0, %s111
    %s112 = sphi 0, %s109
    %s113 = sphi 0, %s112
    %s129 = sphi 0, %s113
  $region4: #{aves_forward.7} parent=0 // loop_header_branch
    %13 = sbr.rel (%p11) target = $region8
  $region5: #{aves_forward.7} parent=0 // loop_body
    %s15 = ssub.s32 %s10, 1
    %s16 = ssub.s32 %s10, 2
    %s17 = sadd.s32 %s10, 1
    %s18 = ssub.s32 %s10, %s17
    %p19 = scmp.eq.s32.totalorder %s18, 0
    %s21 = sadd.s32 %s20, 1
    %s22 = scalar_select %p19, %s20, %s21
    %p25 = pneg %p19
    %p26 = scmp.eq.s32.totalorder %s10, 1
    %p27 = por %p25, %p26
    %p28 = scmp.ne.s32.totalorder %s20, %s23
    %p29 = scmp.eq.s32.totalorder %s10, 0
    %p30 = por %p28, %p29
    %p31 = scmp.ne.s32.totalorder %s20, %s23
    %p32 = scmp.eq.s32.totalorder %s15, 1
    %p33 = por %p31, %p32
    %p34 = scmp.ne.s32.totalorder %s23, %s24
    %p35 = scmp.eq.s32.totalorder %s15, 0
    %p36 = por %p34, %p35
    %p37 = scmp.ne.s32.totalorder %s23, %s24
    %p38 = scmp.eq.s32.totalorder %s16, 1
    %p39 = por %p37, %p38
    %p41 = scmp.ne.s32.totalorder %s24, %s40
    %p42 = scmp.eq.s32.totalorder %s16, 0
    %p43 = por %p41, %p42
    %s45 = sadd.s32 %s44, 1
    %p48 = scmp.eq.s32.totalorder %s10, 1
    %p49 = scmp.ne.s32.totalorder %s44, %s46
    %p50 = scmp.eq.s32.totalorder %s10, 0
    %p51 = por %p49, %p50
    %p52 = scmp.ne.s32.totalorder %s44, %s46
    %p53 = scmp.eq.s32.totalorder %s15, 1
    %p54 = por %p52, %p53
    %p55 = scmp.ne.s32.totalorder %s46, %s47
    %p56 = scmp.eq.s32.totalorder %s15, 0
    %p57 = por %p55, %p56
    %p58 = scmp.ne.s32.totalorder %s46, %s47
    %p59 = scmp.eq.s32.totalorder %s16, 1
    %p60 = por %p58, %p59
    %p62 = scmp.ne.s32.totalorder %s47, %s61
    %p63 = scmp.eq.s32.totalorder %s16, 0
    %p64 = por %p62, %p63
    %s66 = sadd.s32 %s65, 1
    %p69 = scmp.eq.s32.totalorder %s10, 1
    %p70 = scmp.ne.s32.totalorder %s65, %s67
    %p71 = scmp.eq.s32.totalorder %s10, 0
    %p72 = por %p70, %p71
    %p73 = scmp.ne.s32.totalorder %s65, %s67
    %p74 = scmp.eq.s32.totalorder %s15, 1
    %p75 = por %p73, %p74
    %p76 = scmp.ne.s32.totalorder %s67, %s68
    %p77 = scmp.eq.s32.totalorder %s15, 0
    %p78 = por %p76, %p77
    %p79 = scmp.ne.s32.totalorder %s67, %s68
    %p80 = scmp.eq.s32.totalorder %s16, 1
    %p81 = por %p79, %p80
    %p83 = scmp.ne.s32.totalorder %s68, %s82
    %p84 = scmp.eq.s32.totalorder %s16, 0
    %p85 = por %p83, %p84
    %s87 = sadd.s32 %s86, 1
    %p90 = scmp.eq.s32.totalorder %s10, 1
    %p91 = scmp.ne.s32.totalorder %s86, %s88
    %p92 = scmp.eq.s32.totalorder %s10, 0
    %p93 = por %p91, %p92
    %p94 = scmp.ne.s32.totalorder %s86, %s88
    %p95 = scmp.eq.s32.totalorder %s15, 1
    %p96 = por %p94, %p95
    %p97 = scmp.ne.s32.totalorder %s88, %s89
    %p98 = scmp.eq.s32.totalorder %s15, 0
    %p99 = por %p97, %p98
    %p100 = scmp.ne.s32.totalorder %s88, %s89
    %p101 = scmp.eq.s32.totalorder %s16, 1
    %p102 = por %p100, %p101
    %p104 = scmp.ne.s32.totalorder %s89, %s103
    %p105 = scmp.eq.s32.totalorder %s16, 0
    %p106 = por %p104, %p105
    %s107 = ssub.s32 %s10, %s17
    %p108 = scmp.eq.s32.totalorder %s107, 0
    %s110 = sadd.s32 %s109, 1
    %s111 = scalar_select %p108, %s109, %s110
    %p114 = pneg %p108
    %p115 = scmp.eq.s32.totalorder %s10, 1
    %p116 = por %p114, %p115
    %p117 = scmp.ne.s32.totalorder %s109, %s112
    %p118 = scmp.eq.s32.totalorder %s10, 0
    %p119 = por %p117, %p118
    %p120 = scmp.ne.s32.totalorder %s109, %s112
    %p121 = scmp.eq.s32.totalorder %s15, 1
    %p122 = por %p120, %p121
    %p123 = scmp.ne.s32.totalorder %s112, %s113
    %p124 = scmp.eq.s32.totalorder %s15, 0
    %p125 = por %p123, %p124
    %p126 = scmp.ne.s32.totalorder %s112, %s113
    %p127 = scmp.eq.s32.totalorder %s16, 1
    %p128 = por %p126, %p127
    %p130 = scmp.ne.s32.totalorder %s113, %s129
    %p131 = scmp.eq.s32.totalorder %s16, 0
    %p132 = por %p130, %p131
    %p133 = scmp.le.s32.totalorder 1, %s10
    %p134 = scmp.lt.s32.totalorder %s10, 3
    %p135 = pnand %p133, %p134
    %p136 = pneg %p135
    // Predicated region
    $region9: #{aves_forward.7} parent=5 // pred_check
      _
    $region10: #{aves_forward.7} parent=5 // pred_check_branch
      %138 = sbr.rel (%p135) target = $region12
    $region11: #{aves_forward.7} parent=5 // pred_region
      %s139 = ssub.s32 %s10, 1
      // Predicated region
      $region13: #{aves_forward.7} parent=11 // pred_check
        %p140 = pneg %p57
      $region14: #{aves_forward.7} parent=11 // pred_check_branch
        %142 = sbr.rel (%p140) target = $region16
      $region15: #{aves_forward.7} parent=11 // pred_region
        _
      $region16: #{aves_forward.7} parent=11 // pred_fallthru
        _
      // Predicated region
      $region17: #{aves_forward.7} parent=11 // pred_check
        %p143 = pneg %p78
      $region18: #{aves_forward.7} parent=11 // pred_check_branch
        %145 = sbr.rel (%p143) target = $region20
      $region19: #{aves_forward.7} parent=11 // pred_region
        _
      $region20: #{aves_forward.7} parent=11 // pred_fallthru
        _
      // Predicated region
      $region21: #{aves_forward.7} parent=11 // pred_check
        %p146 = pneg %p99
      $region22: #{aves_forward.7} parent=11 // pred_check_branch
        %148 = sbr.rel (%p146) target = $region24
      $region23: #{aves_forward.7} parent=11 // pred_region
        _
      $region24: #{aves_forward.7} parent=11 // pred_fallthru
        _
    $region12: #{aves_forward.7} parent=5 // pred_fallthru
      _
    %p149 = scmp.lt.s32.totalorder %s10, 2
    // Predicated region
    $region25: #{aves_forward.7} parent=5 // pred_check
      %p150 = pneg %p149
    $region26: #{aves_forward.7} parent=5 // pred_check_branch
      %152 = sbr.rel (%p150) target = $region28
    $region27: #{aves_forward.7} parent=5 // pred_region
      // Predicated region
      $region29: #{aves_forward.7} parent=27 // pred_check
        %p153 = pneg %p30
      $region30: #{aves_forward.7} parent=27 // pred_check_branch
        %155 = sbr.rel (%p153) target = $region32
      $region31: #{aves_forward.7} parent=27 // pred_region
        %p156 = scmp.lt.s32.totalorder %s10, 1
        %s157 = scalar_select %p156, %s10, 1
        %s158 = smul.addr %s157, 9
        %s159 = smul.addr %s158, 8
        %s160 = scalar_lea.vmem %s0, %s159
      $region32: #{aves_forward.7} parent=27 // pred_fallthru
        _
    $region28: #{aves_forward.7} parent=5 // pred_fallthru
      _
    %p161 = scmp.le.s32.totalorder 1, %s10
    %p162 = scmp.lt.s32.totalorder %s10, 3
    %p163 = pnand %p161, %p162
    %p164 = pneg %p163
    // Predicated region
    $region33: #{aves_forward.7} parent=5 // pred_check
      _
    $region34: #{aves_forward.7} parent=5 // pred_check_branch
      %166 = sbr.rel (%p163) target = $region36
    $region35: #{aves_forward.7} parent=5 // pred_region
      %s167 = ssub.s32 %s10, 1
      %p168 = scmp.lt.s32.totalorder %s15, 1
      %s169 = scalar_select %p168, %s15, 1
      %s170 = smul.addr %s169, 9
      %s171 = smul.addr %s170, 8
      %s172 = scalar_lea.vmem %s0, %s171
      %p173 = pneg %p36
      %p174 = pneg %p33
      %p175 = pneg %p57
      %p176 = pneg %p54
      %p177 = pneg %p78
      %p178 = pneg %p75
      %p179 = pneg %p99
      %p180 = pneg %p96
      %p181 = pneg %p125
      %p182 = pneg %p122
      %p183 = scmp.lt.s32.totalorder %s15, 1
      %s184 = scalar_select %p183, %s15, 1
      %s185 = smul.addr %s184, 9
      %s186 = smul.addr %s185, 8
      %s187 = scalar_lea.vmem %s4, %s186
      %p188 = scmp.lt.s32.totalorder %s15, 1
      %s189 = scalar_select %p188, %s15, 1
      %s190 = smul.addr %s189, 9
      %s191 = smul.addr %s190, 8
      %s192 = scalar_lea.vmem %s0, %s191
      %p193 = scmp.lt.s32.totalorder %s15, 1
      %s194 = scalar_select %p193, %s15, 1
      %s195 = smul.addr %s194, 9
      %s196 = smul.addr %s195, 8
      %s197 = scalar_lea.vmem %s4, %s196
      %v198 = vld [vmem:[%s192] sm:$0xff]
      %v199 = vld [vmem:[%s192 + $0x8] sm:$0xff]
      %v200 = vld [vmem:[%s192 + $0x10] sm:$0xff]
      %v201 = vld [vmem:[%s192 + $0x18] sm:$0xff]
      %v202 = vld [vmem:[%s192 + $0x20] sm:$0xff]
      %v203 = vld [vmem:[%s192 + $0x28] sm:$0xff]
      %v204 = vld [vmem:[%s192 + $0x30] sm:$0xff]
      %v205 = vld [vmem:[%s192 + $0x38] sm:$0xff]
      %v206 = vld [vmem:[%s192 + $0x40] sm:$0x7]
      %v207 = vld [vmem:[%s1] sm:$0x1f]
      %v208 = vld [vmem:[%s192 + $0x1] sm:$0xff]
      %v209 = vld [vmem:[%s192 + $0x9] sm:$0xff]
      %v210 = vld [vmem:[%s192 + $0x11] sm:$0xff]
      %v211 = vld [vmem:[%s192 + $0x19] sm:$0xff]
      %v212 = vld [vmem:[%s192 + $0x21] sm:$0xff]
      %v213 = vld [vmem:[%s192 + $0x29] sm:$0xff]
      %v214 = vld [vmem:[%s192 + $0x31] sm:$0xff]
      %v215 = vld [vmem:[%s192 + $0x39] sm:$0xff]
      %v216 = vld [vmem:[%s192 + $0x41] sm:$0x7]
      %s217 = scalar_lea.vmem %s1, 8
      %v218 = vld [vmem:[%s217] sm:$0x1f]
      %vm219 = vcmask 39936
      %v221 = vsel %vm219, %v208, 0
      %v224 = vsel %vm219, %v209, 0
      %v227 = vsel %vm219, %v210, 0
      %v230 = vsel %vm219, %v211, 0
      %v233 = vsel %vm219, %v212, 0
      %v236 = vsel %vm219, %v213, 0
      %v239 = vsel %vm219, %v214, 0
      %v242 = vsel %vm219, %v215, 0
      %v245 = vsel %vm219, %v216, 0
      %vm247 = vcmask 1044480
      %v249 = vsel %vm247, %v218, 0
      %251 = vmatprep.subr.mxu0 0.0
      %252 = vmatpush1.msra.mxu0 0.0
      %253 = vmatprep.subr.mxu0 0.0
      %254 = vmatpush1.msra.mxu0 0.0
      %255 = vmatprep.subr.mxu0 0.0
      %256 = vmatpush1.msra.mxu0 0.0
      %257 = vmatprep.subr.mxu0 0.0
      %258 = vmatpush1.msra.mxu0 0.0
      %259 = vmatprep.subr.mxu0 0.0
      %260 = vmatpush1.msra.mxu0 0.0
      %261 = vmatprep.subr.mxu0 0.0
      %262 = vmatpush1.msra.mxu0 0.0
      %263 = vmatprep.subr.mxu0 0.0
      %264 = vmatpush1.msra.mxu0 0.0
      %265 = vmatprep.subr.mxu0 0.0
      %266 = vmatpush1.msra.mxu0 0.0
      %267 = vmatprep.subr.mxu0 0.0
      %268 = vmatpush1.msra.mxu0 0.0
      %269 = vmatprep.subr.mxu0 0.0
      %270 = vmatpush1.msra.mxu0 0.0
      %271 = vmatprep.subr.mxu0 0.0
      %272 = vmatpush1.msra.mxu0 0.0
      %273 = vmatprep.subr.mxu0 0.0
      %274 = vmatpush1.msra.mxu0 0.0
      %275 = vmatprep.subr.mxu0 0.0
      %276 = vmatpush1.msra.mxu0 0.0
      %277 = vmatprep.subr.mxu0 0.0
      %278 = vmatpush1.msra.mxu0 0.0
      %279 = vmatprep.subr.mxu0 0.0
      %280 = vmatpush1.msra.mxu0 0.0
      %281 = vmatprep.subr.mxu0 0.0
      %282 = vmatpush1.msra.mxu0 %v249
      %283 = vmatprep.subr.mxu0 0.0
      %284 = vmatpush2.msra.mxu0 0.0
      %285 = vmatprep.subr.mxu0 0.0
      %286 = vmatpush2.msra.mxu0 0.0
      %287 = vmatprep.subr.mxu0 0.0
      %288 = vmatpush2.msra.mxu0 0.0
      %289 = vmatprep.subr.mxu0 0.0
      %290 = vmatpush2.msra.mxu0 0.0
      %291 = vmatprep.subr.mxu0 0.0
      %292 = vmatpush2.msra.mxu0 0.0
      %293 = vmatprep.subr.mxu0 0.0
      %294 = vmatpush2.msra.mxu0 0.0
      %295 = vmatprep.subr.mxu0 0.0
      %296 = vmatpush2.msra.mxu0 0.0
      %297 = vmatprep.subr.mxu0 0.0
      %298 = vmatpush2.msra.mxu0 0.0
      %299 = vmatprep.subr.mxu0 0.0
      %300 = vmatpush2.msra.mxu0 0.0
      %301 = vmatprep.subr.mxu0 0.0
      %302 = vmatpush2.msra.mxu0 0.0
      %303 = vmatprep.subr.mxu0 0.0
      %304 = vmatpush2.msra.mxu0 0.0
      %305 = vmatprep.subr.mxu0 0.0
      %306 = vmatpush2.msra.mxu0 0.0
      %307 = vmatprep.subr.mxu0 0.0
      %308 = vmatpush2.msra.mxu0 0.0
      %309 = vmatprep.subr.mxu0 0.0
      %310 = vmatpush2.msra.mxu0 0.0
      %311 = vmatprep.subr.mxu0 0.0
      %312 = vmatpush2.msra.mxu0 0.0
      %313 = vmatprep.subr.mxu0 0.0
      %314 = vmatpush2.msra.mxu0 0.0
      %315 = vmatprep.mubr.f32.mxu0 0.0
      %316 = vmatmul.mubr.f32.gmra.mxu0 %v221
      %v317 = vpop.f32.mrf.mxu0
      %v318 = vadd.f32 0.0, %v317
      %v319 = vpop.f32.mrf.mxu0
      %320 = vmatprep.mubr.f32.mxu0 0.0
      %321 = vmatmul.mubr.f32.gmra.mxu0 %v224
      %v322 = vpop.f32.mrf.mxu0
      %v323 = vadd.f32 0.0, %v322
      %v324 = vpop.f32.mrf.mxu0
      %325 = vmatprep.mubr.f32.mxu0 0.0
      %326 = vmatmul.mubr.f32.gmra.mxu0 %v227
      %v327 = vpop.f32.mrf.mxu0
      %v328 = vadd.f32 0.0, %v327
      %v329 = vpop.f32.mrf.mxu0
      %330 = vmatprep.mubr.f32.mxu0 0.0
      %331 = vmatmul.mubr.f32.gmra.mxu0 %v230
      %v332 = vpop.f32.mrf.mxu0
      %v333 = vadd.f32 0.0, %v332
      %v334 = vpop.f32.mrf.mxu0
      %335 = vmatprep.mubr.f32.mxu0 0.0
      %336 = vmatmul.mubr.f32.gmra.mxu0 %v233
      %v337 = vpop.f32.mrf.mxu0
      %v338 = vadd.f32 0.0, %v337
      %v339 = vpop.f32.mrf.mxu0
      %340 = vmatprep.mubr.f32.mxu0 0.0
      %341 = vmatmul.mubr.f32.gmra.mxu0 %v236
      %v342 = vpop.f32.mrf.mxu0
      %v343 = vadd.f32 0.0, %v342
      %v344 = vpop.f32.mrf.mxu0
      %345 = vmatprep.mubr.f32.mxu0 0.0
      %346 = vmatmul.mubr.f32.gmra.mxu0 %v239
      %v347 = vpop.f32.mrf.mxu0
      %v348 = vadd.f32 0.0, %v347
      %v349 = vpop.f32.mrf.mxu0
      %350 = vmatprep.mubr.f32.mxu0 0.0
      %351 = vmatmul.mubr.f32.gmra.mxu0 %v242
      %v352 = vpop.f32.mrf.mxu0
      %v353 = vadd.f32 0.0, %v352
      %v354 = vpop.f32.mrf.mxu0
      %355 = vmatprep.mubr.f32.mxu0 0.0
      %356 = vmatmul.mubr.f32.gmra.mxu0 %v245
      %v357 = vpop.f32.mrf.mxu0
      %v358 = vadd.f32 0.0, %v357
      %v359 = vpop.f32.mrf.mxu0
      %360 = vdwg.mxu0
      %v362 = vsel %vm219, %v198, 0
      %v365 = vsel %vm219, %v199, 0
      %v368 = vsel %vm219, %v200, 0
      %v371 = vsel %vm219, %v201, 0
      %v374 = vsel %vm219, %v202, 0
      %v377 = vsel %vm219, %v203, 0
      %v380 = vsel %vm219, %v204, 0
      %v383 = vsel %vm219, %v205, 0
      %v386 = vsel %vm219, %v206, 0
      %v389 = vsel %vm247, %v207, 0
      %391 = vmatprep.subr.mxu0 0.0
      %392 = vmatpush1.msra.mxu0 0.0
      %393 = vmatprep.subr.mxu0 0.0
      %394 = vmatpush1.msra.mxu0 0.0
      %395 = vmatprep.subr.mxu0 0.0
      %396 = vmatpush1.msra.mxu0 0.0
      %397 = vmatprep.subr.mxu0 0.0
      %398 = vmatpush1.msra.mxu0 0.0
      %399 = vmatprep.subr.mxu0 0.0
      %400 = vmatpush1.msra.mxu0 0.0
      %401 = vmatprep.subr.mxu0 0.0
      %402 = vmatpush1.msra.mxu0 0.0
      %403 = vmatprep.subr.mxu0 0.0
      %404 = vmatpush1.msra.mxu0 0.0
      %405 = vmatprep.subr.mxu0 0.0
      %406 = vmatpush1.msra.mxu0 0.0
      %407 = vmatprep.subr.mxu0 0.0
      %408 = vmatpush1.msra.mxu0 0.0
      %409 = vmatprep.subr.mxu0 0.0
      %410 = vmatpush1.msra.mxu0 0.0
      %411 = vmatprep.subr.mxu0 0.0
      %412 = vmatpush1.msra.mxu0 0.0
      %413 = vmatprep.subr.mxu0 0.0
      %414 = vmatpush1.msra.mxu0 0.0
      %415 = vmatprep.subr.mxu0 0.0
      %416 = vmatpush1.msra.mxu0 0.0
      %417 = vmatprep.subr.mxu0 0.0
      %418 = vmatpush1.msra.mxu0 0.0
      %419 = vmatprep.subr.mxu0 0.0
      %420 = vmatpush1.msra.mxu0 0.0
      %421 = vmatprep.subr.mxu0 0.0
      %422 = vmatpush1.msra.mxu0 %v389
      %423 = vmatprep.subr.mxu0 0.0
      %424 = vmatpush2.msra.mxu0 0.0
      %425 = vmatprep.subr.mxu0 0.0
      %426 = vmatpush2.msra.mxu0 0.0
      %427 = vmatprep.subr.mxu0 0.0
      %428 = vmatpush2.msra.mxu0 0.0
      %429 = vmatprep.subr.mxu0 0.0
      %430 = vmatpush2.msra.mxu0 0.0
      %431 = vmatprep.subr.mxu0 0.0
      %432 = vmatpush2.msra.mxu0 0.0
      %433 = vmatprep.subr.mxu0 0.0
      %434 = vmatpush2.msra.mxu0 0.0
      %435 = vmatprep.subr.mxu0 0.0
      %436 = vmatpush2.msra.mxu0 0.0
      %437 = vmatprep.subr.mxu0 0.0
      %438 = vmatpush2.msra.mxu0 0.0
      %439 = vmatprep.subr.mxu0 0.0
      %440 = vmatpush2.msra.mxu0 0.0
      %441 = vmatprep.subr.mxu0 0.0
      %442 = vmatpush2.msra.mxu0 0.0
      %443 = vmatprep.subr.mxu0 0.0
      %444 = vmatpush2.msra.mxu0 0.0
      %445 = vmatprep.subr.mxu0 0.0
      %446 = vmatpush2.msra.mxu0 0.0
      %447 = vmatprep.subr.mxu0 0.0
      %448 = vmatpush2.msra.mxu0 0.0
      %449 = vmatprep.subr.mxu0 0.0
      %450 = vmatpush2.msra.mxu0 0.0
      %451 = vmatprep.subr.mxu0 0.0
      %452 = vmatpush2.msra.mxu0 0.0
      %453 = vmatprep.subr.mxu0 0.0
      %454 = vmatpush2.msra.mxu0 0.0
      %455 = vmatprep.mubr.f32.mxu0 0.0
      %456 = vmatmul.mubr.f32.gmra.mxu0 %v362
      %v457 = vpop.f32.mrf.mxu0
      %v458 = vadd.f32 %v318, %v457
      %v459 = vpop.f32.mrf.mxu0
      %460 = vmatprep.mubr.f32.mxu0 0.0
      %461 = vmatmul.mubr.f32.gmra.mxu0 %v365
      %v462 = vpop.f32.mrf.mxu0
      %v463 = vadd.f32 %v323, %v462
      %v464 = vpop.f32.mrf.mxu0
      %465 = vmatprep.mubr.f32.mxu0 0.0
      %466 = vmatmul.mubr.f32.gmra.mxu0 %v368
      %v467 = vpop.f32.mrf.mxu0
      %v468 = vadd.f32 %v328, %v467
      %v469 = vpop.f32.mrf.mxu0
      %470 = vmatprep.mubr.f32.mxu0 0.0
      %471 = vmatmul.mubr.f32.gmra.mxu0 %v371
      %v472 = vpop.f32.mrf.mxu0
      %v473 = vadd.f32 %v333, %v472
      %v474 = vpop.f32.mrf.mxu0
      %475 = vmatprep.mubr.f32.mxu0 0.0
      %476 = vmatmul.mubr.f32.gmra.mxu0 %v374
      %v477 = vpop.f32.mrf.mxu0
      %v478 = vadd.f32 %v338, %v477
      %v479 = vpop.f32.mrf.mxu0
      %480 = vmatprep.mubr.f32.mxu0 0.0
      %481 = vmatmul.mubr.f32.gmra.mxu0 %v377
      %v482 = vpop.f32.mrf.mxu0
      %v483 = vadd.f32 %v343, %v482
      %v484 = vpop.f32.mrf.mxu0
      %485 = vmatprep.mubr.f32.mxu0 0.0
      %486 = vmatmul.mubr.f32.gmra.mxu0 %v380
      %v487 = vpop.f32.mrf.mxu0
      %v488 = vadd.f32 %v348, %v487
      %v489 = vpop.f32.mrf.mxu0
      %490 = vmatprep.mubr.f32.mxu0 0.0
      %491 = vmatmul.mubr.f32.gmra.mxu0 %v383
      %v492 = vpop.f32.mrf.mxu0
      %v493 = vadd.f32 %v353, %v492
      %v494 = vpop.f32.mrf.mxu0
      %495 = vmatprep.mubr.f32.mxu0 0.0
      %496 = vmatmul.mubr.f32.gmra.mxu0 %v386
      %v497 = vpop.f32.mrf.mxu0
      %v498 = vadd.f32 %v358, %v497
      %v499 = vpop.f32.mrf.mxu0
      %500 = vdwg.mxu0
      %vm501 = vcmask 261120
      %v502 = vsel %vm501, %v458, 0.0
      %v503 = vsel %vm501, %v463, 0.0
      %v504 = vadd.f32 %v502, %v503
      %v505 = vsel %vm501, %v468, 0.0
      %v506 = vadd.f32 %v504, %v505
      %v507 = vsel %vm501, %v473, 0.0
      %v508 = vadd.f32 %v506, %v507
      %v509 = vsel %vm501, %v478, 0.0
      %v510 = vadd.f32 %v508, %v509
      %v511 = vsel %vm501, %v483, 0.0
      %v512 = vadd.f32 %v510, %v511
      %v513 = vsel %vm501, %v488, 0.0
      %v514 = vadd.f32 %v512, %v513
      %v515 = vsel %vm501, %v493, 0.0
      %v516 = vadd.f32 %v514, %v515
      %vm517 = vcmask 256000
      %v518 = vsel %vm517, %v498, 0.0
      %v519 = vadd.f32 %v516, %v518
      %v520 = vrot.slane %v519, 4
      %v521 = vadd.f32 %v519, %v520
      %v522 = vrot.slane %v521, 2
      %v523 = vadd.f32 %v521, %v522
      %v524 = vrot.slane %v523, 1
      %v525 = vadd.f32 %v523, %v524
      %v526 = vrcp.pop 67.0
      %v527 = vmul.f32 %v525, %v526
      %v528 = vsub.f32 %v458, %v527
      %v529 = vsub.f32 %v463, %v527
      %v530 = vsub.f32 %v468, %v527
      %v531 = vsub.f32 %v473, %v527
      %v532 = vsub.f32 %v478, %v527
      %v533 = vsub.f32 %v483, %v527
      %v534 = vsub.f32 %v488, %v527
      %v535 = vsub.f32 %v493, %v527
      %v536 = vsub.f32 %v498, %v527
      %v537 = vmul.f32 %v528, %v528
      %v538 = vmul.f32 %v529, %v529
      %v539 = vmul.f32 %v530, %v530
      %v540 = vmul.f32 %v531, %v531
      %v541 = vmul.f32 %v532, %v532
      %v542 = vmul.f32 %v533, %v533
      %v543 = vmul.f32 %v534, %v534
      %v544 = vmul.f32 %v535, %v535
      %v545 = vmul.f32 %v536, %v536
      %v546 = vsel %vm501, %v537, 0.0
      %v547 = vsel %vm501, %v538, 0.0
      %v548 = vadd.f32 %v546, %v547
      %v549 = vsel %vm501, %v539, 0.0
      %v550 = vadd.f32 %v548, %v549
      %v551 = vsel %vm501, %v540, 0.0
      %v552 = vadd.f32 %v550, %v551
      %v553 = vsel %vm501, %v541, 0.0
      %v554 = vadd.f32 %v552, %v553
      %v555 = vsel %vm501, %v542, 0.0
      %v556 = vadd.f32 %v554, %v555
      %v557 = vsel %vm501, %v543, 0.0
      %v558 = vadd.f32 %v556, %v557
      %v559 = vsel %vm501, %v544, 0.0
      %v560 = vadd.f32 %v558, %v559
      %v561 = vsel %vm517, %v545, 0.0
      %v562 = vadd.f32 %v560, %v561
      %v563 = vrot.slane %v562, 4
      %v564 = vadd.f32 %v562, %v563
      %v565 = vrot.slane %v564, 2
      %v566 = vadd.f32 %v564, %v565
      %v567 = vrot.slane %v566, 1
      %v568 = vadd.f32 %v566, %v567
      %v569 = vmul.f32 %v568, %v526
      %v570 = vadd.f32 %v569, 1e-05
      %v571 = vrsqrt.pop %v570
      %v572 = vmul.f32 %v528, %v571
      %v573 = vmul.f32 %v529, %v571
      %v574 = vmul.f32 %v530, %v571
      %v575 = vmul.f32 %v531, %v571
      %v576 = vmul.f32 %v532, %v571
      %v577 = vmul.f32 %v533, %v571
      %v578 = vmul.f32 %v534, %v571
      %v579 = vmul.f32 %v535, %v571
      %v580 = vmul.f32 %v536, %v571
      %v581 = vld [vmem:[%s2] sm:$0x1]
      %v583 = vlaneseq
      %v584 = vshrl.u32 %v583, 7
      %v585 = vsub.s32 0, %v584
      %v586 = vrot.slane %v581, %v585
      %v588 = vmul.f32 %v572, %v586
      %v589 = vmul.f32 %v573, %v586
      %v590 = vmul.f32 %v574, %v586
      %v591 = vmul.f32 %v575, %v586
      %v592 = vmul.f32 %v576, %v586
      %v593 = vmul.f32 %v577, %v586
      %v594 = vmul.f32 %v578, %v586
      %v595 = vmul.f32 %v579, %v586
      %v596 = vmul.f32 %v580, %v586
      %v597 = vld [vmem:[%s3] sm:$0x1]
      %v599 = vlaneseq
      %v600 = vshrl.u32 %v599, 7
      %v601 = vsub.s32 0, %v600
      %v602 = vrot.slane %v597, %v601
      %v604 = vadd.f32 %v588, %v602
      %v605 = vadd.f32 %v589, %v602
      %v606 = vadd.f32 %v590, %v602
      %v607 = vadd.f32 %v591, %v602
      %v608 = vadd.f32 %v592, %v602
      %v609 = vadd.f32 %v593, %v602
      %v610 = vadd.f32 %v594, %v602
      %v611 = vadd.f32 %v595, %v602
      %v612 = vadd.f32 %v596, %v602
      %v613 = vmul.f32 %v604, %v604
      %v614 = vmul.f32 %v605, %v605
      %v615 = vmul.f32 %v606, %v606
      %v616 = vmul.f32 %v607, %v607
      %v617 = vmul.f32 %v608, %v608
      %v618 = vmul.f32 %v609, %v609
      %v619 = vmul.f32 %v610, %v610
      %v620 = vmul.f32 %v611, %v611
      %v621 = vmul.f32 %v612, %v612
      %v622 = vmul.f32 %v604, %v613
      %v623 = vmul.f32 %v605, %v614
      %v624 = vmul.f32 %v606, %v615
      %v625 = vmul.f32 %v607, %v616
      %v626 = vmul.f32 %v608, %v617
      %v627 = vmul.f32 %v609, %v618
      %v628 = vmul.f32 %v610, %v619
      %v629 = vmul.f32 %v611, %v620
      %v630 = vmul.f32 %v612, %v621
      %v631 = vmul.f32 %v622, 0.044715
      %v632 = vmul.f32 %v623, 0.044715
      %v633 = vmul.f32 %v624, 0.044715
      %v634 = vmul.f32 %v625, 0.044715
      %v635 = vmul.f32 %v626, 0.044715
      %v636 = vmul.f32 %v627, 0.044715
      %v637 = vmul.f32 %v628, 0.044715
      %v638 = vmul.f32 %v629, 0.044715
      %v639 = vmul.f32 %v630, 0.044715
      %v640 = vadd.f32 %v604, %v631
      %v641 = vadd.f32 %v605, %v632
      %v642 = vadd.f32 %v606, %v633
      %v643 = vadd.f32 %v607, %v634
      %v644 = vadd.f32 %v608, %v635
      %v645 = vadd.f32 %v609, %v636
      %v646 = vadd.f32 %v610, %v637
      %v647 = vadd.f32 %v611, %v638
      %v648 = vadd.f32 %v612, %v639
      %v649 = vmul.f32 %v640, 0.7978846
      %v650 = vmul.f32 %v641, 0.7978846
      %v651 = vmul.f32 %v642, 0.7978846
      %v652 = vmul.f32 %v643, 0.7978846
      %v653 = vmul.f32 %v644, 0.7978846
      %v654 = vmul.f32 %v645, 0.7978846
      %v655 = vmul.f32 %v646, 0.7978846
      %v656 = vmul.f32 %v647, 0.7978846
      %v657 = vmul.f32 %v648, 0.7978846
      %v658 = vtanh.pop %v649
      %v659 = vtanh.pop %v650
      %v660 = vtanh.pop %v651
      %v661 = vtanh.pop %v652
      %v662 = vtanh.pop %v653
      %v663 = vtanh.pop %v654
      %v664 = vtanh.pop %v655
      %v665 = vtanh.pop %v656
      %v666 = vtanh.pop %v657
      %v667 = vadd.f32 %v658, 1.0
      %v668 = vadd.f32 %v659, 1.0
      %v669 = vadd.f32 %v660, 1.0
      %v670 = vadd.f32 %v661, 1.0
      %v671 = vadd.f32 %v662, 1.0
      %v672 = vadd.f32 %v663, 1.0
      %v673 = vadd.f32 %v664, 1.0
      %v674 = vadd.f32 %v665, 1.0
      %v675 = vadd.f32 %v666, 1.0
      %v676 = vmul.f32 %v667, 0.5
      %v677 = vmul.f32 %v668, 0.5
      %v678 = vmul.f32 %v669, 0.5
      %v679 = vmul.f32 %v670, 0.5
      %v680 = vmul.f32 %v671, 0.5
      %v681 = vmul.f32 %v672, 0.5
      %v682 = vmul.f32 %v673, 0.5
      %v683 = vmul.f32 %v674, 0.5
      %v684 = vmul.f32 %v675, 0.5
      %v685 = vmul.f32 %v604, %v676
      %v686 = vmul.f32 %v605, %v677
      %v687 = vmul.f32 %v606, %v678
      %v688 = vmul.f32 %v607, %v679
      %v689 = vmul.f32 %v608, %v680
      %v690 = vmul.f32 %v609, %v681
      %v691 = vmul.f32 %v610, %v682
      %v692 = vmul.f32 %v611, %v683
      %v693 = vmul.f32 %v612, %v684
      %694 = vst.msk [vmem:[%s197] sm:$0xff] %vm501, %v685
      %695 = vst.msk [vmem:[%s197 + $0x8] sm:$0xff] %vm501, %v686
      %696 = vst.msk [vmem:[%s197 + $0x10] sm:$0xff] %vm501, %v687
      %697 = vst.msk [vmem:[%s197 + $0x18] sm:$0xff] %vm501, %v688
      %698 = vst.msk [vmem:[%s197 + $0x20] sm:$0xff] %vm501, %v689
      %699 = vst.msk [vmem:[%s197 + $0x28] sm:$0xff] %vm501, %v690
      %700 = vst.msk [vmem:[%s197 + $0x30] sm:$0xff] %vm501, %v691
      %701 = vst.msk [vmem:[%s197 + $0x38] sm:$0xff] %vm501, %v692
      %702 = vst.msk [vmem:[%s197 + $0x40] sm:$0x7] %vm517, %v693
      %p703 = scmp.lt.s32.totalorder %s15, 1
      %s704 = scalar_select %p703, %s15, 1
      %s705 = smul.addr %s704, 9
      %s706 = smul.addr %s705, 8
      %s707 = scalar_lea.vmem %s4, %s706
      // Predicated region
      $region37: #{aves_forward.7} parent=35 // pred_check
        %p708 = pneg %p122
      $region38: #{aves_forward.7} parent=35 // pred_check_branch
        %710 = sbr.rel (%p708) target = $region40
      $region39: #{aves_forward.7} parent=35 // pred_region
        _
      $region40: #{aves_forward.7} parent=35 // pred_fallthru
        _
    $region36: #{aves_forward.7} parent=5 // pred_fallthru
      _
    %p711 = scmp.le.s32.totalorder 2, %s10
    // Predicated region
    $region41: #{aves_forward.7} parent=5 // pred_check
      %p712 = pneg %p711
    $region42: #{aves_forward.7} parent=5 // pred_check_branch
      %714 = sbr.rel (%p712) target = $region44
    $region43: #{aves_forward.7} parent=5 // pred_region
      %s715 = ssub.s32 %s10, 2
      // Predicated region
      $region45: #{aves_forward.7} parent=43 // pred_check
        %p716 = pneg %p128
      $region46: #{aves_forward.7} parent=43 // pred_check_branch
        %718 = sbr.rel (%p716) target = $region48
      $region47: #{aves_forward.7} parent=43 // pred_region
        %p719 = scmp.lt.s32.totalorder %s16, 1
        %s720 = scalar_select %p719, %s16, 1
        %s721 = smul.addr %s720, 9
        %s722 = smul.addr %s721, 8
        %s723 = scalar_lea.vmem %s4, %s722
      $region48: #{aves_forward.7} parent=43 // pred_fallthru
        _
    $region44: #{aves_forward.7} parent=5 // pred_fallthru
      _
  $region6: #{aves_forward.7} parent=0 // loop_footer
    %s14 = sadd.s32 1, %s10
  $region7: #{aves_forward.7} parent=0 // loop_footer_branch
    %9 = sbr.rel target = $region3
  $region8: #{aves_forward.7} parent=0 // loop_exit
    _

// kernel: aves_forward.9
$region0: #{aves_forward.9}
  #allocation0 [shape = 'u32[]', space=smem, size = 0x4, offset = 0x4, fixed_abs, tag = 'smem constant byte address 0x4 - core index']
  #allocation1 [shape = 'u32[144,128]{1,0:T(1,128)}', space=vmem, size = 0x12000, scoped, tag = 'internal scratch']
  %s0 = inlined_call_operand.vmem [shape: f32[2,17,64], index: 0, kind: input, shape index: {}]
  %s1 = inlined_call_operand.vmem [shape: f32[2,64,32], index: 1, kind: input, shape index: {}]
  %s2 = inlined_call_operand.vmem [shape: f32[2,16,32], index: 2, kind: output, shape index: {}]
  %s3 = sld [smem:[#allocation0]]
  $region41: #{aves_forward.9} parent=0
    _
  %s5 = ssub.s32 1, %s3
  %s6 = scalar_select 0, %s5, %s3
  loop: start=0, step=1, limit=4
  $region2: #{aves_forward.9} parent=0 // loop_pre_header
    _
  $region3: #{aves_forward.9} parent=0 // loop_header
    %s8 = sphi 0, %s12
    %p9 = scmp.ge.s32.totalorder %s8, 4
    %s18 = sphi 0, %s20
    %s21 = sphi 0, %s18
    %s22 = sphi 0, %s21
    %s38 = sphi 0, %s22
    %s42 = sphi 0, %s42
    %s44 = sphi 0, %s42
    %s45 = sphi 0, %s44
    %s59 = sphi 0, %s45
    %s65 = sphi 0, %s67
    %s68 = sphi 0, %s65
    %s69 = sphi 0, %s68
    %s85 = sphi 0, %s69
  $region4: #{aves_forward.9} parent=0 // loop_header_branch
    %11 = sbr.rel (%p9) target = $region8
  $region5: #{aves_forward.9} parent=0 // loop_body
    %s13 = ssub.s32 %s8, 1
    %s14 = ssub.s32 %s8, 2
    %s15 = sadd.s32 %s8, 1
    %s16 = ssub.s32 %s8, %s15
    %p17 = scmp.eq.s32.totalorder %s16, 0
    %s19 = sadd.s32 %s18, 1
    %s20 = scalar_select %p17, %s18, %s19
    %p23 = pneg %p17
    %p24 = scmp.eq.s32.totalorder %s8, 1
    %p25 = por %p23, %p24
    %p26 = scmp.ne.s32.totalorder %s18, %s21
    %p27 = scmp.eq.s32.totalorder %s8, 0
    %p28 = por %p26, %p27
    %p29 = scmp.ne.s32.totalorder %s18, %s21
    %p30 = scmp.eq.s32.totalorder %s13, 1
    %p31 = por %p29, %p30
    %p32 = scmp.ne.s32.totalorder %s21, %s22
    %p33 = scmp.eq.s32.totalorder %s13, 0
    %p34 = por %p32, %p33
    %p35 = scmp.ne.s32.totalorder %s21, %s22
    %p36 = scmp.eq.s32.totalorder %s14, 1
    %p37 = por %p35, %p36
    %p39 = scmp.ne.s32.totalorder %s22, %s38
    %p40 = scmp.eq.s32.totalorder %s14, 0
    %p41 = por %p39, %p40
    %s43 = sadd.s32 %s42, 1
    %p46 = scmp.eq.s32.totalorder %s8, 1
    %p47 = scmp.ne.s32.totalorder %s42, %s44
    %p48 = scmp.eq.s32.totalorder %s8, 0
    %p49 = por %p47, %p48
    %p50 = scmp.ne.s32.totalorder %s42, %s44
    %p51 = scmp.eq.s32.totalorder %s13, 1
    %p52 = por %p50, %p51
    %p53 = scmp.ne.s32.totalorder %s44, %s45
    %p54 = scmp.eq.s32.totalorder %s13, 0
    %p55 = por %p53, %p54
    %p56 = scmp.ne.s32.totalorder %s44, %s45
    %p57 = scmp.eq.s32.totalorder %s14, 1
    %p58 = por %p56, %p57
    %p60 = scmp.ne.s32.totalorder %s45, %s59
    %p61 = scmp.eq.s32.totalorder %s14, 0
    %p62 = por %p60, %p61
    %s63 = ssub.s32 %s8, %s15
    %p64 = scmp.eq.s32.totalorder %s63, 0
    %s66 = sadd.s32 %s65, 1
    %s67 = scalar_select %p64, %s65, %s66
    %p70 = pneg %p64
    %p71 = scmp.eq.s32.totalorder %s8, 1
    %p72 = por %p70, %p71
    %p73 = scmp.ne.s32.totalorder %s65, %s68
    %p74 = scmp.eq.s32.totalorder %s8, 0
    %p75 = por %p73, %p74
    %p76 = scmp.ne.s32.totalorder %s65, %s68
    %p77 = scmp.eq.s32.totalorder %s13, 1
    %p78 = por %p76, %p77
    %p79 = scmp.ne.s32.totalorder %s68, %s69
    %p80 = scmp.eq.s32.totalorder %s13, 0
    %p81 = por %p79, %p80
    %p82 = scmp.ne.s32.totalorder %s68, %s69
    %p83 = scmp.eq.s32.totalorder %s14, 1
    %p84 = por %p82, %p83
    %p86 = scmp.ne.s32.totalorder %s69, %s85
    %p87 = scmp.eq.s32.totalorder %s14, 0
    %p88 = por %p86, %p87
    %p89 = scmp.le.s32.totalorder 1, %s8
    %p90 = scmp.lt.s32.totalorder %s8, 3
    %p91 = pnand %p89, %p90
    %p92 = pneg %p91
    // Predicated region
    $region9: #{aves_forward.9} parent=5 // pred_check
      _
    $region10: #{aves_forward.9} parent=5 // pred_check_branch
      %94 = sbr.rel (%p91) target = $region12
    $region11: #{aves_forward.9} parent=5 // pred_region
      %s95 = ssub.s32 %s8, 1
      // Predicated region
      $region13: #{aves_forward.9} parent=11 // pred_check
        %p96 = pneg %p55
      $region14: #{aves_forward.9} parent=11 // pred_check_branch
        %98 = sbr.rel (%p96) target = $region16
      $region15: #{aves_forward.9} parent=11 // pred_region
        _
      $region16: #{aves_forward.9} parent=11 // pred_fallthru
        _
    $region12: #{aves_forward.9} parent=5 // pred_fallthru
      _
    %p99 = scmp.lt.s32.totalorder %s8, 2
    // Predicated region
    $region17: #{aves_forward.9} parent=5 // pred_check
      %p100 = pneg %p99
    $region18: #{aves_forward.9} parent=5 // pred_check_branch
      %102 = sbr.rel (%p100) target = $region20
    $region19: #{aves_forward.9} parent=5 // pred_region
      // Predicated region
      $region21: #{aves_forward.9} parent=19 // pred_check
        %p103 = pneg %p28
      $region22: #{aves_forward.9} parent=19 // pred_check_branch
        %105 = sbr.rel (%p103) target = $region24
      $region23: #{aves_forward.9} parent=19 // pred_region
        %p106 = scmp.lt.s32.totalorder %s8, 1
        %s107 = scalar_select %p106, %s8, 1
        %s108 = smul.addr %s107, 3
        %s109 = smul.addr %s108, 8
        %s110 = scalar_lea.vmem %s0, %s109
      $region24: #{aves_forward.9} parent=19 // pred_fallthru
        _
    $region20: #{aves_forward.9} parent=5 // pred_fallthru
      _
    %p111 = scmp.le.s32.totalorder 1, %s8
    %p112 = scmp.lt.s32.totalorder %s8, 3
    %p113 = pnand %p111, %p112
    %p114 = pneg %p113
    // Predicated region
    $region25: #{aves_forward.9} parent=5 // pred_check
      _
    $region26: #{aves_forward.9} parent=5 // pred_check_branch
      %116 = sbr.rel (%p113) target = $region28
    $region27: #{aves_forward.9} parent=5 // pred_region
      %s117 = ssub.s32 %s8, 1
      %p118 = scmp.lt.s32.totalorder %s13, 1
      %s119 = scalar_select %p118, %s13, 1
      %s120 = smul.addr %s119, 3
      %s121 = smul.addr %s120, 8
      %s122 = scalar_lea.vmem %s0, %s121
      %p123 = pneg %p34
      %p124 = pneg %p31
      %p125 = pneg %p55
      %p126 = pneg %p52
      %p127 = pneg %p81
      %p128 = pneg %p78
      %p129 = scmp.lt.s32.totalorder %s13, 1
      %s130 = scalar_select %p129, %s13, 1
      %s131 = smul.addr %s130, 2
      %s132 = smul.addr %s131, 8
      %s133 = scalar_lea.vmem %s2, %s132
      %p134 = scmp.lt.s32.totalorder %s13, 1
      %s135 = scalar_select %p134, %s13, 1
      %s136 = smul.addr %s135, 3
      %s137 = smul.addr %s136, 8
      %s138 = scalar_lea.vmem %s0, %s137
      %p139 = scmp.lt.s32.totalorder %s13, 1
      %s140 = scalar_select %p139, %s13, 1
      %s141 = smul.addr %s140, 2
      %s142 = smul.addr %s141, 8
      %s143 = scalar_lea.vmem %s2, %s142
      %v144 = vld [vmem:[%s138] sm:$0xff]
      %v145 = vld [vmem:[%s138 + $0x8] sm:$0xff]
      %v146 = vld [vmem:[%s1] sm:$0xff]
      %v147 = vld [vmem:[%s1 + $0x8] sm:$0xff]
      %v148 = vld [vmem:[%s1 + $0x10] sm:$0xff]
      %v149 = vld [vmem:[%s1 + $0x18] sm:$0xff]
      %v150 = vld [vmem:[%s1 + $0x20] sm:$0xff]
      %v151 = vld [vmem:[%s1 + $0x28] sm:$0xff]
      %v152 = vld [vmem:[%s1 + $0x30] sm:$0xff]
      %v153 = vld [vmem:[%s1 + $0x38] sm:$0xff]
      %v154 = vld [vmem:[%s138 + $0x1] sm:$0xff]
      %v155 = vld [vmem:[%s138 + $0x9] sm:$0xff]
      %s156 = scalar_lea.vmem %s1, 64
      %v157 = vld [vmem:[%s156] sm:$0xff]
      %v158 = vld [vmem:[%s156 + $0x8] sm:$0xff]
      %v159 = vld [vmem:[%s156 + $0x10] sm:$0xff]
      %v160 = vld [vmem:[%s156 + $0x18] sm:$0xff]
      %v161 = vld [vmem:[%s156 + $0x20] sm:$0xff]
      %v162 = vld [vmem:[%s156 + $0x28] sm:$0xff]
      %v163 = vld [vmem:[%s156 + $0x30] sm:$0xff]
      %v164 = vld [vmem:[%s156 + $0x38] sm:$0xff]
      %vm165 = vcmask 523264
      %v167 = vsel %vm165, %v154, 0
      %v170 = vsel %vm165, %v155, 0
      %172 = vmatprep.subr.mxu0 0.0
      %173 = vmatpush1.msra.mxu0 0.0
      %174 = vmatprep.subr.mxu0 0.0
      %175 = vmatpush1.msra.mxu0 0.0
      %176 = vmatprep.subr.mxu0 0.0
      %177 = vmatpush1.msra.mxu0 0.0
      %178 = vmatprep.subr.mxu0 0.0
      %179 = vmatpush1.msra.mxu0 0.0
      %180 = vmatprep.subr.mxu0 0.0
      %181 = vmatpush1.msra.mxu0 0.0
      %182 = vmatprep.subr.mxu0 0.0
      %183 = vmatpush1.msra.mxu0 0.0
      %184 = vmatprep.subr.mxu0 0.0
      %185 = vmatpush1.msra.mxu0 0.0
      %186 = vmatprep.subr.mxu0 0.0
      %187 = vmatpush1.msra.mxu0 0.0
      %188 = vmatprep.subr.mxu0 0.0
      %189 = vmatpush1.msra.mxu0 %v164
      %190 = vmatprep.subr.mxu0 0.0
      %191 = vmatpush1.msra.mxu0 %v163
      %192 = vmatprep.subr.mxu0 0.0
      %193 = vmatpush1.msra.mxu0 %v162
      %194 = vmatprep.subr.mxu0 0.0
      %195 = vmatpush1.msra.mxu0 %v161
      %196 = vmatprep.subr.mxu0 0.0
      %197 = vmatpush1.msra.mxu0 %v160
      %198 = vmatprep.subr.mxu0 0.0
      %199 = vmatpush1.msra.mxu0 %v159
      %200 = vmatprep.subr.mxu0 0.0
      %201 = vmatpush1.msra.mxu0 %v158
      %202 = vmatprep.subr.mxu0 0.0
      %203 = vmatpush1.msra.mxu0 %v157
      %204 = vmatprep.subr.mxu0 0.0
      %205 = vmatpush2.msra.mxu0 0.0
      %206 = vmatprep.subr.mxu0 0.0
      %207 = vmatpush2.msra.mxu0 0.0
      %208 = vmatprep.subr.mxu0 0.0
      %209 = vmatpush2.msra.mxu0 0.0
      %210 = vmatprep.subr.mxu0 0.0
      %211 = vmatpush2.msra.mxu0 0.0
      %212 = vmatprep.subr.mxu0 0.0
      %213 = vmatpush2.msra.mxu0 0.0
      %214 = vmatprep.subr.mxu0 0.0
      %215 = vmatpush2.msra.mxu0 0.0
      %216 = vmatprep.subr.mxu0 0.0
      %217 = vmatpush2.msra.mxu0 0.0
      %218 = vmatprep.subr.mxu0 0.0
      %219 = vmatpush2.msra.mxu0 0.0
      %220 = vmatprep.subr.mxu0 0.0
      %221 = vmatpush2.msra.mxu0 0.0
      %222 = vmatprep.subr.mxu0 0.0
      %223 = vmatpush2.msra.mxu0 0.0
      %224 = vmatprep.subr.mxu0 0.0
      %225 = vmatpush2.msra.mxu0 0.0
      %226 = vmatprep.subr.mxu0 0.0
      %227 = vmatpush2.msra.mxu0 0.0
      %228 = vmatprep.subr.mxu0 0.0
      %229 = vmatpush2.msra.mxu0 0.0
      %230 = vmatprep.subr.mxu0 0.0
      %231 = vmatpush2.msra.mxu0 0.0
      %232 = vmatprep.subr.mxu0 0.0
      %233 = vmatpush2.msra.mxu0 0.0
      %234 = vmatprep.subr.mxu0 0.0
      %235 = vmatpush2.msra.mxu0 0.0
      %236 = vmatprep.mubr.f32.mxu0 0.0
      %237 = vmatmul.mubr.f32.gmra.mxu0 %v167
      %v238 = vpop.f32.mrf.mxu0
      %v239 = vadd.f32 0.0, %v238
      %v240 = vpop.f32.mrf.mxu0
      %241 = vmatprep.mubr.f32.mxu0 0.0
      %242 = vmatmul.mubr.f32.gmra.mxu0 %v170
      %v243 = vpop.f32.mrf.mxu0
      %v244 = vadd.f32 0.0, %v243
      %v245 = vpop.f32.mrf.mxu0
      %246 = vdwg.mxu0
      %v248 = vsel %vm165, %v144, 0
      %v251 = vsel %vm165, %v145, 0
      %253 = vmatprep.subr.mxu0 0.0
      %254 = vmatpush1.msra.mxu0 0.0
      %255 = vmatprep.subr.mxu0 0.0
      %256 = vmatpush1.msra.mxu0 0.0
      %257 = vmatprep.subr.mxu0 0.0
      %258 = vmatpush1.msra.mxu0 0.0
      %259 = vmatprep.subr.mxu0 0.0
      %260 = vmatpush1.msra.mxu0 0.0
      %261 = vmatprep.subr.mxu0 0.0
      %262 = vmatpush1.msra.mxu0 0.0
      %263 = vmatprep.subr.mxu0 0.0
      %264 = vmatpush1.msra.mxu0 0.0
      %265 = vmatprep.subr.mxu0 0.0
      %266 = vmatpush1.msra.mxu0 0.0
      %267 = vmatprep.subr.mxu0 0.0
      %268 = vmatpush1.msra.mxu0 0.0
      %269 = vmatprep.subr.mxu0 0.0
      %270 = vmatpush1.msra.mxu0 %v153
      %271 = vmatprep.subr.mxu0 0.0
      %272 = vmatpush1.msra.mxu0 %v152
      %273 = vmatprep.subr.mxu0 0.0
      %274 = vmatpush1.msra.mxu0 %v151
      %275 = vmatprep.subr.mxu0 0.0
      %276 = vmatpush1.msra.mxu0 %v150
      %277 = vmatprep.subr.mxu0 0.0
      %278 = vmatpush1.msra.mxu0 %v149
      %279 = vmatprep.subr.mxu0 0.0
      %280 = vmatpush1.msra.mxu0 %v148
      %281 = vmatprep.subr.mxu0 0.0
      %282 = vmatpush1.msra.mxu0 %v147
      %283 = vmatprep.subr.mxu0 0.0
      %284 = vmatpush1.msra.mxu0 %v146
      %285 = vmatprep.subr.mxu0 0.0
      %286 = vmatpush2.msra.mxu0 0.0
      %287 = vmatprep.subr.mxu0 0.0
      %288 = vmatpush2.msra.mxu0 0.0
      %289 = vmatprep.subr.mxu0 0.0
      %290 = vmatpush2.msra.mxu0 0.0
      %291 = vmatprep.subr.mxu0 0.0
      %292 = vmatpush2.msra.mxu0 0.0
      %293 = vmatprep.subr.mxu0 0.0
      %294 = vmatpush2.msra.mxu0 0.0
      %295 = vmatprep.subr.mxu0 0.0
      %296 = vmatpush2.msra.mxu0 0.0
      %297 = vmatprep.subr.mxu0 0.0
      %298 = vmatpush2.msra.mxu0 0.0
      %299 = vmatprep.subr.mxu0 0.0
      %300 = vmatpush2.msra.mxu0 0.0
      %301 = vmatprep.subr.mxu0 0.0
      %302 = vmatpush2.msra.mxu0 0.0
      %303 = vmatprep.subr.mxu0 0.0
      %304 = vmatpush2.msra.mxu0 0.0
      %305 = vmatprep.subr.mxu0 0.0
      %306 = vmatpush2.msra.mxu0 0.0
      %307 = vmatprep.subr.mxu0 0.0
      %308 = vmatpush2.msra.mxu0 0.0
      %309 = vmatprep.subr.mxu0 0.0
      %310 = vmatpush2.msra.mxu0 0.0
      %311 = vmatprep.subr.mxu0 0.0
      %312 = vmatpush2.msra.mxu0 0.0
      %313 = vmatprep.subr.mxu0 0.0
      %314 = vmatpush2.msra.mxu0 0.0
      %315 = vmatprep.subr.mxu0 0.0
      %316 = vmatpush2.msra.mxu0 0.0
      %317 = vmatprep.mubr.f32.mxu0 0.0
      %318 = vmatmul.mubr.f32.gmra.mxu0 %v248
      %v319 = vpop.f32.mrf.mxu0
      %v320 = vadd.f32 %v239, %v319
      %v321 = vpop.f32.mrf.mxu0
      %322 = vmatprep.mubr.f32.mxu0 0.0
      %323 = vmatmul.mubr.f32.gmra.mxu0 %v251
      %v324 = vpop.f32.mrf.mxu0
      %v325 = vadd.f32 %v244, %v324
      %v326 = vpop.f32.mrf.mxu0
      %327 = vdwg.mxu0
      %v328 = vmul.f32 %v320, %v320
      %v329 = vmul.f32 %v325, %v325
      %v330 = vmul.f32 %v320, %v328
      %v331 = vmul.f32 %v325, %v329
      %v332 = vmul.f32 %v330, 0.044715
      %v333 = vmul.f32 %v331, 0.044715
      %v334 = vadd.f32 %v320, %v332
      %v335 = vadd.f32 %v325, %v333
      %v336 = vmul.f32 %v334, 0.7978846
      %v337 = vmul.f32 %v335, 0.7978846
      %v338 = vtanh.pop %v336
      %v339 = vtanh.pop %v337
      %v340 = vadd.f32 %v338, 1.0
      %v341 = vadd.f32 %v339, 1.0
      %v342 = vmul.f32 %v340, 0.5
      %v343 = vmul.f32 %v341, 0.5
      %v344 = vmul.f32 %v320, %v342
      %v345 = vmul.f32 %v325, %v343
      %vm346 = vcmask 261120
      %347 = vst.msk [vmem:[%s143] sm:$0xff] %vm346, %v344
      %348 = vst.msk [vmem:[%s143 + $0x8] sm:$0xff] %vm346, %v345
      %p349 = scmp.lt.s32.totalorder %s13, 1
      %s350 = scalar_select %p349, %s13, 1
      %s351 = smul.addr %s350, 2
      %s352 = smul.addr %s351, 8
      %s353 = scalar_lea.vmem %s2, %s352
      // Predicated region
      $region29: #{aves_forward.9} parent=27 // pred_check
        %p354 = pneg %p78
      $region30: #{aves_forward.9} parent=27 // pred_check_branch
        %356 = sbr.rel (%p354) target = $region32
      $region31: #{aves_forward.9} parent=27 // pred_region
        _
      $region32: #{aves_forward.9} parent=27 // pred_fallthru
        _
    $region28: #{aves_forward.9} parent=5 // pred_fallthru
      _
    %p357 = scmp.le.s32.totalorder 2, %s8
    // Predicated region
    $region33: #{aves_forward.9} parent=5 // pred_check
      %p358 = pneg %p357
    $region34: #{aves_forward.9} parent=5 // pred_check_branch
      %360 = sbr.rel (%p358) target = $region36
    $region35: #{aves_forward.9} parent=5 // pred_region
      %s361 = ssub.s32 %s8, 2
      // Predicated region
      $region37: #{aves_forward.9} parent=35 // pred_check
        %p362 = pneg %p84
      $region38: #{aves_forward.9} parent=35 // pred_check_branch
        %364 = sbr.rel (%p362) target = $region40
      $region39: #{aves_forward.9} parent=35 // pred_region
        %p365 = scmp.lt.s32.totalorder %s14, 1
        %s366 = scalar_select %p365, %s14, 1
        %s367 = smul.addr %s366, 2
        %s368 = smul.addr %s367, 8
        %s369 = scalar_lea.vmem %s2, %s368
      $region40: #{aves_forward.9} parent=35 // pred_fallthru
        _
    $region36: #{aves_forward.9} parent=5 // pred_fallthru
      _
  $region6: #{aves_forward.9} parent=0 // loop_footer
    %s12 = sadd.s32 1, %s8
  $region7: #{aves_forward.9} parent=0 // loop_footer_branch
    %7 = sbr.rel target = $region3
  $region8: #{aves_forward.9} parent=0 // loop_exit
    _

// kernel: aves_forward.10
$region0: #{aves_forward.10}
  #allocation0 [shape = 'u32[]', space=smem, size = 0x4, offset = 0x4, fixed_abs, tag = 'smem constant byte address 0x4 - core index']
  #allocation1 [shape = 'u32[144,128]{1,0:T(1,128)}', space=vmem, size = 0x12000, scoped, tag = 'internal scratch']
  %s0 = inlined_call_operand.vmem [shape: f32[2,16,32], index: 0, kind: input, shape index: {}]
  %s1 = inlined_call_operand.vmem [shape: f32[1,32], index: 1, kind: input, shape index: {}]
  %s2 = inlined_call_operand.vmem [shape: f32[1,32], index: 2, kind: input, shape index: {}]
  %s3 = inlined_call_operand.vmem [shape: bf16[32,32], index: 3, kind: input, shape index: {}]
  %s4 = inlined_call_operand.vmem [shape: f32[1,32], index: 4, kind: input, shape index: {}]
  %s5 = inlined_call_operand.vmem [shape: f32[2,16,32], index: 5, kind: output, shape index: {}]
  %s6 = sld [smem:[#allocation0]]
  $region53: #{aves_forward.10} parent=0
    _
  %s8 = ssub.s32 1, %s6
  %s9 = scalar_select 0, %s8, %s6
  loop: start=0, step=1, limit=4
  $region2: #{aves_forward.10} parent=0 // loop_pre_header
    _
  $region3: #{aves_forward.10} parent=0 // loop_header
    %s11 = sphi 0, %s15
    %p12 = scmp.ge.s32.totalorder %s11, 4
    %s21 = sphi 0, %s23
    %s24 = sphi 0, %s21
    %s25 = sphi 0, %s24
    %s41 = sphi 0, %s25
    %s45 = sphi 0, %s45
    %s47 = sphi 0, %s45
    %s48 = sphi 0, %s47
    %s62 = sphi 0, %s48
    %s66 = sphi 0, %s66
    %s68 = sphi 0, %s66
    %s69 = sphi 0, %s68
    %s83 = sphi 0, %s69
    %s87 = sphi 0, %s87
    %s89 = sphi 0, %s87
    %s90 = sphi 0, %s89
    %s104 = sphi 0, %s90
    %s108 = sphi 0, %s108
    %s110 = sphi 0, %s108
    %s111 = sphi 0, %s110
    %s125 = sphi 0, %s111
    %s131 = sphi 0, %s133
    %s134 = sphi 0, %s131
    %s135 = sphi 0, %s134
    %s151 = sphi 0, %s135
  $region4: #{aves_forward.10} parent=0 // loop_header_branch
    %14 = sbr.rel (%p12) target = $region8
  $region5: #{aves_forward.10} parent=0 // loop_body
    %s16 = ssub.s32 %s11, 1
    %s17 = ssub.s32 %s11, 2
    %s18 = sadd.s32 %s11, 1
    %s19 = ssub.s32 %s11, %s18
    %p20 = scmp.eq.s32.totalorder %s19, 0
    %s22 = sadd.s32 %s21, 1
    %s23 = scalar_select %p20, %s21, %s22
    %p26 = pneg %p20
    %p27 = scmp.eq.s32.totalorder %s11, 1
    %p28 = por %p26, %p27
    %p29 = scmp.ne.s32.totalorder %s21, %s24
    %p30 = scmp.eq.s32.totalorder %s11, 0
    %p31 = por %p29, %p30
    %p32 = scmp.ne.s32.totalorder %s21, %s24
    %p33 = scmp.eq.s32.totalorder %s16, 1
    %p34 = por %p32, %p33
    %p35 = scmp.ne.s32.totalorder %s24, %s25
    %p36 = scmp.eq.s32.totalorder %s16, 0
    %p37 = por %p35, %p36
    %p38 = scmp.ne.s32.totalorder %s24, %s25
    %p39 = scmp.eq.s32.totalorder %s17, 1
    %p40 = por %p38, %p39
    %p42 = scmp.ne.s32.totalorder %s25, %s41
    %p43 = scmp.eq.s32.totalorder %s17, 0
    %p44 = por %p42, %p43
    %s46 = sadd.s32 %s45, 1
    %p49 = scmp.eq.s32.totalorder %s11, 1
    %p50 = scmp.ne.s32.totalorder %s45, %s47
    %p51 = scmp.eq.s32.totalorder %s11, 0
    %p52 = por %p50, %p51
    %p53 = scmp.ne.s32.totalorder %s45, %s47
    %p54 = scmp.eq.s32.totalorder %s16, 1
    %p55 = por %p53, %p54
    %p56 = scmp.ne.s32.totalorder %s47, %s48
    %p57 = scmp.eq.s32.totalorder %s16, 0
    %p58 = por %p56, %p57
    %p59 = scmp.ne.s32.totalorder %s47, %s48
    %p60 = scmp.eq.s32.totalorder %s17, 1
    %p61 = por %p59, %p60
    %p63 = scmp.ne.s32.totalorder %s48, %s62
    %p64 = scmp.eq.s32.totalorder %s17, 0
    %p65 = por %p63, %p64
    %s67 = sadd.s32 %s66, 1
    %p70 = scmp.eq.s32.totalorder %s11, 1
    %p71 = scmp.ne.s32.totalorder %s66, %s68
    %p72 = scmp.eq.s32.totalorder %s11, 0
    %p73 = por %p71, %p72
    %p74 = scmp.ne.s32.totalorder %s66, %s68
    %p75 = scmp.eq.s32.totalorder %s16, 1
    %p76 = por %p74, %p75
    %p77 = scmp.ne.s32.totalorder %s68, %s69
    %p78 = scmp.eq.s32.totalorder %s16, 0
    %p79 = por %p77, %p78
    %p80 = scmp.ne.s32.totalorder %s68, %s69
    %p81 = scmp.eq.s32.totalorder %s17, 1
    %p82 = por %p80, %p81
    %p84 = scmp.ne.s32.totalorder %s69, %s83
    %p85 = scmp.eq.s32.totalorder %s17, 0
    %p86 = por %p84, %p85
    %s88 = sadd.s32 %s87, 1
    %p91 = scmp.eq.s32.totalorder %s11, 1
    %p92 = scmp.ne.s32.totalorder %s87, %s89
    %p93 = scmp.eq.s32.totalorder %s11, 0
    %p94 = por %p92, %p93
    %p95 = scmp.ne.s32.totalorder %s87, %s89
    %p96 = scmp.eq.s32.totalorder %s16, 1
    %p97 = por %p95, %p96
    %p98 = scmp.ne.s32.totalorder %s89, %s90
    %p99 = scmp.eq.s32.totalorder %s16, 0
    %p100 = por %p98, %p99
    %p101 = scmp.ne.s32.totalorder %s89, %s90
    %p102 = scmp.eq.s32.totalorder %s17, 1
    %p103 = por %p101, %p102
    %p105 = scmp.ne.s32.totalorder %s90, %s104
    %p106 = scmp.eq.s32.totalorder %s17, 0
    %p107 = por %p105, %p106
    %s109 = sadd.s32 %s108, 1
    %p112 = scmp.eq.s32.totalorder %s11, 1
    %p113 = scmp.ne.s32.totalorder %s108, %s110
    %p114 = scmp.eq.s32.totalorder %s11, 0
    %p115 = por %p113, %p114
    %p116 = scmp.ne.s32.totalorder %s108, %s110
    %p117 = scmp.eq.s32.totalorder %s16, 1
    %p118 = por %p116, %p117
    %p119 = scmp.ne.s32.totalorder %s110, %s111
    %p120 = scmp.eq.s32.totalorder %s16, 0
    %p121 = por %p119, %p120
    %p122 = scmp.ne.s32.totalorder %s110, %s111
    %p123 = scmp.eq.s32.totalorder %s17, 1
    %p124 = por %p122, %p123
    %p126 = scmp.ne.s32.totalorder %s111, %s125
    %p127 = scmp.eq.s32.totalorder %s17, 0
    %p128 = por %p126, %p127
    %s129 = ssub.s32 %s11, %s18
    %p130 = scmp.eq.s32.totalorder %s129, 0
    %s132 = sadd.s32 %s131, 1
    %s133 = scalar_select %p130, %s131, %s132
    %p136 = pneg %p130
    %p137 = scmp.eq.s32.totalorder %s11, 1
    %p138 = por %p136, %p137
    %p139 = scmp.ne.s32.totalorder %s131, %s134
    %p140 = scmp.eq.s32.totalorder %s11, 0
    %p141 = por %p139, %p140
    %p142 = scmp.ne.s32.totalorder %s131, %s134
    %p143 = scmp.eq.s32.totalorder %s16, 1
    %p144 = por %p142, %p143
    %p145 = scmp.ne.s32.totalorder %s134, %s135
    %p146 = scmp.eq.s32.totalorder %s16, 0
    %p147 = por %p145, %p146
    %p148 = scmp.ne.s32.totalorder %s134, %s135
    %p149 = scmp.eq.s32.totalorder %s17, 1
    %p150 = por %p148, %p149
    %p152 = scmp.ne.s32.totalorder %s135, %s151
    %p153 = scmp.eq.s32.totalorder %s17, 0
    %p154 = por %p152, %p153
    %p155 = scmp.le.s32.totalorder 1, %s11
    %p156 = scmp.lt.s32.totalorder %s11, 3
    %p157 = pnand %p155, %p156
    %p158 = pneg %p157
    // Predicated region
    $region9: #{aves_forward.10} parent=5 // pred_check
      _
    $region10: #{aves_forward.10} parent=5 // pred_check_branch
      %160 = sbr.rel (%p157) target = $region12
    $region11: #{aves_forward.10} parent=5 // pred_region
      %s161 = ssub.s32 %s11, 1
      // Predicated region
      $region13: #{aves_forward.10} parent=11 // pred_check
        %p162 = pneg %p58
      $region14: #{aves_forward.10} parent=11 // pred_check_branch
        %164 = sbr.rel (%p162) target = $region16
      $region15: #{aves_forward.10} parent=11 // pred_region
        _
      $region16: #{aves_forward.10} parent=11 // pred_fallthru
        _
      // Predicated region
      $region17: #{aves_forward.10} parent=11 // pred_check
        %p165 = pneg %p79
      $region18: #{aves_forward.10} parent=11 // pred_check_branch
        %167 = sbr.rel (%p165) target = $region20
      $region19: #{aves_forward.10} parent=11 // pred_region
        _
      $region20: #{aves_forward.10} parent=11 // pred_fallthru
        _
      // Predicated region
      $region21: #{aves_forward.10} parent=11 // pred_check
        %p168 = pneg %p100
      $region22: #{aves_forward.10} parent=11 // pred_check_branch
        %170 = sbr.rel (%p168) target = $region24
      $region23: #{aves_forward.10} parent=11 // pred_region
        _
      $region24: #{aves_forward.10} parent=11 // pred_fallthru
        _
      // Predicated region
      $region25: #{aves_forward.10} parent=11 // pred_check
        %p171 = pneg %p121
      $region26: #{aves_forward.10} parent=11 // pred_check_branch
        %173 = sbr.rel (%p171) target = $region28
      $region27: #{aves_forward.10} parent=11 // pred_region
        _
      $region28: #{aves_forward.10} parent=11 // pred_fallthru
        _
    $region12: #{aves_forward.10} parent=5 // pred_fallthru
      _
    %p174 = scmp.lt.s32.totalorder %s11, 2
    // Predicated region
    $region29: #{aves_forward.10} parent=5 // pred_check
      %p175 = pneg %p174
    $region30: #{aves_forward.10} parent=5 // pred_check_branch
      %177 = sbr.rel (%p175) target = $region32
    $region31: #{aves_forward.10} parent=5 // pred_region
      // Predicated region
      $region33: #{aves_forward.10} parent=31 // pred_check
        %p178 = pneg %p31
      $region34: #{aves_forward.10} parent=31 // pred_check_branch
        %180 = sbr.rel (%p178) target = $region36
      $region35: #{aves_forward.10} parent=31 // pred_region
        %p181 = scmp.lt.s32.totalorder %s11, 1
        %s182 = scalar_select %p181, %s11, 1
        %s183 = smul.addr %s182, 2
        %s184 = smul.addr %s183, 8
        %s185 = scalar_lea.vmem %s0, %s184
      $region36: #{aves_forward.10} parent=31 // pred_fallthru
        _
    $region32: #{aves_forward.10} parent=5 // pred_fallthru
      _
    %p186 = scmp.le.s32.totalorder 1, %s11
    %p187 = scmp.lt.s32.totalorder %s11, 3
    %p188 = pnand %p186, %p187
    %p189 = pneg %p188
    // Predicated region
    $region37: #{aves_forward.10} parent=5 // pred_check
      _
    $region38: #{aves_forward.10} parent=5 // pred_check_branch
      %191 = sbr.rel (%p188) target = $region40
    $region39: #{aves_forward.10} parent=5 // pred_region
      %s192 = ssub.s32 %s11, 1
      %p193 = scmp.lt.s32.totalorder %s16, 1
      %s194 = scalar_select %p193, %s16, 1
      %s195 = smul.addr %s194, 2
      %s196 = smul.addr %s195, 8
      %s197 = scalar_lea.vmem %s0, %s196
      %p198 = pneg %p37
      %p199 = pneg %p34
      %p200 = pneg %p58
      %p201 = pneg %p55
      %p202 = pneg %p79
      %p203 = pneg %p76
      %p204 = pneg %p100
      %p205 = pneg %p97
      %p206 = pneg %p121
      %p207 = pneg %p118
      %p208 = pneg %p147
      %p209 = pneg %p144
      %p210 = scmp.lt.s32.totalorder %s16, 1
      %s211 = scalar_select %p210, %s16, 1
      %s212 = smul.addr %s211, 2
      %s213 = smul.addr %s212, 8
      %s214 = scalar_lea.vmem %s5, %s213
      %p215 = scmp.lt.s32.totalorder %s16, 1
      %s216 = scalar_select %p215, %s16, 1
      %s217 = smul.addr %s216, 2
      %s218 = smul.addr %s217, 8
      %s219 = scalar_lea.vmem %s0, %s218
      %p220 = scmp.lt.s32.totalorder %s16, 1
      %s221 = scalar_select %p220, %s16, 1
      %s222 = smul.addr %s221, 2
      %s223 = smul.addr %s222, 8
      %s224 = scalar_lea.vmem %s5, %s223
      %v226 = vld [vmem:[%s219] sm:$0xff]
      %v227 = vld [vmem:[%s219 + $0x8] sm:$0xff]
      %v228 = vld [vmem:[%s1] sm:$0x1]
      %v229 = vld [vmem:[%s2] sm:$0x1]
      %vm230 = vcmask 261120
      %v231 = vsel %vm230, %v226, 0.0
      %232 = vadd.xlane.f32.xlu0 %v231
      %v233 = vpop.xlane.xlu0 %232
      %v234 = vsel %vm230, %v227, 0.0
      %235 = vadd.xlane.f32.xlu0 %v234
      %v236 = vpop.xlane.xlu0 %235
      %v237 = vrcp.pop 32.0
      %v238 = vmul.f32 %v233, %v237
      %v239 = vmul.f32 %v236, %v237
      %v240 = vsub.f32 %v226, %v238
      %v241 = vsub.f32 %v227, %v239
      %v242 = vmul.f32 %v240, %v240
      %v243 = vmul.f32 %v241, %v241
      %v244 = vsel %vm230, %v242, 0.0
      %245 = vadd.xlane.f32.xlu0 %v244
      %v246 = vpop.xlane.xlu0 %245
      %v247 = vsel %vm230, %v243, 0.0
      %248 = vadd.xlane.f32.xlu0 %v247
      %v249 = vpop.xlane.xlu0 %248
      %v250 = vmul.f32 %v246, %v237
      %v251 = vmul.f32 %v249, %v237
      %v252 = vadd.f32 %v250, 1e-05
      %v253 = vadd.f32 %v251, 1e-05
      %v254 = vrsqrt.pop %v252
      %v255 = vrsqrt.pop %v253
      %v256 = vmul.f32 %v240, %v254
      %v257 = vmul.f32 %v241, %v255
      %v259 = vlaneseq
      %v260 = vshrl.u32 %v259, 7
      %v261 = vsub.s32 0, %v260
      %v262 = vrot.slane %v228, %v261
      %v264 = vmul.f32 %v256, %v262
      %v265 = vmul.f32 %v257, %v262
      %v267 = vlaneseq
      %v268 = vshrl.u32 %v267, 7
      %v269 = vsub.s32 0, %v268
      %v270 = vrot.slane %v229, %v269
      %v272 = vadd.f32 %v264, %v270
      %v273 = vadd.f32 %v265, %v270
      %v274 = vld [vmem:[%s3] sm:$0xf]
      %v275 = vld [vmem:[%s3 + $0x4] sm:$0xf]
      %v276 = vld [vmem:[%s3 + $0x8] sm:$0xf]
      %v277 = vld [vmem:[%s3 + $0xc] sm:$0xf]
      %v278 = vpack.c.bf16 %v273, %v272
      %v279 = vld [vmem:[%s4] sm:$0x1]
      %v281 = vlaneseq
      %v282 = vshrl.u32 %v281, 7
      %v283 = vsub.s32 0, %v282
      %v284 = vrot.slane %v279, %v283
      %v290 = vunpack.c.l.b16 %v274
      %v291 = vunpack.c.l.b16 %v275
      %v292 = vunpack.c.l.b16 %v276
      %v293 = vunpack.c.l.b16 %v277
      %v294 = vpack.c.b16 %v291, %v290
      %v295 = vpack.c.b16 %v293, %v292
      %v299 = vsel %vm230, %v278, 0
      %301 = vmatprep.subr.bf16.mxu0 0
      %302 = vmatpush1.bf16.msra.mxu0 0
      %303 = vmatprep.subr.bf16.mxu0 0
      %304 = vmatpush1.bf16.msra.mxu0 0
      %305 = vmatprep.subr.bf16.mxu0 0
      %306 = vmatpush1.bf16.msra.mxu0 0
      %307 = vmatprep.subr.bf16.mxu0 0
      %308 = vmatpush1.bf16.msra.mxu0 0
      %309 = vmatprep.subr.bf16.mxu0 0
      %310 = vmatpush1.bf16.msra.mxu0 0
      %311 = vmatprep.subr.bf16.mxu0 0
      %312 = vmatpush1.bf16.msra.mxu0 0
      %313 = vmatprep.subr.bf16.mxu0 0
      %314 = vmatpush1.bf16.msra.mxu0 %v295
      %315 = vmatprep.subr.bf16.mxu0 0
      %316 = vmatpush1.bf16.msra.mxu0 %v294
      %317 = vmatprep.subr.bf16.mxu0 0
      %318 = vmatpush2.bf16.msra.mxu0 0
      %319 = vmatprep.subr.bf16.mxu0 0
      %320 = vmatpush2.bf16.msra.mxu0 0
      %321 = vmatprep.subr.bf16.mxu0 0
      %322 = vmatpush2.bf16.msra.mxu0 0
      %323 = vmatprep.subr.bf16.mxu0 0
      %324 = vmatpush2.bf16.msra.mxu0 0
      %325 = vmatprep.subr.bf16.mxu0 0
      %326 = vmatpush2.bf16.msra.mxu0 0
      %327 = vmatprep.subr.bf16.mxu0 0
      %328 = vmatpush2.bf16.msra.mxu0 0
      %329 = vmatprep.subr.bf16.mxu0 0
      %330 = vmatpush2.bf16.msra.mxu0 0
      %331 = vmatprep.subr.bf16.mxu0 0
      %332 = vmatpush2.bf16.msra.mxu0 0
      %333 = vmatprep.mubr.bf16.mxu0 0
      %334 = vmatmul.mubr.bf16.gmra.mxu0 %v299
      %v335 = vpop.f32.mrf.mxu0
      %v336 = vadd.f32 %v284, %v335
      %v337 = vpop.f32.mrf.mxu0
      %v338 = vpop.f32.mrf.mxu0
      %v339 = vadd.f32 %v284, %v338
      %v340 = vpop.f32.mrf.mxu0
      %341 = vdwg.mxu0
      %342 = vst.msk [vmem:[%s224] sm:$0xff] %vm230, %v336
      %343 = vst.msk [vmem:[%s224 + $0x8] sm:$0xff] %vm230, %v339
      %p344 = scmp.lt.s32.totalorder %s16, 1
      %s345 = scalar_select %p344, %s16, 1
      %s346 = smul.addr %s345, 2
      %s347 = smul.addr %s346, 8
      %s348 = scalar_lea.vmem %s5, %s347
      // Predicated region
      $region41: #{aves_forward.10} parent=39 // pred_check
        %p349 = pneg %p144
      $region42: #{aves_forward.10} parent=39 // pred_check_branch
        %351 = sbr.rel (%p349) target = $region44
      $region43: #{aves_forward.10} parent=39 // pred_region
        _
      $region44: #{aves_forward.10} parent=39 // pred_fallthru
        _
    $region40: #{aves_forward.10} parent=5 // pred_fallthru
      _
    %p352 = scmp.le.s32.totalorder 2, %s11
    // Predicated region
    $region45: #{aves_forward.10} parent=5 // pred_check
      %p353 = pneg %p352
    $region46: #{aves_forward.10} parent=5 // pred_check_branch
      %355 = sbr.rel (%p353) target = $region48
    $region47: #{aves_forward.10} parent=5 // pred_region
      %s356 = ssub.s32 %s11, 2
      // Predicated region
      $region49: #{aves_forward.10} parent=47 // pred_check
        %p357 = pneg %p150
      $region50: #{aves_forward.10} parent=47 // pred_check_branch
        %359 = sbr.rel (%p357) target = $region52
      $region51: #{aves_forward.10} parent=47 // pred_region
        %p360 = scmp.lt.s32.totalorder %s17, 1
        %s361 = scalar_select %p360, %s17, 1
        %s362 = smul.addr %s361, 2
        %s363 = smul.addr %s362, 8
        %s364 = scalar_lea.vmem %s5, %s363
      $region52: #{aves_forward.10} parent=47 // pred_fallthru
        _
    $region48: #{aves_forward.10} parent=5 // pred_fallthru
      _
  $region6: #{aves_forward.10} parent=0 // loop_footer
    %s15 = sadd.s32 1, %s11
  $region7: #{aves_forward.10} parent=0 // loop_footer_branch
    %10 = sbr.rel target = $region3
  $region8: #{aves_forward.10} parent=0 // loop_exit
    _

// kernel: aves_forward.13
$region0: #{aves_forward.13}
  #allocation0 [shape = 'u32[]', space=smem, size = 0x4, offset = 0x4, fixed_abs, tag = 'smem constant byte address 0x4 - core index']
  #allocation1 [shape = 'u32[144,128]{1,0:T(1,128)}', space=vmem, size = 0x12000, scoped, tag = 'internal scratch']
  %s0 = inlined_call_operand.vmem [shape: f32[2,16,32], index: 0, kind: input, shape index: {}]
  %s1 = inlined_call_operand.hbm [shape: f32[2,32], index: 1, kind: output, shape index: {}]
  %s2 = sld [smem:[#allocation0]]
  $region14: #{aves_forward.13} parent=0
    _
  %s4 = ssub.s32 1, %s2
  %s5 = scalar_select 0, %s4, %s2
  $region1: #{aves_forward.13} parent=0
    #allocation2 [shape = 'u8[1024]{0}', space=vmem, size = 0x400, scoped, tag = 'output window, operand 0, single buffered']
    #allocation3 [shape = 's32[1]{0}', space=sflag, size = 0x4, scoped, tag = 'scoped memory for aves_forward.13']
    %6 = vsyncpa [#allocation3], 0
    // Predicated region
    $region2: #{aves_forward.13} parent=1 // pred_check
      _
    $region3: #{aves_forward.13} parent=1 // pred_check_branch
      %8 = sbr.rel (0) target = $region5
    $region4: #{aves_forward.13} parent=1 // pred_region
      _
    $region5: #{aves_forward.13} parent=1 // pred_fallthru
      _
    %v9 = vld [vmem:[%s0] sm:$0xff]
    %v10 = vld [vmem:[%s0 + $0x8] sm:$0xff]
    %vm11 = vcmask 261120
    %v12 = vsel %vm11, %v9, 0.0
    %v13 = vsel %vm11, %v10, 0.0
    %v14 = vadd.f32 %v12, %v13
    %v15 = vrot.slane %v14, 4
    %v16 = vadd.f32 %v14, %v15
    %v17 = vrot.slane %v16, 2
    %v18 = vadd.f32 %v16, %v17
    %v19 = vrot.slane %v18, 1
    %v20 = vadd.f32 %v18, %v19
    %v21 = vrcp.pop 16.0
    %v22 = vmul.f32 %v20, %v21
    %s23 = scalar_lea.vmem %s0, 16
    %v24 = vld [vmem:[%s23] sm:$0xff]
    %v25 = vld [vmem:[%s23 + $0x8] sm:$0xff]
    %v26 = vsel %vm11, %v24, 0.0
    %v27 = vsel %vm11, %v25, 0.0
    %v28 = vadd.f32 %v26, %v27
    %v29 = vrot.slane %v28, 4
    %v30 = vadd.f32 %v28, %v29
    %v31 = vrot.slane %v30, 2
    %v32 = vadd.f32 %v30, %v31
    %v33 = vrot.slane %v32, 1
    %v34 = vadd.f32 %v32, %v33
    %v35 = vmul.f32 %v34, %v21
    %vm36 = vcmask 1040384
    %v37 = vsel %vm36, %v22, %v35
    %vm38 = vcmask 254976
    %39 = vst.msk [vmem:[#allocation2] sm:$0x3] %vm38, %v37
    // Predicated region
    $region6: #{aves_forward.13} parent=1 // pred_check
      _
    $region7: #{aves_forward.13} parent=1 // pred_check_branch
      %41 = sbr.rel (0) target = $region9
    $region8: #{aves_forward.13} parent=1 // pred_region
      %s43 = ssub.s32 32, 32
      %44 = vsyncadd [#allocation3], %s43
      %s46 = sshll.u32 [#allocation2], 4
      %s47 = int_to_ptr.vmem [resolvable:$true] %s46
      %49 = dma.vmem_to_hbm [thread:$0]  %s47, 32, %s1, [#allocation3]
    $region9: #{aves_forward.13} parent=1 // pred_fallthru
      _
    // Predicated region
    $region10: #{aves_forward.13} parent=1 // pred_check
      _
    $region11: #{aves_forward.13} parent=1 // pred_check_branch
      %51 = sbr.rel (0) target = $region13
    $region12: #{aves_forward.13} parent=1 // pred_region
      %52 = dma.done [#allocation3], 32
    $region13: #{aves_forward.13} parent=1 // pred_fallthru
      _
    %53 = vsyncpa [#allocation3], 1

// kernel: aves_forward.11
$region0: #{aves_forward.11}
  #allocation0 [shape = 'u32[]', space=smem, size = 0x4, offset = 0x4, fixed_abs, tag = 'smem constant byte address 0x4 - core index']
  #allocation1 [shape = 'u32[144,128]{1,0:T(1,128)}', space=vmem, size = 0x12000, scoped, tag = 'internal scratch']
  %s0 = inlined_call_operand.vmem [shape: f32[2,16,32], index: 0, kind: input, shape index: {}]
  %s1 = inlined_call_operand.vmem [shape: bf16[32,96], index: 1, kind: input, shape index: {}]
  %s2 = inlined_call_operand.vmem [shape: f32[1,96], index: 2, kind: input, shape index: {}]
  %s3 = inlined_call_operand.vmem [shape: bf16[32,32], index: 3, kind: input, shape index: {}]
  %s4 = inlined_call_operand.vmem [shape: f32[1,32], index: 4, kind: input, shape index: {}]
  %s5 = inlined_call_operand.vmem [shape: f32[1,32], index: 5, kind: input, shape index: {}]
  %s6 = inlined_call_operand.vmem [shape: f32[1,32], index: 6, kind: input, shape index: {}]
  %s7 = inlined_call_operand.vmem [shape: bf16[32,64], index: 7, kind: input, shape index: {}]
  %s8 = inlined_call_operand.vmem [shape: f32[1,64], index: 8, kind: input, shape index: {}]
  %s9 = inlined_call_operand.vmem [shape: bf16[64,32], index: 9, kind: input, shape index: {}]
  %s10 = inlined_call_operand.vmem [shape: f32[1,32], index: 10, kind: input, shape index: {}]
  %s11 = inlined_call_operand.vmem [shape: f32[1,32], index: 11, kind: input, shape index: {}]
  %s12 = inlined_call_operand.vmem [shape: f32[1,32], index: 12, kind: input, shape index: {}]
  %s13 = inlined_call_operand.vmem [shape: f32[2,16,32], index: 13, kind: output, shape index: {}]
  %s14 = sld [smem:[#allocation0]]
  $region85: #{aves_forward.11} parent=0
    _
  %s16 = ssub.s32 1, %s14
  %s17 = scalar_select 0, %s16, %s14
  loop: start=0, step=1, limit=4
  $region2: #{aves_forward.11} parent=0 // loop_pre_header
    _
  $region3: #{aves_forward.11} parent=0 // loop_header
    %s19 = sphi 0, %s23
    %p20 = scmp.ge.s32.totalorder %s19, 4
    %s29 = sphi 0, %s31
    %s32 = sphi 0, %s29
    %s33 = sphi 0, %s32
    %s49 = sphi 0, %s33
    %s53 = sphi 0, %s53
    %s55 = sphi 0, %s53
    %s56 = sphi 0, %s55
    %s70 = sphi 0, %s56
    %s74 = sphi 0, %s74
    %s76 = sphi 0, %s74
    %s77 = sphi 0, %s76
    %s91 = sphi 0, %s77
    %s95 = sphi 0, %s95
    %s97 = sphi 0, %s95
    %s98 = sphi 0, %s97
    %s112 = sphi 0, %s98
    %s116 = sphi 0, %s116
    %s118 = sphi 0, %s116
    %s119 = sphi 0, %s118
    %s133 = sphi 0, %s119
    %s137 = sphi 0, %s137
    %s139 = sphi 0, %s137
    %s140 = sphi 0, %s139
    %s154 = sphi 0, %s140
    %s158 = sphi 0, %s158
    %s160 = sphi 0, %s158
    %s161 = sphi 0, %s160
    %s175 = sphi 0, %s161
    %s179 = sphi 0, %s179
    %s181 = sphi 0, %s179
    %s182 = sphi 0, %s181
    %s196 = sphi 0, %s182
    %s200 = sphi 0, %s200
    %s202 = sphi 0, %s200
    %s203 = sphi 0, %s202
    %s217 = sphi 0, %s203
    %s221 = sphi 0, %s221
    %s223 = sphi 0, %s221
    %s224 = sphi 0, %s223
    %s238 = sphi 0, %s224
    %s242 = sphi 0, %s242
    %s244 = sphi 0, %s242
    %s245 = sphi 0, %s244
    %s259 = sphi 0, %s245
    %s263 = sphi 0, %s263
    %s265 = sphi 0, %s263
    %s266 = sphi 0, %s265
    %s280 = sphi 0, %s266
    %s284 = sphi 0, %s284
    %s286 = sphi 0, %s284
    %s287 = sphi 0, %s286
    %s301 = sphi 0, %s287
    %s307 = sphi 0, %s309
    %s310 = sphi 0, %s307
    %s311 = sphi 0, %s310
    %s327 = sphi 0, %s311
  $region4: #{aves_forward.11} parent=0 // loop_header_branch
    %22 = sbr.rel (%p20) target = $region8
  $region5: #{aves_forward.11} parent=0 // loop_body
    %s24 = ssub.s32 %s19, 1
    %s25 = ssub.s32 %s19, 2
    %s26 = sadd.s32 %s19, 1
    %s27 = ssub.s32 %s19, %s26
    %p28 = scmp.eq.s32.totalorder %s27, 0
    %s30 = sadd.s32 %s29, 1
    %s31 = scalar_select %p28, %s29, %s30
    %p34 = pneg %p28
    %p35 = scmp.eq.s32.totalorder %s19, 1
    %p36 = por %p34, %p35
    %p37 = scmp.ne.s32.totalorder %s29, %s32
    %p38 = scmp.eq.s32.totalorder %s19, 0
    %p39 = por %p37, %p38
    %p40 = scmp.ne.s32.totalorder %s29, %s32
    %p41 = scmp.eq.s32.totalorder %s24, 1
    %p42 = por %p40, %p41
    %p43 = scmp.ne.s32.totalorder %s32, %s33
    %p44 = scmp.eq.s32.totalorder %s24, 0
    %p45 = por %p43, %p44
    %p46 = scmp.ne.s32.totalorder %s32, %s33
    %p47 = scmp.eq.s32.totalorder %s25, 1
    %p48 = por %p46, %p47
    %p50 = scmp.ne.s32.totalorder %s33, %s49
    %p51 = scmp.eq.s32.totalorder %s25, 0
    %p52 = por %p50, %p51
    %s54 = sadd.s32 %s53, 1
    %p57 = scmp.eq.s32.totalorder %s19, 1
    %p58 = scmp.ne.s32.totalorder %s53, %s55
    %p59 = scmp.eq.s32.totalorder %s19, 0
    %p60 = por %p58, %p59
    %p61 = scmp.ne.s32.totalorder %s53, %s55
    %p62 = scmp.eq.s32.totalorder %s24, 1
    %p63 = por %p61, %p62
    %p64 = scmp.ne.s32.totalorder %s55, %s56
    %p65 = scmp.eq.s32.totalorder %s24, 0
    %p66 = por %p64, %p65
    %p67 = scmp.ne.s32.totalorder %s55, %s56
    %p68 = scmp.eq.s32.totalorder %s25, 1
    %p69 = por %p67, %p68
    %p71 = scmp.ne.s32.totalorder %s56, %s70
    %p72 = scmp.eq.s32.totalorder %s25, 0
    %p73 = por %p71, %p72
    %s75 = sadd.s32 %s74, 1
    %p78 = scmp.eq.s32.totalorder %s19, 1
    %p79 = scmp.ne.s32.totalorder %s74, %s76
    %p80 = scmp.eq.s32.totalorder %s19, 0
    %p81 = por %p79, %p80
    %p82 = scmp.ne.s32.totalorder %s74, %s76
    %p83 = scmp.eq.s32.totalorder %s24, 1
    %p84 = por %p82, %p83
    %p85 = scmp.ne.s32.totalorder %s76, %s77
    %p86 = scmp.eq.s32.totalorder %s24, 0
    %p87 = por %p85, %p86
    %p88 = scmp.ne.s32.totalorder %s76, %s77
    %p89 = scmp.eq.s32.totalorder %s25, 1
    %p90 = por %p88, %p89
    %p92 = scmp.ne.s32.totalorder %s77, %s91
    %p93 = scmp.eq.s32.totalorder %s25, 0
    %p94 = por %p92, %p93
    %s96 = sadd.s32 %s95, 1
    %p99 = scmp.eq.s32.totalorder %s19, 1
    %p100 = scmp.ne.s32.totalorder %s95, %s97
    %p101 = scmp.eq.s32.totalorder %s19, 0
    %p102 = por %p100, %p101
    %p103 = scmp.ne.s32.totalorder %s95, %s97
    %p104 = scmp.eq.s32.totalorder %s24, 1
    %p105 = por %p103, %p104
    %p106 = scmp.ne.s32.totalorder %s97, %s98
    %p107 = scmp.eq.s32.totalorder %s24, 0
    %p108 = por %p106, %p107
    %p109 = scmp.ne.s32.totalorder %s97, %s98
    %p110 = scmp.eq.s32.totalorder %s25, 1
    %p111 = por %p109, %p110
    %p113 = scmp.ne.s32.totalorder %s98, %s112
    %p114 = scmp.eq.s32.totalorder %s25, 0
    %p115 = por %p113, %p114
    %s117 = sadd.s32 %s116, 1
    %p120 = scmp.eq.s32.totalorder %s19, 1
    %p121 = scmp.ne.s32.totalorder %s116, %s118
    %p122 = scmp.eq.s32.totalorder %s19, 0
    %p123 = por %p121, %p122
    %p124 = scmp.ne.s32.totalorder %s116, %s118
    %p125 = scmp.eq.s32.totalorder %s24, 1
    %p126 = por %p124, %p125
    %p127 = scmp.ne.s32.totalorder %s118, %s119
    %p128 = scmp.eq.s32.totalorder %s24, 0
    %p129 = por %p127, %p128
    %p130 = scmp.ne.s32.totalorder %s118, %s119
    %p131 = scmp.eq.s32.totalorder %s25, 1
    %p132 = por %p130, %p131
    %p134 = scmp.ne.s32.totalorder %s119, %s133
    %p135 = scmp.eq.s32.totalorder %s25, 0
    %p136 = por %p134, %p135
    %s138 = sadd.s32 %s137, 1
    %p141 = scmp.eq.s32.totalorder %s19, 1
    %p142 = scmp.ne.s32.totalorder %s137, %s139
    %p143 = scmp.eq.s32.totalorder %s19, 0
    %p144 = por %p142, %p143
    %p145 = scmp.ne.s32.totalorder %s137, %s139
    %p146 = scmp.eq.s32.totalorder %s24, 1
    %p147 = por %p145, %p146
    %p148 = scmp.ne.s32.totalorder %s139, %s140
    %p149 = scmp.eq.s32.totalorder %s24, 0
    %p150 = por %p148, %p149
    %p151 = scmp.ne.s32.totalorder %s139, %s140
    %p152 = scmp.eq.s32.totalorder %s25, 1
    %p153 = por %p151, %p152
    %p155 = scmp.ne.s32.totalorder %s140, %s154
    %p156 = scmp.eq.s32.totalorder %s25, 0
    %p157 = por %p155, %p156
    %s159 = sadd.s32 %s158, 1
    %p162 = scmp.eq.s32.totalorder %s19, 1
    %p163 = scmp.ne.s32.totalorder %s158, %s160
    %p164 = scmp.eq.s32.totalorder %s19, 0
    %p165 = por %p163, %p164
    %p166 = scmp.ne.s32.totalorder %s158, %s160
    %p167 = scmp.eq.s32.totalorder %s24, 1
    %p168 = por %p166, %p167
    %p169 = scmp.ne.s32.totalorder %s160, %s161
    %p170 = scmp.eq.s32.totalorder %s24, 0
    %p171 = por %p169, %p170
    %p172 = scmp.ne.s32.totalorder %s160, %s161
    %p173 = scmp.eq.s32.totalorder %s25, 1
    %p174 = por %p172, %p173
    %p176 = scmp.ne.s32.totalorder %s161, %s175
    %p177 = scmp.eq.s32.totalorder %s25, 0
    %p178 = por %p176, %p177
    %s180 = sadd.s32 %s179, 1
    %p183 = scmp.eq.s32.totalorder %s19, 1
    %p184 = scmp.ne.s32.totalorder %s179, %s181
    %p185 = scmp.eq.s32.totalorder %s19, 0
    %p186 = por %p184, %p185
    %p187 = scmp.ne.s32.totalorder %s179, %s181
    %p188 = scmp.eq.s32.totalorder %s24, 1
    %p189 = por %p187, %p188
    %p190 = scmp.ne.s32.totalorder %s181, %s182
    %p191 = scmp.eq.s32.totalorder %s24, 0
    %p192 = por %p190, %p191
    %p193 = scmp.ne.s32.totalorder %s181, %s182
    %p194 = scmp.eq.s32.totalorder %s25, 1
    %p195 = por %p193, %p194
    %p197 = scmp.ne.s32.totalorder %s182, %s196
    %p198 = scmp.eq.s32.totalorder %s25, 0
    %p199 = por %p197, %p198
    %s201 = sadd.s32 %s200, 1
    %p204 = scmp.eq.s32.totalorder %s19, 1
    %p205 = scmp.ne.s32.totalorder %s200, %s202
    %p206 = scmp.eq.s32.totalorder %s19, 0
    %p207 = por %p205, %p206
    %p208 = scmp.ne.s32.totalorder %s200, %s202
    %p209 = scmp.eq.s32.totalorder %s24, 1
    %p210 = por %p208, %p209
    %p211 = scmp.ne.s32.totalorder %s202, %s203
    %p212 = scmp.eq.s32.totalorder %s24, 0
    %p213 = por %p211, %p212
    %p214 = scmp.ne.s32.totalorder %s202, %s203
    %p215 = scmp.eq.s32.totalorder %s25, 1
    %p216 = por %p214, %p215
    %p218 = scmp.ne.s32.totalorder %s203, %s217
    %p219 = scmp.eq.s32.totalorder %s25, 0
    %p220 = por %p218, %p219
    %s222 = sadd.s32 %s221, 1
    %p225 = scmp.eq.s32.totalorder %s19, 1
    %p226 = scmp.ne.s32.totalorder %s221, %s223
    %p227 = scmp.eq.s32.totalorder %s19, 0
    %p228 = por %p226, %p227
    %p229 = scmp.ne.s32.totalorder %s221, %s223
    %p230 = scmp.eq.s32.totalorder %s24, 1
    %p231 = por %p229, %p230
    %p232 = scmp.ne.s32.totalorder %s223, %s224
    %p233 = scmp.eq.s32.totalorder %s24, 0
    %p234 = por %p232, %p233
    %p235 = scmp.ne.s32.totalorder %s223, %s224
    %p236 = scmp.eq.s32.totalorder %s25, 1
    %p237 = por %p235, %p236
    %p239 = scmp.ne.s32.totalorder %s224, %s238
    %p240 = scmp.eq.s32.totalorder %s25, 0
    %p241 = por %p239, %p240
    %s243 = sadd.s32 %s242, 1
    %p246 = scmp.eq.s32.totalorder %s19, 1
    %p247 = scmp.ne.s32.totalorder %s242, %s244
    %p248 = scmp.eq.s32.totalorder %s19, 0
    %p249 = por %p247, %p248
    %p250 = scmp.ne.s32.totalorder %s242, %s244
    %p251 = scmp.eq.s32.totalorder %s24, 1
    %p252 = por %p250, %p251
    %p253 = scmp.ne.s32.totalorder %s244, %s245
    %p254 = scmp.eq.s32.totalorder %s24, 0
    %p255 = por %p253, %p254
    %p256 = scmp.ne.s32.totalorder %s244, %s245
    %p257 = scmp.eq.s32.totalorder %s25, 1
    %p258 = por %p256, %p257
    %p260 = scmp.ne.s32.totalorder %s245, %s259
    %p261 = scmp.eq.s32.totalorder %s25, 0
    %p262 = por %p260, %p261
    %s264 = sadd.s32 %s263, 1
    %p267 = scmp.eq.s32.totalorder %s19, 1
    %p268 = scmp.ne.s32.totalorder %s263, %s265
    %p269 = scmp.eq.s32.totalorder %s19, 0
    %p270 = por %p268, %p269
    %p271 = scmp.ne.s32.totalorder %s263, %s265
    %p272 = scmp.eq.s32.totalorder %s24, 1
    %p273 = por %p271, %p272
    %p274 = scmp.ne.s32.totalorder %s265, %s266
    %p275 = scmp.eq.s32.totalorder %s24, 0
    %p276 = por %p274, %p275
    %p277 = scmp.ne.s32.totalorder %s265, %s266
    %p278 = scmp.eq.s32.totalorder %s25, 1
    %p279 = por %p277, %p278
    %p281 = scmp.ne.s32.totalorder %s266, %s280
    %p282 = scmp.eq.s32.totalorder %s25, 0
    %p283 = por %p281, %p282
    %s285 = sadd.s32 %s284, 1
    %p288 = scmp.eq.s32.totalorder %s19, 1
    %p289 = scmp.ne.s32.totalorder %s284, %s286
    %p290 = scmp.eq.s32.totalorder %s19, 0
    %p291 = por %p289, %p290
    %p292 = scmp.ne.s32.totalorder %s284, %s286
    %p293 = scmp.eq.s32.totalorder %s24, 1
    %p294 = por %p292, %p293
    %p295 = scmp.ne.s32.totalorder %s286, %s287
    %p296 = scmp.eq.s32.totalorder %s24, 0
    %p297 = por %p295, %p296
    %p298 = scmp.ne.s32.totalorder %s286, %s287
    %p299 = scmp.eq.s32.totalorder %s25, 1
    %p300 = por %p298, %p299
    %p302 = scmp.ne.s32.totalorder %s287, %s301
    %p303 = scmp.eq.s32.totalorder %s25, 0
    %p304 = por %p302, %p303
    %s305 = ssub.s32 %s19, %s26
    %p306 = scmp.eq.s32.totalorder %s305, 0
    %s308 = sadd.s32 %s307, 1
    %s309 = scalar_select %p306, %s307, %s308
    %p312 = pneg %p306
    %p313 = scmp.eq.s32.totalorder %s19, 1
    %p314 = por %p312, %p313
    %p315 = scmp.ne.s32.totalorder %s307, %s310
    %p316 = scmp.eq.s32.totalorder %s19, 0
    %p317 = por %p315, %p316
    %p318 = scmp.ne.s32.totalorder %s307, %s310
    %p319 = scmp.eq.s32.totalorder %s24, 1
    %p320 = por %p318, %p319
    %p321 = scmp.ne.s32.totalorder %s310, %s311
    %p322 = scmp.eq.s32.totalorder %s24, 0
    %p323 = por %p321, %p322
    %p324 = scmp.ne.s32.totalorder %s310, %s311
    %p325 = scmp.eq.s32.totalorder %s25, 1
    %p326 = por %p324, %p325
    %p328 = scmp.ne.s32.totalorder %s311, %s327
    %p329 = scmp.eq.s32.totalorder %s25, 0
    %p330 = por %p328, %p329
    %p331 = scmp.le.s32.totalorder 1, %s19
    %p332 = scmp.lt.s32.totalorder %s19, 3
    %p333 = pnand %p331, %p332
    %p334 = pneg %p333
    // Predicated region
    $region9: #{aves_forward.11} parent=5 // pred_check
      _
    $region10: #{aves_forward.11} parent=5 // pred_check_branch
      %336 = sbr.rel (%p333) target = $region12
    $region11: #{aves_forward.11} parent=5 // pred_region
      %s337 = ssub.s32 %s19, 1
      // Predicated region
      $region13: #{aves_forward.11} parent=11 // pred_check
        %p338 = pneg %p66
      $region14: #{aves_forward.11} parent=11 // pred_check_branch
        %340 = sbr.rel (%p338) target = $region16
      $region15: #{aves_forward.11} parent=11 // pred_region
        _
      $region16: #{aves_forward.11} parent=11 // pred_fallthru
        _
      // Predicated region
      $region17: #{aves_forward.11} parent=11 // pred_check
        %p341 = pneg %p87
      $region18: #{aves_forward.11} parent=11 // pred_check_branch
        %343 = sbr.rel (%p341) target = $region20
      $region19: #{aves_forward.11} parent=11 // pred_region
        _
      $region20: #{aves_forward.11} parent=11 // pred_fallthru
        _
      // Predicated region
      $region21: #{aves_forward.11} parent=11 // pred_check
        %p344 = pneg %p108
      $region22: #{aves_forward.11} parent=11 // pred_check_branch
        %346 = sbr.rel (%p344) target = $region24
      $region23: #{aves_forward.11} parent=11 // pred_region
        _
      $region24: #{aves_forward.11} parent=11 // pred_fallthru
        _
      // Predicated region
      $region25: #{aves_forward.11} parent=11 // pred_check
        %p347 = pneg %p129
      $region26: #{aves_forward.11} parent=11 // pred_check_branch
        %349 = sbr.rel (%p347) target = $region28
      $region27: #{aves_forward.11} parent=11 // pred_region
        _
      $region28: #{aves_forward.11} parent=11 // pred_fallthru
        _
      // Predicated region
      $region29: #{aves_forward.11} parent=11 // pred_check
        %p350 = pneg %p150
      $region30: #{aves_forward.11} parent=11 // pred_check_branch
        %352 = sbr.rel (%p350) target = $region32
      $region31: #{aves_forward.11} parent=11 // pred_region
        _
      $region32: #{aves_forward.11} parent=11 // pred_fallthru
        _
      // Predicated region
      $region33: #{aves_forward.11} parent=11 // pred_check
        %p353 = pneg %p171
      $region34: #{aves_forward.11} parent=11 // pred_check_branch
        %355 = sbr.rel (%p353) target = $region36
      $region35: #{aves_forward.11} parent=11 // pred_region
        _
      $region36: #{aves_forward.11} parent=11 // pred_fallthru
        _
      // Predicated region
      $region37: #{aves_forward.11} parent=11 // pred_check
        %p356 = pneg %p192
      $region38: #{aves_forward.11} parent=11 // pred_check_branch
        %358 = sbr.rel (%p356) target = $region40
      $region39: #{aves_forward.11} parent=11 // pred_region
        _
      $region40: #{aves_forward.11} parent=11 // pred_fallthru
        _
      // Predicated region
      $region41: #{aves_forward.11} parent=11 // pred_check
        %p359 = pneg %p213
      $region42: #{aves_forward.11} parent=11 // pred_check_branch
        %361 = sbr.rel (%p359) target = $region44
      $region43: #{aves_forward.11} parent=11 // pred_region
        _
      $region44: #{aves_forward.11} parent=11 // pred_fallthru
        _
      // Predicated region
      $region45: #{aves_forward.11} parent=11 // pred_check
        %p362 = pneg %p234
      $region46: #{aves_forward.11} parent=11 // pred_check_branch
        %364 = sbr.rel (%p362) target = $region48
      $region47: #{aves_forward.11} parent=11 // pred_region
        _
      $region48: #{aves_forward.11} parent=11 // pred_fallthru
        _
      // Predicated region
      $region49: #{aves_forward.11} parent=11 // pred_check
        %p365 = pneg %p255
      $region50: #{aves_forward.11} parent=11 // pred_check_branch
        %367 = sbr.rel (%p365) target = $region52
      $region51: #{aves_forward.11} parent=11 // pred_region
        _
      $region52: #{aves_forward.11} parent=11 // pred_fallthru
        _
      // Predicated region
      $region53: #{aves_forward.11} parent=11 // pred_check
        %p368 = pneg %p276
      $region54: #{aves_forward.11} parent=11 // pred_check_branch
        %370 = sbr.rel (%p368) target = $region56
      $region55: #{aves_forward.11} parent=11 // pred_region
        _
      $region56: #{aves_forward.11} parent=11 // pred_fallthru
        _
      // Predicated region
      $region57: #{aves_forward.11} parent=11 // pred_check
        %p371 = pneg %p297
      $region58: #{aves_forward.11} parent=11 // pred_check_branch
        %373 = sbr.rel (%p371) target = $region60
      $region59: #{aves_forward.11} parent=11 // pred_region
        _
      $region60: #{aves_forward.11} parent=11 // pred_fallthru
        _
    $region12: #{aves_forward.11} parent=5 // pred_fallthru
      _
    %p374 = scmp.lt.s32.totalorder %s19, 2
    // Predicated region
    $region61: #{aves_forward.11} parent=5 // pred_check
      %p375 = pneg %p374
    $region62: #{aves_forward.11} parent=5 // pred_check_branch
      %377 = sbr.rel (%p375) target = $region64
    $region63: #{aves_forward.11} parent=5 // pred_region
      // Predicated region
      $region65: #{aves_forward.11} parent=63 // pred_check
        %p378 = pneg %p39
      $region66: #{aves_forward.11} parent=63 // pred_check_branch
        %380 = sbr.rel (%p378) target = $region68
      $region67: #{aves_forward.11} parent=63 // pred_region
        %p381 = scmp.lt.s32.totalorder %s19, 1
        %s382 = scalar_select %p381, %s19, 1
        %s383 = smul.addr %s382, 2
        %s384 = smul.addr %s383, 8
        %s385 = scalar_lea.vmem %s0, %s384
      $region68: #{aves_forward.11} parent=63 // pred_fallthru
        _
    $region64: #{aves_forward.11} parent=5 // pred_fallthru
      _
    %p386 = scmp.le.s32.totalorder 1, %s19
    %p387 = scmp.lt.s32.totalorder %s19, 3
    %p388 = pnand %p386, %p387
    %p389 = pneg %p388
    // Predicated region
    $region69: #{aves_forward.11} parent=5 // pred_check
      _
    $region70: #{aves_forward.11} parent=5 // pred_check_branch
      %391 = sbr.rel (%p388) target = $region72
    $region71: #{aves_forward.11} parent=5 // pred_region
      %s392 = ssub.s32 %s19, 1
      %p393 = scmp.lt.s32.totalorder %s24, 1
      %s394 = scalar_select %p393, %s24, 1
      %s395 = smul.addr %s394, 2
      %s396 = smul.addr %s395, 8
      %s397 = scalar_lea.vmem %s0, %s396
      %p398 = pneg %p45
      %p399 = pneg %p42
      %p400 = pneg %p66
      %p401 = pneg %p63
      %p402 = pneg %p87
      %p403 = pneg %p84
      %p404 = pneg %p108
      %p405 = pneg %p105
      %p406 = pneg %p129
      %p407 = pneg %p126
      %p408 = pneg %p150
      %p409 = pneg %p147
      %p410 = pneg %p171
      %p411 = pneg %p168
      %p412 = pneg %p192
      %p413 = pneg %p189
      %p414 = pneg %p213
      %p415 = pneg %p210
      %p416 = pneg %p234
      %p417 = pneg %p231
      %p418 = pneg %p255
      %p419 = pneg %p252
      %p420 = pneg %p276
      %p421 = pneg %p273
      %p422 = pneg %p297
      %p423 = pneg %p294
      %p424 = pneg %p323
      %p425 = pneg %p320
      %p426 = scmp.lt.s32.totalorder %s24, 1
      %s427 = scalar_select %p426, %s24, 1
      %s428 = smul.addr %s427, 2
      %s429 = smul.addr %s428, 8
      %s430 = scalar_lea.vmem %s13, %s429
      %p431 = scmp.lt.s32.totalorder %s24, 1
      %s432 = scalar_select %p431, %s24, 1
      %s433 = smul.addr %s432, 2
      %s434 = smul.addr %s433, 8
      %s435 = scalar_lea.vmem %s0, %s434
      %p436 = scmp.lt.s32.totalorder %s24, 1
      %s437 = scalar_select %p436, %s24, 1
      %s438 = smul.addr %s437, 2
      %s439 = smul.addr %s438, 8
      %s440 = scalar_lea.vmem %s13, %s439
      %v442 = vld [vmem:[%s435] sm:$0xff]
      %v443 = vld [vmem:[%s435 + $0x8] sm:$0xff]
      %v444 = vld [vmem:[%s1] sm:$0xf]
      %v445 = vld [vmem:[%s1 + $0x4] sm:$0xf]
      %v446 = vld [vmem:[%s1 + $0x8] sm:$0xf]
      %v447 = vld [vmem:[%s1 + $0xc] sm:$0xf]
      %v448 = vpack.c.bf16 %v443, %v442
      %v449 = vld [vmem:[%s2] sm:$0x1]
      %v451 = vlaneseq
      %v452 = vshrl.u32 %v451, 7
      %v453 = vsub.s32 0, %v452
      %v454 = vrot.slane %v449, %v453
      %v460 = vunpack.c.l.b16 %v444
      %v461 = vunpack.c.l.b16 %v445
      %v462 = vunpack.c.l.b16 %v446
      %v463 = vunpack.c.l.b16 %v447
      %v464 = vpack.c.b16 %v461, %v460
      %v465 = vpack.c.b16 %v463, %v462
      %vm468 = vcmask 261120
      %v470 = vsel %vm468, %v448, 0
      %472 = vmatprep.subr.bf16.mxu0 0
      %473 = vmatpush1.bf16.msra.mxu0 0
      %474 = vmatprep.subr.bf16.mxu0 0
      %475 = vmatpush1.bf16.msra.mxu0 0
      %476 = vmatprep.subr.bf16.mxu0 0
      %477 = vmatpush1.bf16.msra.mxu0 0
      %478 = vmatprep.subr.bf16.mxu0 0
      %479 = vmatpush1.bf16.msra.mxu0 0
      %480 = vmatprep.subr.bf16.mxu0 0
      %481 = vmatpush1.bf16.msra.mxu0 0
      %482 = vmatprep.subr.bf16.mxu0 0
      %483 = vmatpush1.bf16.msra.mxu0 0
      %484 = vmatprep.subr.bf16.mxu0 0
      %485 = vmatpush1.bf16.msra.mxu0 %v465
      %486 = vmatprep.subr.bf16.mxu0 0
      %487 = vmatpush1.bf16.msra.mxu0 %v464
      %488 = vmatprep.subr.bf16.mxu0 0
      %489 = vmatpush2.bf16.msra.mxu0 0
      %490 = vmatprep.subr.bf16.mxu0 0
      %491 = vmatpush2.bf16.msra.mxu0 0
      %492 = vmatprep.subr.bf16.mxu0 0
      %493 = vmatpush2.bf16.msra.mxu0 0
      %494 = vmatprep.subr.bf16.mxu0 0
      %495 = vmatpush2.bf16.msra.mxu0 0
      %496 = vmatprep.subr.bf16.mxu0 0
      %497 = vmatpush2.bf16.msra.mxu0 0
      %498 = vmatprep.subr.bf16.mxu0 0
      %499 = vmatpush2.bf16.msra.mxu0 0
      %500 = vmatprep.subr.bf16.mxu0 0
      %501 = vmatpush2.bf16.msra.mxu0 0
      %502 = vmatprep.subr.bf16.mxu0 0
      %503 = vmatpush2.bf16.msra.mxu0 0
      %504 = vmatprep.mubr.bf16.mxu0 0
      %505 = vmatmul.mubr.bf16.gmra.mxu0 %v470
      %v506 = vpop.f32.mrf.mxu0
      %v507 = vadd.f32 %v454, %v506
      %v508 = vpop.f32.mrf.mxu0
      %v509 = vpop.f32.mrf.mxu0
      %v510 = vadd.f32 %v454, %v509
      %v511 = vpop.f32.mrf.mxu0
      %512 = vdwg.mxu0
      %v513 = vmul.f32 %v507, 0.35355338
      %v514 = vmul.f32 %v510, 0.35355338
      %517 = vrot.lane.b32.xlu0 %v507, 96
      %v518 = vpop.permute.xlu0 %517
      %519 = vrot.lane.b32.xlu0 %v510, 96
      %v520 = vpop.permute.xlu0 %519
      %vm521 = vcmask 64512
      %v523 = vsel %vm521, %v513, 0
      %v526 = vsel %vm521, %v514, 0
      %v528 = vsel %vm521, %v518, 0
      %v530 = vsel %vm521, %v520, 0
      %532 = vmatprep.subr.mxu0 0.0
      %533 = vmatpush1.xpose.msra.mxu0 0.0
      %534 = vmatprep.subr.mxu0 0.0
      %535 = vmatpush1.xpose.msra.mxu0 0.0
      %536 = vmatprep.subr.mxu0 0.0
      %537 = vmatpush1.xpose.msra.mxu0 0.0
      %538 = vmatprep.subr.mxu0 0.0
      %539 = vmatpush1.xpose.msra.mxu0 0.0
      %540 = vmatprep.subr.mxu0 0.0
      %541 = vmatpush1.xpose.msra.mxu0 0.0
      %542 = vmatprep.subr.mxu0 0.0
      %543 = vmatpush1.xpose.msra.mxu0 0.0
      %544 = vmatprep.subr.mxu0 0.0
      %545 = vmatpush1.xpose.msra.mxu0 0.0
      %546 = vmatprep.subr.mxu0 0.0
      %547 = vmatpush1.xpose.msra.mxu0 0.0
      %548 = vmatprep.subr.mxu0 0.0
      %549 = vmatpush1.xpose.msra.mxu0 0.0
      %550 = vmatprep.subr.mxu0 0.0
      %551 = vmatpush1.xpose.msra.mxu0 0.0
      %552 = vmatprep.subr.mxu0 0.0
      %553 = vmatpush1.xpose.msra.mxu0 0.0
      %554 = vmatprep.subr.mxu0 0.0
      %555 = vmatpush1.xpose.msra.mxu0 0.0
      %556 = vmatprep.subr.mxu0 0.0
      %557 = vmatpush1.xpose.msra.mxu0 0.0
      %558 = vmatprep.subr.mxu0 0.0
      %559 = vmatpush1.xpose.msra.mxu0 0.0
      %560 = vmatprep.subr.mxu0 0.0
      %561 = vmatpush1.xpose.msra.mxu0 %v530
      %562 = vmatprep.subr.mxu0 0.0
      %563 = vmatpush1.xpose.msra.mxu0 %v528
      %564 = vmatprep.subr.mxu0 0.0
      %565 = vmatpush2.xpose.msra.mxu0 0.0
      %566 = vmatprep.subr.mxu0 0.0
      %567 = vmatpush2.xpose.msra.mxu0 0.0
      %568 = vmatprep.subr.mxu0 0.0
      %569 = vmatpush2.xpose.msra.mxu0 0.0
      %570 = vmatprep.subr.mxu0 0.0
      %571 = vmatpush2.xpose.msra.mxu0 0.0
      %572 = vmatprep.subr.mxu0 0.0
      %573 = vmatpush2.xpose.msra.mxu0 0.0
      %574 = vmatprep.subr.mxu0 0.0
      %575 = vmatpush2.xpose.msra.mxu0 0.0
      %576 = vmatprep.subr.mxu0 0.0
      %577 = vmatpush2.xpose.msra.mxu0 0.0
      %578 = vmatprep.subr.mxu0 0.0
      %579 = vmatpush2.xpose.msra.mxu0 0.0
      %580 = vmatprep.subr.mxu0 0.0
      %581 = vmatpush2.xpose.msra.mxu0 0.0
      %582 = vmatprep.subr.mxu0 0.0
      %583 = vmatpush2.xpose.msra.mxu0 0.0
      %584 = vmatprep.subr.mxu0 0.0
      %585 = vmatpush2.xpose.msra.mxu0 0.0
      %586 = vmatprep.subr.mxu0 0.0
      %587 = vmatpush2.xpose.msra.mxu0 0.0
      %588 = vmatprep.subr.mxu0 0.0
      %589 = vmatpush2.xpose.msra.mxu0 0.0
      %590 = vmatprep.subr.mxu0 0.0
      %591 = vmatpush2.xpose.msra.mxu0 0.0
      %592 = vmatprep.subr.mxu0 0.0
      %593 = vmatpush2.xpose.msra.mxu0 0.0
      %594 = vmatprep.subr.mxu0 0.0
      %595 = vmatpush2.xpose.msra.mxu0 0.0
      %596 = vmatprep.mubr.f32.mxu0 0.0
      %597 = vmatmul.mubr.f32.gmra.mxu0 %v523
      %v598 = vpop.f32.mrf.mxu0
      %v599 = vadd.f32 0.0, %v598
      %v600 = vpop.f32.mrf.mxu0
      %601 = vmatprep.mubr.f32.mxu0 0.0
      %602 = vmatmul.mubr.f32.gmra.mxu0 %v526
      %v603 = vpop.f32.mrf.mxu0
      %v604 = vadd.f32 0.0, %v603
      %v605 = vpop.f32.mrf.mxu0
      %606 = vdwg.mxu0
      %vm607 = vcmask 130048
      %v608 = vsel %vm607, %v599, -inf
      %609 = vmax.xlane.f32.xlu0 %v608
      %v610 = vpop.xlane.xlu0 %609
      %v611 = vsel %vm607, %v604, -inf
      %612 = vmax.xlane.f32.xlu0 %v611
      %v613 = vpop.xlane.xlu0 %612
      %v614 = vsub.f32 %v599, %v610
      %v615 = vsub.f32 %v604, %v613
      %v616 = vmul.f32 %v614, 1.442695
      %v617 = vpow.pop %v616
      %v618 = vmul.f32 %v615, 1.442695
      %v619 = vpow.pop %v618
      %v620 = vsel %vm607, %v617, 0.0
      %621 = vadd.xlane.f32.xlu0 %v620
      %v622 = vpop.xlane.xlu0 %621
      %v623 = vsel %vm607, %v619, 0.0
      %624 = vadd.xlane.f32.xlu0 %v623
      %v625 = vpop.xlane.xlu0 %624
      %v626 = vrcp.pop %v622
      %v627 = vrcp.pop %v625
      %628 = vrot.lane.b32.xlu0 %v507, 64
      %v629 = vpop.permute.xlu0 %628
      %630 = vrot.lane.b32.xlu0 %v510, 64
      %v631 = vpop.permute.xlu0 %630
      %v635 = vsel %vm607, %v617, 0
      %v638 = vsel %vm607, %v619, 0
      %640 = vmatprep.subr.mxu0 0.0
      %641 = vmatpush1.msra.mxu0 0.0
      %642 = vmatprep.subr.mxu0 0.0
      %643 = vmatpush1.msra.mxu0 0.0
      %644 = vmatprep.subr.mxu0 0.0
      %645 = vmatpush1.msra.mxu0 0.0
      %646 = vmatprep.subr.mxu0 0.0
      %647 = vmatpush1.msra.mxu0 0.0
      %648 = vmatprep.subr.mxu0 0.0
      %649 = vmatpush1.msra.mxu0 0.0
      %650 = vmatprep.subr.mxu0 0.0
      %651 = vmatpush1.msra.mxu0 0.0
      %652 = vmatprep.subr.mxu0 0.0
      %653 = vmatpush1.msra.mxu0 0.0
      %654 = vmatprep.subr.mxu0 0.0
      %655 = vmatpush1.msra.mxu0 0.0
      %656 = vmatprep.subr.mxu0 0.0
      %657 = vmatpush1.msra.mxu0 0.0
      %658 = vmatprep.subr.mxu0 0.0
      %659 = vmatpush1.msra.mxu0 0.0
      %660 = vmatprep.subr.mxu0 0.0
      %661 = vmatpush1.msra.mxu0 0.0
      %662 = vmatprep.subr.mxu0 0.0
      %663 = vmatpush1.msra.mxu0 0.0
      %664 = vmatprep.subr.mxu0 0.0
      %665 = vmatpush1.msra.mxu0 0.0
      %666 = vmatprep.subr.mxu0 0.0
      %667 = vmatpush1.msra.mxu0 0.0
      %668 = vmatprep.subr.mxu0 0.0
      %669 = vmatpush1.msra.mxu0 %v631
      %670 = vmatprep.subr.mxu0 0.0
      %671 = vmatpush1.msra.mxu0 %v629
      %672 = vmatprep.subr.mxu0 0.0
      %673 = vmatpush2.msra.mxu0 0.0
      %674 = vmatprep.subr.mxu0 0.0
      %675 = vmatpush2.msra.mxu0 0.0
      %676 = vmatprep.subr.mxu0 0.0
      %677 = vmatpush2.msra.mxu0 0.0
      %678 = vmatprep.subr.mxu0 0.0
      %679 = vmatpush2.msra.mxu0 0.0
      %680 = vmatprep.subr.mxu0 0.0
      %681 = vmatpush2.msra.mxu0 0.0
      %682 = vmatprep.subr.mxu0 0.0
      %683 = vmatpush2.msra.mxu0 0.0
      %684 = vmatprep.subr.mxu0 0.0
      %685 = vmatpush2.msra.mxu0 0.0
      %686 = vmatprep.subr.mxu0 0.0
      %687 = vmatpush2.msra.mxu0 0.0
      %688 = vmatprep.subr.mxu0 0.0
      %689 = vmatpush2.msra.mxu0 0.0
      %690 = vmatprep.subr.mxu0 0.0
      %691 = vmatpush2.msra.mxu0 0.0
      %692 = vmatprep.subr.mxu0 0.0
      %693 = vmatpush2.msra.mxu0 0.0
      %694 = vmatprep.subr.mxu0 0.0
      %695 = vmatpush2.msra.mxu0 0.0
      %696 = vmatprep.subr.mxu0 0.0
      %697 = vmatpush2.msra.mxu0 0.0
      %698 = vmatprep.subr.mxu0 0.0
      %699 = vmatpush2.msra.mxu0 0.0
      %700 = vmatprep.subr.mxu0 0.0
      %701 = vmatpush2.msra.mxu0 0.0
      %702 = vmatprep.subr.mxu0 0.0
      %703 = vmatpush2.msra.mxu0 0.0
      %704 = vmatprep.mubr.f32.mxu0 0.0
      %705 = vmatmul.mubr.f32.gmra.mxu0 %v635
      %v706 = vpop.f32.mrf.mxu0
      %v707 = vadd.f32 0.0, %v706
      %v708 = vpop.f32.mrf.mxu0
      %709 = vmatprep.mubr.f32.mxu0 0.0
      %710 = vmatmul.mubr.f32.gmra.mxu0 %v638
      %v711 = vpop.f32.mrf.mxu0
      %v712 = vadd.f32 0.0, %v711
      %v713 = vpop.f32.mrf.mxu0
      %714 = vdwg.mxu0
      %v715 = vmul.f32 %v707, %v626
      %v716 = vmul.f32 %v712, %v627
      %717 = vrot.lane.b32.xlu0 %v513, 120
      %v718 = vpop.permute.xlu0 %717
      %719 = vrot.lane.b32.xlu0 %v514, 120
      %v720 = vpop.permute.xlu0 %719
      %721 = vrot.lane.b32.xlu0 %v507, 88
      %v722 = vpop.permute.xlu0 %721
      %723 = vrot.lane.b32.xlu0 %v510, 88
      %v724 = vpop.permute.xlu0 %723
      %v725 = vsel %vm521, %v718, 0
      %v727 = vsel %vm521, %v720, 0
      %v729 = vsel %vm521, %v722, 0
      %v731 = vsel %vm521, %v724, 0
      %733 = vmatprep.subr.mxu0 0.0
      %734 = vmatpush1.xpose.msra.mxu0 0.0
      %735 = vmatprep.subr.mxu0 0.0
      %736 = vmatpush1.xpose.msra.mxu0 0.0
      %737 = vmatprep.subr.mxu0 0.0
      %738 = vmatpush1.xpose.msra.mxu0 0.0
      %739 = vmatprep.subr.mxu0 0.0
      %740 = vmatpush1.xpose.msra.mxu0 0.0
      %741 = vmatprep.subr.mxu0 0.0
      %742 = vmatpush1.xpose.msra.mxu0 0.0
      %743 = vmatprep.subr.mxu0 0.0
      %744 = vmatpush1.xpose.msra.mxu0 0.0
      %745 = vmatprep.subr.mxu0 0.0
      %746 = vmatpush1.xpose.msra.mxu0 0.0
      %747 = vmatprep.subr.mxu0 0.0
      %748 = vmatpush1.xpose.msra.mxu0 0.0
      %749 = vmatprep.subr.mxu0 0.0
      %750 = vmatpush1.xpose.msra.mxu0 0.0
      %751 = vmatprep.subr.mxu0 0.0
      %752 = vmatpush1.xpose.msra.mxu0 0.0
      %753 = vmatprep.subr.mxu0 0.0
      %754 = vmatpush1.xpose.msra.mxu0 0.0
      %755 = vmatprep.subr.mxu0 0.0
      %756 = vmatpush1.xpose.msra.mxu0 0.0
      %757 = vmatprep.subr.mxu0 0.0
      %758 = vmatpush1.xpose.msra.mxu0 0.0
      %759 = vmatprep.subr.mxu0 0.0
      %760 = vmatpush1.xpose.msra.mxu0 0.0
      %761 = vmatprep.subr.mxu0 0.0
      %762 = vmatpush1.xpose.msra.mxu0 %v731
      %763 = vmatprep.subr.mxu0 0.0
      %764 = vmatpush1.xpose.msra.mxu0 %v729
      %765 = vmatprep.subr.mxu0 0.0
      %766 = vmatpush2.xpose.msra.mxu0 0.0
      %767 = vmatprep.subr.mxu0 0.0
      %768 = vmatpush2.xpose.msra.mxu0 0.0
      %769 = vmatprep.subr.mxu0 0.0
      %770 = vmatpush2.xpose.msra.mxu0 0.0
      %771 = vmatprep.subr.mxu0 0.0
      %772 = vmatpush2.xpose.msra.mxu0 0.0
      %773 = vmatprep.subr.mxu0 0.0
      %774 = vmatpush2.xpose.msra.mxu0 0.0
      %775 = vmatprep.subr.mxu0 0.0
      %776 = vmatpush2.xpose.msra.mxu0 0.0
      %777 = vmatprep.subr.mxu0 0.0
      %778 = vmatpush2.xpose.msra.mxu0 0.0
      %779 = vmatprep.subr.mxu0 0.0
      %780 = vmatpush2.xpose.msra.mxu0 0.0
      %781 = vmatprep.subr.mxu0 0.0
      %782 = vmatpush2.xpose.msra.mxu0 0.0
      %783 = vmatprep.subr.mxu0 0.0
      %784 = vmatpush2.xpose.msra.mxu0 0.0
      %785 = vmatprep.subr.mxu0 0.0
      %786 = vmatpush2.xpose.msra.mxu0 0.0
      %787 = vmatprep.subr.mxu0 0.0
      %788 = vmatpush2.xpose.msra.mxu0 0.0
      %789 = vmatprep.subr.mxu0 0.0
      %790 = vmatpush2.xpose.msra.mxu0 0.0
      %791 = vmatprep.subr.mxu0 0.0
      %792 = vmatpush2.xpose.msra.mxu0 0.0
      %793 = vmatprep.subr.mxu0 0.0
      %794 = vmatpush2.xpose.msra.mxu0 0.0
      %795 = vmatprep.subr.mxu0 0.0
      %796 = vmatpush2.xpose.msra.mxu0 0.0
      %797 = vmatprep.mubr.f32.mxu0 0.0
      %798 = vmatmul.mubr.f32.gmra.mxu0 %v725
      %v799 = vpop.f32.mrf.mxu0
      %v800 = vadd.f32 0.0, %v799
      %v801 = vpop.f32.mrf.mxu0
      %802 = vmatprep.mubr.f32.mxu0 0.0
      %803 = vmatmul.mubr.f32.gmra.mxu0 %v727
      %v804 = vpop.f32.mrf.mxu0
      %v805 = vadd.f32 0.0, %v804
      %v806 = vpop.f32.mrf.mxu0
      %807 = vdwg.mxu0
      %v808 = vsel %vm607, %v800, -inf
      %809 = vmax.xlane.f32.xlu0 %v808
      %v810 = vpop.xlane.xlu0 %809
      %v811 = vsel %vm607, %v805, -inf
      %812 = vmax.xlane.f32.xlu0 %v811
      %v813 = vpop.xlane.xlu0 %812
      %v814 = vsub.f32 %v800, %v810
      %v815 = vsub.f32 %v805, %v813
      %v816 = vmul.f32 %v814, 1.442695
      %v817 = vpow.pop %v816
      %v818 = vmul.f32 %v815, 1.442695
      %v819 = vpow.pop %v818
      %v820 = vsel %vm607, %v817, 0.0
      %821 = vadd.xlane.f32.xlu0 %v820
      %v822 = vpop.xlane.xlu0 %821
      %v823 = vsel %vm607, %v819, 0.0
      %824 = vadd.xlane.f32.xlu0 %v823
      %v825 = vpop.xlane.xlu0 %824
      %v826 = vrcp.pop %v822
      %v827 = vrcp.pop %v825
      %828 = vrot.lane.b32.xlu0 %v507, 56
      %v829 = vpop.permute.xlu0 %828
      %830 = vrot.lane.b32.xlu0 %v510, 56
      %v831 = vpop.permute.xlu0 %830
      %v835 = vsel %vm607, %v817, 0
      %v838 = vsel %vm607, %v819, 0
      %840 = vmatprep.subr.mxu0 0.0
      %841 = vmatpush1.msra.mxu0 0.0
      %842 = vmatprep.subr.mxu0 0.0
      %843 = vmatpush1.msra.mxu0 0.0
      %844 = vmatprep.subr.mxu0 0.0
      %845 = vmatpush1.msra.mxu0 0.0
      %846 = vmatprep.subr.mxu0 0.0
      %847 = vmatpush1.msra.mxu0 0.0
      %848 = vmatprep.subr.mxu0 0.0
      %849 = vmatpush1.msra.mxu0 0.0
      %850 = vmatprep.subr.mxu0 0.0
      %851 = vmatpush1.msra.mxu0 0.0
      %852 = vmatprep.subr.mxu0 0.0
      %853 = vmatpush1.msra.mxu0 0.0
      %854 = vmatprep.subr.mxu0 0.0
      %855 = vmatpush1.msra.mxu0 0.0
      %856 = vmatprep.subr.mxu0 0.0
      %857 = vmatpush1.msra.mxu0 0.0
      %858 = vmatprep.subr.mxu0 0.0
      %859 = vmatpush1.msra.mxu0 0.0
      %860 = vmatprep.subr.mxu0 0.0
      %861 = vmatpush1.msra.mxu0 0.0
      %862 = vmatprep.subr.mxu0 0.0
      %863 = vmatpush1.msra.mxu0 0.0
      %864 = vmatprep.subr.mxu0 0.0
      %865 = vmatpush1.msra.mxu0 0.0
      %866 = vmatprep.subr.mxu0 0.0
      %867 = vmatpush1.msra.mxu0 0.0
      %868 = vmatprep.subr.mxu0 0.0
      %869 = vmatpush1.msra.mxu0 %v831
      %870 = vmatprep.subr.mxu0 0.0
      %871 = vmatpush1.msra.mxu0 %v829
      %872 = vmatprep.subr.mxu0 0.0
      %873 = vmatpush2.msra.mxu0 0.0
      %874 = vmatprep.subr.mxu0 0.0
      %875 = vmatpush2.msra.mxu0 0.0
      %876 = vmatprep.subr.mxu0 0.0
      %877 = vmatpush2.msra.mxu0 0.0
      %878 = vmatprep.subr.mxu0 0.0
      %879 = vmatpush2.msra.mxu0 0.0
      %880 = vmatprep.subr.mxu0 0.0
      %881 = vmatpush2.msra.mxu0 0.0
      %882 = vmatprep.subr.mxu0 0.0
      %883 = vmatpush2.msra.mxu0 0.0
      %884 = vmatprep.subr.mxu0 0.0
      %885 = vmatpush2.msra.mxu0 0.0
      %886 = vmatprep.subr.mxu0 0.0
      %887 = vmatpush2.msra.mxu0 0.0
      %888 = vmatprep.subr.mxu0 0.0
      %889 = vmatpush2.msra.mxu0 0.0
      %890 = vmatprep.subr.mxu0 0.0
      %891 = vmatpush2.msra.mxu0 0.0
      %892 = vmatprep.subr.mxu0 0.0
      %893 = vmatpush2.msra.mxu0 0.0
      %894 = vmatprep.subr.mxu0 0.0
      %895 = vmatpush2.msra.mxu0 0.0
      %896 = vmatprep.subr.mxu0 0.0
      %897 = vmatpush2.msra.mxu0 0.0
      %898 = vmatprep.subr.mxu0 0.0
      %899 = vmatpush2.msra.mxu0 0.0
      %900 = vmatprep.subr.mxu0 0.0
      %901 = vmatpush2.msra.mxu0 0.0
      %902 = vmatprep.subr.mxu0 0.0
      %903 = vmatpush2.msra.mxu0 0.0
      %904 = vmatprep.mubr.f32.mxu0 0.0
      %905 = vmatmul.mubr.f32.gmra.mxu0 %v835
      %v906 = vpop.f32.mrf.mxu0
      %v907 = vadd.f32 0.0, %v906
      %v908 = vpop.f32.mrf.mxu0
      %909 = vmatprep.mubr.f32.mxu0 0.0
      %910 = vmatmul.mubr.f32.gmra.mxu0 %v838
      %v911 = vpop.f32.mrf.mxu0
      %v912 = vadd.f32 0.0, %v911
      %v913 = vpop.f32.mrf.mxu0
      %914 = vdwg.mxu0
      %v915 = vmul.f32 %v907, %v826
      %v916 = vmul.f32 %v912, %v827
      %917 = vrot.lane.b32.xlu0 %v513, 112
      %v918 = vpop.permute.xlu0 %917
      %919 = vrot.lane.b32.xlu0 %v514, 112
      %v920 = vpop.permute.xlu0 %919
      %921 = vrot.lane.b32.xlu0 %v507, 80
      %v922 = vpop.permute.xlu0 %921
      %923 = vrot.lane.b32.xlu0 %v510, 80
      %v924 = vpop.permute.xlu0 %923
      %v925 = vsel %vm521, %v918, 0
      %v927 = vsel %vm521, %v920, 0
      %v929 = vsel %vm521, %v922, 0
      %v931 = vsel %vm521, %v924, 0
      %933 = vmatprep.subr.mxu0 0.0
      %934 = vmatpush1.xpose.msra.mxu0 0.0
      %935 = vmatprep.subr.mxu0 0.0
      %936 = vmatpush1.xpose.msra.mxu0 0.0
      %937 = vmatprep.subr.mxu0 0.0
      %938 = vmatpush1.xpose.msra.mxu0 0.0
      %939 = vmatprep.subr.mxu0 0.0
      %940 = vmatpush1.xpose.msra.mxu0 0.0
      %941 = vmatprep.subr.mxu0 0.0
      %942 = vmatpush1.xpose.msra.mxu0 0.0
      %943 = vmatprep.subr.mxu0 0.0
      %944 = vmatpush1.xpose.msra.mxu0 0.0
      %945 = vmatprep.subr.mxu0 0.0
      %946 = vmatpush1.xpose.msra.mxu0 0.0
      %947 = vmatprep.subr.mxu0 0.0
      %948 = vmatpush1.xpose.msra.mxu0 0.0
      %949 = vmatprep.subr.mxu0 0.0
      %950 = vmatpush1.xpose.msra.mxu0 0.0
      %951 = vmatprep.subr.mxu0 0.0
      %952 = vmatpush1.xpose.msra.mxu0 0.0
      %953 = vmatprep.subr.mxu0 0.0
      %954 = vmatpush1.xpose.msra.mxu0 0.0
      %955 = vmatprep.subr.mxu0 0.0
      %956 = vmatpush1.xpose.msra.mxu0 0.0
      %957 = vmatprep.subr.mxu0 0.0
      %958 = vmatpush1.xpose.msra.mxu0 0.0
      %959 = vmatprep.subr.mxu0 0.0
      %960 = vmatpush1.xpose.msra.mxu0 0.0
      %961 = vmatprep.subr.mxu0 0.0
      %962 = vmatpush1.xpose.msra.mxu0 %v931
      %963 = vmatprep.subr.mxu0 0.0
      %964 = vmatpush1.xpose.msra.mxu0 %v929
      %965 = vmatprep.subr.mxu0 0.0
      %966 = vmatpush2.xpose.msra.mxu0 0.0
      %967 = vmatprep.subr.mxu0 0.0
      %968 = vmatpush2.xpose.msra.mxu0 0.0
      %969 = vmatprep.subr.mxu0 0.0
      %970 = vmatpush2.xpose.msra.mxu0 0.0
      %971 = vmatprep.subr.mxu0 0.0
      %972 = vmatpush2.xpose.msra.mxu0 0.0
      %973 = vmatprep.subr.mxu0 0.0
      %974 = vmatpush2.xpose.msra.mxu0 0.0
      %975 = vmatprep.subr.mxu0 0.0
      %976 = vmatpush2.xpose.msra.mxu0 0.0
      %977 = vmatprep.subr.mxu0 0.0
      %978 = vmatpush2.xpose.msra.mxu0 0.0
      %979 = vmatprep.subr.mxu0 0.0
      %980 = vmatpush2.xpose.msra.mxu0 0.0
      %981 = vmatprep.subr.mxu0 0.0
      %982 = vmatpush2.xpose.msra.mxu0 0.0
      %983 = vmatprep.subr.mxu0 0.0
      %984 = vmatpush2.xpose.msra.mxu0 0.0
      %985 = vmatprep.subr.mxu0 0.0
      %986 = vmatpush2.xpose.msra.mxu0 0.0
      %987 = vmatprep.subr.mxu0 0.0
      %988 = vmatpush2.xpose.msra.mxu0 0.0
      %989 = vmatprep.subr.mxu0 0.0
      %990 = vmatpush2.xpose.msra.mxu0 0.0
      %991 = vmatprep.subr.mxu0 0.0
      %992 = vmatpush2.xpose.msra.mxu0 0.0
      %993 = vmatprep.subr.mxu0 0.0
      %994 = vmatpush2.xpose.msra.mxu0 0.0
      %995 = vmatprep.subr.mxu0 0.0
      %996 = vmatpush2.xpose.msra.mxu0 0.0
      %997 = vmatprep.mubr.f32.mxu0 0.0
      %998 = vmatmul.mubr.f32.gmra.mxu0 %v925
      %v999 = vpop.f32.mrf.mxu0
      %v1000 = vadd.f32 0.0, %v999
      %v1001 = vpop.f32.mrf.mxu0
      %1002 = vmatprep.mubr.f32.mxu0 0.0
      %1003 = vmatmul.mubr.f32.gmra.mxu0 %v927
      %v1004 = vpop.f32.mrf.mxu0
      %v1005 = vadd.f32 0.0, %v1004
      %v1006 = vpop.f32.mrf.mxu0
      %1007 = vdwg.mxu0
      %v1008 = vsel %vm607, %v1000, -inf
      %1009 = vmax.xlane.f32.xlu0 %v1008
      %v1010 = vpop.xlane.xlu0 %1009
      %v1011 = vsel %vm607, %v1005, -inf
      %1012 = vmax.xlane.f32.xlu0 %v1011
      %v1013 = vpop.xlane.xlu0 %1012
      %v1014 = vsub.f32 %v1000, %v1010
      %v1015 = vsub.f32 %v1005, %v1013
      %v1016 = vmul.f32 %v1014, 1.442695
      %v1017 = vpow.pop %v1016
      %v1018 = vmul.f32 %v1015, 1.442695
      %v1019 = vpow.pop %v1018
      %v1020 = vsel %vm607, %v1017, 0.0
      %1021 = vadd.xlane.f32.xlu0 %v1020
      %v1022 = vpop.xlane.xlu0 %1021
      %v1023 = vsel %vm607, %v1019, 0.0
      %1024 = vadd.xlane.f32.xlu0 %v1023
      %v1025 = vpop.xlane.xlu0 %1024
      %v1026 = vrcp.pop %v1022
      %v1027 = vrcp.pop %v1025
      %1028 = vrot.lane.b32.xlu0 %v507, 48
      %v1029 = vpop.permute.xlu0 %1028
      %1030 = vrot.lane.b32.xlu0 %v510, 48
      %v1031 = vpop.permute.xlu0 %1030
      %v1035 = vsel %vm607, %v1017, 0
      %v1038 = vsel %vm607, %v1019, 0
      %1040 = vmatprep.subr.mxu0 0.0
      %1041 = vmatpush1.msra.mxu0 0.0
      %1042 = vmatprep.subr.mxu0 0.0
      %1043 = vmatpush1.msra.mxu0 0.0
      %1044 = vmatprep.subr.mxu0 0.0
      %1045 = vmatpush1.msra.mxu0 0.0
      %1046 = vmatprep.subr.mxu0 0.0
      %1047 = vmatpush1.msra.mxu0 0.0
      %1048 = vmatprep.subr.mxu0 0.0
      %1049 = vmatpush1.msra.mxu0 0.0
      %1050 = vmatprep.subr.mxu0 0.0
      %1051 = vmatpush1.msra.mxu0 0.0
      %1052 = vmatprep.subr.mxu0 0.0
      %1053 = vmatpush1.msra.mxu0 0.0
      %1054 = vmatprep.subr.mxu0 0.0
      %1055 = vmatpush1.msra.mxu0 0.0
      %1056 = vmatprep.subr.mxu0 0.0
      %1057 = vmatpush1.msra.mxu0 0.0
      %1058 = vmatprep.subr.mxu0 0.0
      %1059 = vmatpush1.msra.mxu0 0.0
      %1060 = vmatprep.subr.mxu0 0.0
      %1061 = vmatpush1.msra.mxu0 0.0
      %1062 = vmatprep.subr.mxu0 0.0
      %1063 = vmatpush1.msra.mxu0 0.0
      %1064 = vmatprep.subr.mxu0 0.0
      %1065 = vmatpush1.msra.mxu0 0.0
      %1066 = vmatprep.subr.mxu0 0.0
      %1067 = vmatpush1.msra.mxu0 0.0
      %1068 = vmatprep.subr.mxu0 0.0
      %1069 = vmatpush1.msra.mxu0 %v1031
      %1070 = vmatprep.subr.mxu0 0.0
      %1071 = vmatpush1.msra.mxu0 %v1029
      %1072 = vmatprep.subr.mxu0 0.0
      %1073 = vmatpush2.msra.mxu0 0.0
      %1074 = vmatprep.subr.mxu0 0.0
      %1075 = vmatpush2.msra.mxu0 0.0
      %1076 = vmatprep.subr.mxu0 0.0
      %1077 = vmatpush2.msra.mxu0 0.0
      %1078 = vmatprep.subr.mxu0 0.0
      %1079 = vmatpush2.msra.mxu0 0.0
      %1080 = vmatprep.subr.mxu0 0.0
      %1081 = vmatpush2.msra.mxu0 0.0
      %1082 = vmatprep.subr.mxu0 0.0
      %1083 = vmatpush2.msra.mxu0 0.0
      %1084 = vmatprep.subr.mxu0 0.0
      %1085 = vmatpush2.msra.mxu0 0.0
      %1086 = vmatprep.subr.mxu0 0.0
      %1087 = vmatpush2.msra.mxu0 0.0
      %1088 = vmatprep.subr.mxu0 0.0
      %1089 = vmatpush2.msra.mxu0 0.0
      %1090 = vmatprep.subr.mxu0 0.0
      %1091 = vmatpush2.msra.mxu0 0.0
      %1092 = vmatprep.subr.mxu0 0.0
      %1093 = vmatpush2.msra.mxu0 0.0
      %1094 = vmatprep.subr.mxu0 0.0
      %1095 = vmatpush2.msra.mxu0 0.0
      %1096 = vmatprep.subr.mxu0 0.0
      %1097 = vmatpush2.msra.mxu0 0.0
      %1098 = vmatprep.subr.mxu0 0.0
      %1099 = vmatpush2.msra.mxu0 0.0
      %1100 = vmatprep.subr.mxu0 0.0
      %1101 = vmatpush2.msra.mxu0 0.0
      %1102 = vmatprep.subr.mxu0 0.0
      %1103 = vmatpush2.msra.mxu0 0.0
      %1104 = vmatprep.mubr.f32.mxu0 0.0
      %1105 = vmatmul.mubr.f32.gmra.mxu0 %v1035
      %v1106 = vpop.f32.mrf.mxu0
      %v1107 = vadd.f32 0.0, %v1106
      %v1108 = vpop.f32.mrf.mxu0
      %1109 = vmatprep.mubr.f32.mxu0 0.0
      %1110 = vmatmul.mubr.f32.gmra.mxu0 %v1038
      %v1111 = vpop.f32.mrf.mxu0
      %v1112 = vadd.f32 0.0, %v1111
      %v1113 = vpop.f32.mrf.mxu0
      %1114 = vdwg.mxu0
      %v1115 = vmul.f32 %v1107, %v1026
      %v1116 = vmul.f32 %v1112, %v1027
      %1117 = vrot.lane.b32.xlu0 %v513, 104
      %v1118 = vpop.permute.xlu0 %1117
      %1119 = vrot.lane.b32.xlu0 %v514, 104
      %v1120 = vpop.permute.xlu0 %1119
      %1121 = vrot.lane.b32.xlu0 %v507, 72
      %v1122 = vpop.permute.xlu0 %1121
      %1123 = vrot.lane.b32.xlu0 %v510, 72
      %v1124 = vpop.permute.xlu0 %1123
      %v1125 = vsel %vm521, %v1118, 0
      %v1127 = vsel %vm521, %v1120, 0
      %v1129 = vsel %vm521, %v1122, 0
      %v1131 = vsel %vm521, %v1124, 0
      %1133 = vmatprep.subr.mxu0 0.0
      %1134 = vmatpush1.xpose.msra.mxu0 0.0
      %1135 = vmatprep.subr.mxu0 0.0
      %1136 = vmatpush1.xpose.msra.mxu0 0.0
      %1137 = vmatprep.subr.mxu0 0.0
      %1138 = vmatpush1.xpose.msra.mxu0 0.0
      %1139 = vmatprep.subr.mxu0 0.0
      %1140 = vmatpush1.xpose.msra.mxu0 0.0
      %1141 = vmatprep.subr.mxu0 0.0
      %1142 = vmatpush1.xpose.msra.mxu0 0.0
      %1143 = vmatprep.subr.mxu0 0.0
      %1144 = vmatpush1.xpose.msra.mxu0 0.0
      %1145 = vmatprep.subr.mxu0 0.0
      %1146 = vmatpush1.xpose.msra.mxu0 0.0
      %1147 = vmatprep.subr.mxu0 0.0
      %1148 = vmatpush1.xpose.msra.mxu0 0.0
      %1149 = vmatprep.subr.mxu0 0.0
      %1150 = vmatpush1.xpose.msra.mxu0 0.0
      %1151 = vmatprep.subr.mxu0 0.0
      %1152 = vmatpush1.xpose.msra.mxu0 0.0
      %1153 = vmatprep.subr.mxu0 0.0
      %1154 = vmatpush1.xpose.msra.mxu0 0.0
      %1155 = vmatprep.subr.mxu0 0.0
      %1156 = vmatpush1.xpose.msra.mxu0 0.0
      %1157 = vmatprep.subr.mxu0 0.0
      %1158 = vmatpush1.xpose.msra.mxu0 0.0
      %1159 = vmatprep.subr.mxu0 0.0
      %1160 = vmatpush1.xpose.msra.mxu0 0.0
      %1161 = vmatprep.subr.mxu0 0.0
      %1162 = vmatpush1.xpose.msra.mxu0 %v1131
      %1163 = vmatprep.subr.mxu0 0.0
      %1164 = vmatpush1.xpose.msra.mxu0 %v1129
      %1165 = vmatprep.subr.mxu0 0.0
      %1166 = vmatpush2.xpose.msra.mxu0 0.0
      %1167 = vmatprep.subr.mxu0 0.0
      %1168 = vmatpush2.xpose.msra.mxu0 0.0
      %1169 = vmatprep.subr.mxu0 0.0
      %1170 = vmatpush2.xpose.msra.mxu0 0.0
      %1171 = vmatprep.subr.mxu0 0.0
      %1172 = vmatpush2.xpose.msra.mxu0 0.0
      %1173 = vmatprep.subr.mxu0 0.0
      %1174 = vmatpush2.xpose.msra.mxu0 0.0
      %1175 = vmatprep.subr.mxu0 0.0
      %1176 = vmatpush2.xpose.msra.mxu0 0.0
      %1177 = vmatprep.subr.mxu0 0.0
      %1178 = vmatpush2.xpose.msra.mxu0 0.0
      %1179 = vmatprep.subr.mxu0 0.0
      %1180 = vmatpush2.xpose.msra.mxu0 0.0
      %1181 = vmatprep.subr.mxu0 0.0
      %1182 = vmatpush2.xpose.msra.mxu0 0.0
      %1183 = vmatprep.subr.mxu0 0.0
      %1184 = vmatpush2.xpose.msra.mxu0 0.0
      %1185 = vmatprep.subr.mxu0 0.0
      %1186 = vmatpush2.xpose.msra.mxu0 0.0
      %1187 = vmatprep.subr.mxu0 0.0
      %1188 = vmatpush2.xpose.msra.mxu0 0.0
      %1189 = vmatprep.subr.mxu0 0.0
      %1190 = vmatpush2.xpose.msra.mxu0 0.0
      %1191 = vmatprep.subr.mxu0 0.0
      %1192 = vmatpush2.xpose.msra.mxu0 0.0
      %1193 = vmatprep.subr.mxu0 0.0
      %1194 = vmatpush2.xpose.msra.mxu0 0.0
      %1195 = vmatprep.subr.mxu0 0.0
      %1196 = vmatpush2.xpose.msra.mxu0 0.0
      %1197 = vmatprep.mubr.f32.mxu0 0.0
      %1198 = vmatmul.mubr.f32.gmra.mxu0 %v1125
      %v1199 = vpop.f32.mrf.mxu0
      %v1200 = vadd.f32 0.0, %v1199
      %v1201 = vpop.f32.mrf.mxu0
      %1202 = vmatprep.mubr.f32.mxu0 0.0
      %1203 = vmatmul.mubr.f32.gmra.mxu0 %v1127
      %v1204 = vpop.f32.mrf.mxu0
      %v1205 = vadd.f32 0.0, %v1204
      %v1206 = vpop.f32.mrf.mxu0
      %1207 = vdwg.mxu0
      %v1208 = vsel %vm607, %v1200, -inf
      %1209 = vmax.xlane.f32.xlu0 %v1208
      %v1210 = vpop.xlane.xlu0 %1209
      %v1211 = vsel %vm607, %v1205, -inf
      %1212 = vmax.xlane.f32.xlu0 %v1211
      %v1213 = vpop.xlane.xlu0 %1212
      %v1214 = vsub.f32 %v1200, %v1210
      %v1215 = vsub.f32 %v1205, %v1213
      %v1216 = vmul.f32 %v1214, 1.442695
      %v1217 = vpow.pop %v1216
      %v1218 = vmul.f32 %v1215, 1.442695
      %v1219 = vpow.pop %v1218
      %v1220 = vsel %vm607, %v1217, 0.0
      %1221 = vadd.xlane.f32.xlu0 %v1220
      %v1222 = vpop.xlane.xlu0 %1221
      %v1223 = vsel %vm607, %v1219, 0.0
      %1224 = vadd.xlane.f32.xlu0 %v1223
      %v1225 = vpop.xlane.xlu0 %1224
      %v1226 = vrcp.pop %v1222
      %v1227 = vrcp.pop %v1225
      %1228 = vrot.lane.b32.xlu0 %v507, 40
      %v1229 = vpop.permute.xlu0 %1228
      %1230 = vrot.lane.b32.xlu0 %v510, 40
      %v1231 = vpop.permute.xlu0 %1230
      %v1235 = vsel %vm607, %v1217, 0
      %v1238 = vsel %vm607, %v1219, 0
      %1240 = vmatprep.subr.mxu0 0.0
      %1241 = vmatpush1.msra.mxu0 0.0
      %1242 = vmatprep.subr.mxu0 0.0
      %1243 = vmatpush1.msra.mxu0 0.0
      %1244 = vmatprep.subr.mxu0 0.0
      %1245 = vmatpush1.msra.mxu0 0.0
      %1246 = vmatprep.subr.mxu0 0.0
      %1247 = vmatpush1.msra.mxu0 0.0
      %1248 = vmatprep.subr.mxu0 0.0
      %1249 = vmatpush1.msra.mxu0 0.0
      %1250 = vmatprep.subr.mxu0 0.0
      %1251 = vmatpush1.msra.mxu0 0.0
      %1252 = vmatprep.subr.mxu0 0.0
      %1253 = vmatpush1.msra.mxu0 0.0
      %1254 = vmatprep.subr.mxu0 0.0
      %1255 = vmatpush1.msra.mxu0 0.0
      %1256 = vmatprep.subr.mxu0 0.0
      %1257 = vmatpush1.msra.mxu0 0.0
      %1258 = vmatprep.subr.mxu0 0.0
      %1259 = vmatpush1.msra.mxu0 0.0
      %1260 = vmatprep.subr.mxu0 0.0
      %1261 = vmatpush1.msra.mxu0 0.0
      %1262 = vmatprep.subr.mxu0 0.0
      %1263 = vmatpush1.msra.mxu0 0.0
      %1264 = vmatprep.subr.mxu0 0.0
      %1265 = vmatpush1.msra.mxu0 0.0
      %1266 = vmatprep.subr.mxu0 0.0
      %1267 = vmatpush1.msra.mxu0 0.0
      %1268 = vmatprep.subr.mxu0 0.0
      %1269 = vmatpush1.msra.mxu0 %v1231
      %1270 = vmatprep.subr.mxu0 0.0
      %1271 = vmatpush1.msra.mxu0 %v1229
      %1272 = vmatprep.subr.mxu0 0.0
      %1273 = vmatpush2.msra.mxu0 0.0
      %1274 = vmatprep.subr.mxu0 0.0
      %1275 = vmatpush2.msra.mxu0 0.0
      %1276 = vmatprep.subr.mxu0 0.0
      %1277 = vmatpush2.msra.mxu0 0.0
      %1278 = vmatprep.subr.mxu0 0.0
      %1279 = vmatpush2.msra.mxu0 0.0
      %1280 = vmatprep.subr.mxu0 0.0
      %1281 = vmatpush2.msra.mxu0 0.0
      %1282 = vmatprep.subr.mxu0 0.0
      %1283 = vmatpush2.msra.mxu0 0.0
      %1284 = vmatprep.subr.mxu0 0.0
      %1285 = vmatpush2.msra.mxu0 0.0
      %1286 = vmatprep.subr.mxu0 0.0
      %1287 = vmatpush2.msra.mxu0 0.0
      %1288 = vmatprep.subr.mxu0 0.0
      %1289 = vmatpush2.msra.mxu0 0.0
      %1290 = vmatprep.subr.mxu0 0.0
      %1291 = vmatpush2.msra.mxu0 0.0
      %1292 = vmatprep.subr.mxu0 0.0
      %1293 = vmatpush2.msra.mxu0 0.0
      %1294 = vmatprep.subr.mxu0 0.0
      %1295 = vmatpush2.msra.mxu0 0.0
      %1296 = vmatprep.subr.mxu0 0.0
      %1297 = vmatpush2.msra.mxu0 0.0
      %1298 = vmatprep.subr.mxu0 0.0
      %1299 = vmatpush2.msra.mxu0 0.0
      %1300 = vmatprep.subr.mxu0 0.0
      %1301 = vmatpush2.msra.mxu0 0.0
      %1302 = vmatprep.subr.mxu0 0.0
      %1303 = vmatpush2.msra.mxu0 0.0
      %1304 = vmatprep.mubr.f32.mxu0 0.0
      %1305 = vmatmul.mubr.f32.gmra.mxu0 %v1235
      %v1306 = vpop.f32.mrf.mxu0
      %v1307 = vadd.f32 0.0, %v1306
      %v1308 = vpop.f32.mrf.mxu0
      %1309 = vmatprep.mubr.f32.mxu0 0.0
      %1310 = vmatmul.mubr.f32.gmra.mxu0 %v1238
      %v1311 = vpop.f32.mrf.mxu0
      %v1312 = vadd.f32 0.0, %v1311
      %v1313 = vpop.f32.mrf.mxu0
      %1314 = vdwg.mxu0
      %v1315 = vmul.f32 %v1307, %v1226
      %v1316 = vmul.f32 %v1312, %v1227
      %1319 = vrot.lane.b32.xlu0 %v915, 8
      %v1320 = vpop.permute.xlu0 %1319
      %1321 = vrot.lane.b32.xlu0 %v916, 8
      %v1322 = vpop.permute.xlu0 %1321
      %1327 = vrot.lane.b32.xlu0 %v1115, 16
      %v1328 = vpop.permute.xlu0 %1327
      %1329 = vrot.lane.b32.xlu0 %v1116, 16
      %v1330 = vpop.permute.xlu0 %1329
      %1335 = vrot.lane.b32.xlu0 %v1315, 24
      %v1336 = vpop.permute.xlu0 %1335
      %1337 = vrot.lane.b32.xlu0 %v1316, 24
      %v1338 = vpop.permute.xlu0 %1337
      %v1341 = vsel %vm521, %v715, %v1320
      %v1342 = vsel %vm521, %v716, %v1322
      %v1343 = vsel %vm607, %v1341, %v1328
      %v1344 = vsel %vm607, %v1342, %v1330
      %vm1345 = vcmask 195584
      %v1346 = vsel %vm1345, %v1343, %v1336
      %v1347 = vsel %vm1345, %v1344, %v1338
      %v1348 = vld [vmem:[%s3] sm:$0xf]
      %v1349 = vld [vmem:[%s3 + $0x4] sm:$0xf]
      %v1350 = vld [vmem:[%s3 + $0x8] sm:$0xf]
      %v1351 = vld [vmem:[%s3 + $0xc] sm:$0xf]
      %v1352 = vpack.c.bf16 %v1347, %v1346
      %v1353 = vld [vmem:[%s4] sm:$0x1]
      %v1355 = vlaneseq
      %v1356 = vshrl.u32 %v1355, 7
      %v1357 = vsub.s32 0, %v1356
      %v1358 = vrot.slane %v1353, %v1357
      %v1364 = vunpack.c.l.b16 %v1348
      %v1365 = vunpack.c.l.b16 %v1349
      %v1366 = vunpack.c.l.b16 %v1350
      %v1367 = vunpack.c.l.b16 %v1351
      %v1368 = vpack.c.b16 %v1365, %v1364
      %v1369 = vpack.c.b16 %v1367, %v1366
      %v1373 = vsel %vm468, %v1352, 0
      %1375 = vmatprep.subr.bf16.mxu0 0
      %1376 = vmatpush1.bf16.msra.mxu0 0
      %1377 = vmatprep.subr.bf16.mxu0 0
      %1378 = vmatpush1.bf16.msra.mxu0 0
      %1379 = vmatprep.subr.bf16.mxu0 0
      %1380 = vmatpush1.bf16.msra.mxu0 0
      %1381 = vmatprep.subr.bf16.mxu0 0
      %1382 = vmatpush1.bf16.msra.mxu0 0
      %1383 = vmatprep.subr.bf16.mxu0 0
      %1384 = vmatpush1.bf16.msra.mxu0 0
      %1385 = vmatprep.subr.bf16.mxu0 0
      %1386 = vmatpush1.bf16.msra.mxu0 0
      %1387 = vmatprep.subr.bf16.mxu0 0
      %1388 = vmatpush1.bf16.msra.mxu0 %v1369
      %1389 = vmatprep.subr.bf16.mxu0 0
      %1390 = vmatpush1.bf16.msra.mxu0 %v1368
      %1391 = vmatprep.subr.bf16.mxu0 0
      %1392 = vmatpush2.bf16.msra.mxu0 0
      %1393 = vmatprep.subr.bf16.mxu0 0
      %1394 = vmatpush2.bf16.msra.mxu0 0
      %1395 = vmatprep.subr.bf16.mxu0 0
      %1396 = vmatpush2.bf16.msra.mxu0 0
      %1397 = vmatprep.subr.bf16.mxu0 0
      %1398 = vmatpush2.bf16.msra.mxu0 0
      %1399 = vmatprep.subr.bf16.mxu0 0
      %1400 = vmatpush2.bf16.msra.mxu0 0
      %1401 = vmatprep.subr.bf16.mxu0 0
      %1402 = vmatpush2.bf16.msra.mxu0 0
      %1403 = vmatprep.subr.bf16.mxu0 0
      %1404 = vmatpush2.bf16.msra.mxu0 0
      %1405 = vmatprep.subr.bf16.mxu0 0
      %1406 = vmatpush2.bf16.msra.mxu0 0
      %1407 = vmatprep.mubr.bf16.mxu0 0
      %1408 = vmatmul.mubr.bf16.gmra.mxu0 %v1373
      %v1409 = vpop.f32.mrf.mxu0
      %v1410 = vadd.f32 %v1358, %v1409
      %v1411 = vpop.f32.mrf.mxu0
      %v1412 = vpop.f32.mrf.mxu0
      %v1413 = vadd.f32 %v1358, %v1412
      %v1414 = vpop.f32.mrf.mxu0
      %1415 = vdwg.mxu0
      %v1416 = vadd.f32 %v442, %v1410
      %v1417 = vadd.f32 %v443, %v1413
      %v1418 = vld [vmem:[%s5] sm:$0x1]
      %v1419 = vld [vmem:[%s6] sm:$0x1]
      %v1420 = vsel %vm468, %v1416, 0.0
      %1421 = vadd.xlane.f32.xlu0 %v1420
      %v1422 = vpop.xlane.xlu0 %1421
      %v1423 = vsel %vm468, %v1417, 0.0
      %1424 = vadd.xlane.f32.xlu0 %v1423
      %v1425 = vpop.xlane.xlu0 %1424
      %v1426 = vrcp.pop 32.0
      %v1427 = vmul.f32 %v1422, %v1426
      %v1428 = vmul.f32 %v1425, %v1426
      %v1429 = vsub.f32 %v1416, %v1427
      %v1430 = vsub.f32 %v1417, %v1428
      %v1431 = vmul.f32 %v1429, %v1429
      %v1432 = vmul.f32 %v1430, %v1430
      %v1433 = vsel %vm468, %v1431, 0.0
      %1434 = vadd.xlane.f32.xlu0 %v1433
      %v1435 = vpop.xlane.xlu0 %1434
      %v1436 = vsel %vm468, %v1432, 0.0
      %1437 = vadd.xlane.f32.xlu0 %v1436
      %v1438 = vpop.xlane.xlu0 %1437
      %v1439 = vmul.f32 %v1435, %v1426
      %v1440 = vmul.f32 %v1438, %v1426
      %v1441 = vadd.f32 %v1439, 1e-05
      %v1442 = vadd.f32 %v1440, 1e-05
      %v1443 = vrsqrt.pop %v1441
      %v1444 = vrsqrt.pop %v1442
      %v1445 = vmul.f32 %v1429, %v1443
      %v1446 = vmul.f32 %v1430, %v1444
      %v1448 = vlaneseq
      %v1449 = vshrl.u32 %v1448, 7
      %v1450 = vsub.s32 0, %v1449
      %v1451 = vrot.slane %v1418, %v1450
      %v1453 = vmul.f32 %v1445, %v1451
      %v1454 = vmul.f32 %v1446, %v1451
      %v1456 = vlaneseq
      %v1457 = vshrl.u32 %v1456, 7
      %v1458 = vsub.s32 0, %v1457
      %v1459 = vrot.slane %v1419, %v1458
      %v1461 = vadd.f32 %v1453, %v1459
      %v1462 = vadd.f32 %v1454, %v1459
      %v1463 = vld [vmem:[%s7] sm:$0xf]
      %v1464 = vld [vmem:[%s7 + $0x4] sm:$0xf]
      %v1465 = vld [vmem:[%s7 + $0x8] sm:$0xf]
      %v1466 = vld [vmem:[%s7 + $0xc] sm:$0xf]
      %v1467 = vpack.c.bf16 %v1462, %v1461
      %v1468 = vld [vmem:[%s8] sm:$0x1]
      %v1470 = vlaneseq
      %v1471 = vshrl.u32 %v1470, 7
      %v1472 = vsub.s32 0, %v1471
      %v1473 = vrot.slane %v1468, %v1472
      %v1479 = vunpack.c.l.b16 %v1463
      %v1480 = vunpack.c.l.b16 %v1464
      %v1481 = vunpack.c.l.b16 %v1465
      %v1482 = vunpack.c.l.b16 %v1466
      %v1483 = vpack.c.b16 %v1480, %v1479
      %v1484 = vpack.c.b16 %v1482, %v1481
      %v1488 = vsel %vm468, %v1467, 0
      %1490 = vmatprep.subr.bf16.mxu0 0
      %1491 = vmatpush1.bf16.msra.mxu0 0
      %1492 = vmatprep.subr.bf16.mxu0 0
      %1493 = vmatpush1.bf16.msra.mxu0 0
      %1494 = vmatprep.subr.bf16.mxu0 0
      %1495 = vmatpush1.bf16.msra.mxu0 0
      %1496 = vmatprep.subr.bf16.mxu0 0
      %1497 = vmatpush1.bf16.msra.mxu0 0
      %1498 = vmatprep.subr.bf16.mxu0 0
      %1499 = vmatpush1.bf16.msra.mxu0 0
      %1500 = vmatprep.subr.bf16.mxu0 0
      %1501 = vmatpush1.bf16.msra.mxu0 0
      %1502 = vmatprep.subr.bf16.mxu0 0
      %1503 = vmatpush1.bf16.msra.mxu0 %v1484
      %1504 = vmatprep.subr.bf16.mxu0 0
      %1505 = vmatpush1.bf16.msra.mxu0 %v1483
      %1506 = vmatprep.subr.bf16.mxu0 0
      %1507 = vmatpush2.bf16.msra.mxu0 0
      %1508 = vmatprep.subr.bf16.mxu0 0
      %1509 = vmatpush2.bf16.msra.mxu0 0
      %1510 = vmatprep.subr.bf16.mxu0 0
      %1511 = vmatpush2.bf16.msra.mxu0 0
      %1512 = vmatprep.subr.bf16.mxu0 0
      %1513 = vmatpush2.bf16.msra.mxu0 0
      %1514 = vmatprep.subr.bf16.mxu0 0
      %1515 = vmatpush2.bf16.msra.mxu0 0
      %1516 = vmatprep.subr.bf16.mxu0 0
      %1517 = vmatpush2.bf16.msra.mxu0 0
      %1518 = vmatprep.subr.bf16.mxu0 0
      %1519 = vmatpush2.bf16.msra.mxu0 0
      %1520 = vmatprep.subr.bf16.mxu0 0
      %1521 = vmatpush2.bf16.msra.mxu0 0
      %1522 = vmatprep.mubr.bf16.mxu0 0
      %1523 = vmatmul.mubr.bf16.gmra.mxu0 %v1488
      %v1524 = vpop.f32.mrf.mxu0
      %v1525 = vadd.f32 %v1473, %v1524
      %v1526 = vpop.f32.mrf.mxu0
      %v1527 = vpop.f32.mrf.mxu0
      %v1528 = vadd.f32 %v1473, %v1527
      %v1529 = vpop.f32.mrf.mxu0
      %1530 = vdwg.mxu0
      %v1531 = vmul.f32 %v1525, %v1525
      %v1532 = vmul.f32 %v1528, %v1528
      %v1533 = vmul.f32 %v1525, %v1531
      %v1534 = vmul.f32 %v1528, %v1532
      %v1535 = vmul.f32 %v1533, 0.044715
      %v1536 = vmul.f32 %v1534, 0.044715
      %v1537 = vadd.f32 %v1525, %v1535
      %v1538 = vadd.f32 %v1528, %v1536
      %v1539 = vmul.f32 %v1537, 0.7978846
      %v1540 = vmul.f32 %v1538, 0.7978846
      %v1541 = vtanh.pop %v1539
      %v1542 = vtanh.pop %v1540
      %v1543 = vadd.f32 %v1541, 1.0
      %v1544 = vadd.f32 %v1542, 1.0
      %v1545 = vmul.f32 %v1543, 0.5
      %v1546 = vmul.f32 %v1544, 0.5
      %v1547 = vmul.f32 %v1525, %v1545
      %v1548 = vmul.f32 %v1528, %v1546
      %v1549 = vld [vmem:[%s9] sm:$0xf]
      %v1550 = vld [vmem:[%s9 + $0x4] sm:$0xf]
      %v1551 = vld [vmem:[%s9 + $0x8] sm:$0xf]
      %v1552 = vld [vmem:[%s9 + $0xc] sm:$0xf]
      %v1553 = vld [vmem:[%s9 + $0x10] sm:$0xf]
      %v1554 = vld [vmem:[%s9 + $0x14] sm:$0xf]
      %v1555 = vld [vmem:[%s9 + $0x18] sm:$0xf]
      %v1556 = vld [vmem:[%s9 + $0x1c] sm:$0xf]
      %v1557 = vpack.c.bf16 %v1548, %v1547
      %v1558 = vld [vmem:[%s10] sm:$0x1]
      %v1560 = vlaneseq
      %v1561 = vshrl.u32 %v1560, 7
      %v1562 = vsub.s32 0, %v1561
      %v1563 = vrot.slane %v1558, %v1562
      %v1573 = vunpack.c.l.b16 %v1549
      %v1574 = vunpack.c.l.b16 %v1550
      %v1575 = vunpack.c.l.b16 %v1551
      %v1576 = vunpack.c.l.b16 %v1552
      %v1577 = vunpack.c.l.b16 %v1553
      %v1578 = vunpack.c.l.b16 %v1554
      %v1579 = vunpack.c.l.b16 %v1555
      %v1580 = vunpack.c.l.b16 %v1556
      %v1581 = vpack.c.b16 %v1574, %v1573
      %v1582 = vpack.c.b16 %v1576, %v1575
      %v1583 = vpack.c.b16 %v1578, %v1577
      %v1584 = vpack.c.b16 %v1580, %v1579
      %vm1589 = vcmask 523264
      %v1591 = vsel %vm1589, %v1557, 0
      %1593 = vmatprep.subr.bf16.mxu0 0
      %1594 = vmatpush1.bf16.msra.mxu0 0
      %1595 = vmatprep.subr.bf16.mxu0 0
      %1596 = vmatpush1.bf16.msra.mxu0 0
      %1597 = vmatprep.subr.bf16.mxu0 0
      %1598 = vmatpush1.bf16.msra.mxu0 0
      %1599 = vmatprep.subr.bf16.mxu0 0
      %1600 = vmatpush1.bf16.msra.mxu0 0
      %1601 = vmatprep.subr.bf16.mxu0 0
      %1602 = vmatpush1.bf16.msra.mxu0 %v1584
      %1603 = vmatprep.subr.bf16.mxu0 0
      %1604 = vmatpush1.bf16.msra.mxu0 %v1583
      %1605 = vmatprep.subr.bf16.mxu0 0
      %1606 = vmatpush1.bf16.msra.mxu0 %v1582
      %1607 = vmatprep.subr.bf16.mxu0 0
      %1608 = vmatpush1.bf16.msra.mxu0 %v1581
      %1609 = vmatprep.subr.bf16.mxu0 0
      %1610 = vmatpush2.bf16.msra.mxu0 0
      %1611 = vmatprep.subr.bf16.mxu0 0
      %1612 = vmatpush2.bf16.msra.mxu0 0
      %1613 = vmatprep.subr.bf16.mxu0 0
      %1614 = vmatpush2.bf16.msra.mxu0 0
      %1615 = vmatprep.subr.bf16.mxu0 0
      %1616 = vmatpush2.bf16.msra.mxu0 0
      %1617 = vmatprep.subr.bf16.mxu0 0
      %1618 = vmatpush2.bf16.msra.mxu0 0
      %1619 = vmatprep.subr.bf16.mxu0 0
      %1620 = vmatpush2.bf16.msra.mxu0 0
      %1621 = vmatprep.subr.bf16.mxu0 0
      %1622 = vmatpush2.bf16.msra.mxu0 0
      %1623 = vmatprep.subr.bf16.mxu0 0
      %1624 = vmatpush2.bf16.msra.mxu0 0
      %1625 = vmatprep.mubr.bf16.mxu0 0
      %1626 = vmatmul.mubr.bf16.gmra.mxu0 %v1591
      %v1627 = vpop.f32.mrf.mxu0
      %v1628 = vadd.f32 %v1563, %v1627
      %v1629 = vpop.f32.mrf.mxu0
      %v1630 = vpop.f32.mrf.mxu0
      %v1631 = vadd.f32 %v1563, %v1630
      %v1632 = vpop.f32.mrf.mxu0
      %1633 = vdwg.mxu0
      %v1634 = vadd.f32 %v1461, %v1628
      %v1635 = vadd.f32 %v1462, %v1631
      %v1636 = vld [vmem:[%s11] sm:$0x1]
      %v1637 = vld [vmem:[%s12] sm:$0x1]
      %v1638 = vsel %vm468, %v1634, 0.0
      %1639 = vadd.xlane.f32.xlu0 %v1638
      %v1640 = vpop.xlane.xlu0 %1639
      %v1641 = vsel %vm468, %v1635, 0.0
      %1642 = vadd.xlane.f32.xlu0 %v1641
      %v1643 = vpop.xlane.xlu0 %1642
      %v1644 = vmul.f32 %v1640, %v1426
      %v1645 = vmul.f32 %v1643, %v1426
      %v1646 = vsub.f32 %v1634, %v1644
      %v1647 = vsub.f32 %v1635, %v1645
      %v1648 = vmul.f32 %v1646, %v1646
      %v1649 = vmul.f32 %v1647, %v1647
      %v1650 = vsel %vm468, %v1648, 0.0
      %1651 = vadd.xlane.f32.xlu0 %v1650
      %v1652 = vpop.xlane.xlu0 %1651
      %v1653 = vsel %vm468, %v1649, 0.0
      %1654 = vadd.xlane.f32.xlu0 %v1653
      %v1655 = vpop.xlane.xlu0 %1654
      %v1656 = vmul.f32 %v1652, %v1426
      %v1657 = vmul.f32 %v1655, %v1426
      %v1658 = vadd.f32 %v1656, 1e-05
      %v1659 = vadd.f32 %v1657, 1e-05
      %v1660 = vrsqrt.pop %v1658
      %v1661 = vrsqrt.pop %v1659
      %v1662 = vmul.f32 %v1646, %v1660
      %v1663 = vmul.f32 %v1647, %v1661
      %v1665 = vlaneseq
      %v1666 = vshrl.u32 %v1665, 7
      %v1667 = vsub.s32 0, %v1666
      %v1668 = vrot.slane %v1636, %v1667
      %v1670 = vmul.f32 %v1662, %v1668
      %v1671 = vmul.f32 %v1663, %v1668
      %v1673 = vlaneseq
      %v1674 = vshrl.u32 %v1673, 7
      %v1675 = vsub.s32 0, %v1674
      %v1676 = vrot.slane %v1637, %v1675
      %v1678 = vadd.f32 %v1670, %v1676
      %v1679 = vadd.f32 %v1671, %v1676
      %1680 = vst.msk [vmem:[%s440] sm:$0xff] %vm468, %v1678
      %1681 = vst.msk [vmem:[%s440 + $0x8] sm:$0xff] %vm468, %v1679
      %p1682 = scmp.lt.s32.totalorder %s24, 1
      %s1683 = scalar_select %p1682, %s24, 1
      %s1684 = smul.addr %s1683, 2
      %s1685 = smul.addr %s1684, 8
      %s1686 = scalar_lea.vmem %s13, %s1685
      // Predicated region
      $region73: #{aves_forward.11} parent=71 // pred_check
        %p1687 = pneg %p320
      $region74: #{aves_forward.11} parent=71 // pred_check_branch
        %1689 = sbr.rel (%p1687) target = $region76
      $region75: #{aves_forward.11} parent=71 // pred_region
        _
      $region76: #{aves_forward.11} parent=71 // pred_fallthru
        _
    $region72: #{aves_forward.11} parent=5 // pred_fallthru
      _
    %p1690 = scmp.le.s32.totalorder 2, %s19
    // Predicated region
    $region77: #{aves_forward.11} parent=5 // pred_check
      %p1691 = pneg %p1690
    $region78: #{aves_forward.11} parent=5 // pred_check_branch
      %1693 = sbr.rel (%p1691) target = $region80
    $region79: #{aves_forward.11} parent=5 // pred_region
      %s1694 = ssub.s32 %s19, 2
      // Predicated region
      $region81: #{aves_forward.11} parent=79 // pred_check
        %p1695 = pneg %p326
      $region82: #{aves_forward.11} parent=79 // pred_check_branch
        %1697 = sbr.rel (%p1695) target = $region84
      $region83: #{aves_forward.11} parent=79 // pred_region
        %p1698 = scmp.lt.s32.totalorder %s25, 1
        %s1699 = scalar_select %p1698, %s25, 1
        %s1700 = smul.addr %s1699, 2
        %s1701 = smul.addr %s1700, 8
        %s1702 = scalar_lea.vmem %s13, %s1701
      $region84: #{aves_forward.11} parent=79 // pred_fallthru
        _
    $region80: #{aves_forward.11} parent=5 // pred_fallthru
      _
  $region6: #{aves_forward.11} parent=0 // loop_footer
    %s23 = sadd.s32 1, %s19
  $region7: #{aves_forward.11} parent=0 // loop_footer_branch
    %18 = sbr.rel target = $region3
  $region8: #{aves_forward.11} parent=0 // loop_exit
    _

</llo_original>
